<compile_context>
chip_gen: v7x
topology: tpu7x:2x2x1
jax: 0.10.0
libtpu: 0.0.40
codegen_flags: <defaults>
</compile_context>

<pallas_src>
import functools
import math

import numpy as np
import jax
import jax.numpy as jnp
from jax import lax
from jax.experimental import pallas as pl
from jax.experimental.pallas import tpu as pltpu


# ------------------------------ static geometry -------------------------------
IMG = 28                 # input H = W
PAD = 2                  # conv1 padding
IMG_P = IMG + 2 * PAD    # 32 padded rows / cols per image
CIN = 3
C1 = 6                   # conv1 out channels
C2 = 16                  # conv2 out channels
K1 = 5                   # conv1 kernel size
K2EFF = 10               # conv2 (5x5) with avgpool1 folded in: 10x10, stride 2
H1 = IMG                 # conv1 output spatial size (padding=2)
H2 = 10                  # conv2eff output spatial size
XCOLS = IMG_P * CIN      # 96  : (w-position, cin) per padded image row
Y1COLS = H1 * C1         # 168 : (j, c1) per conv1 output row
UCOLS = H2 * C2          # 160 : (v, c2) per conv2eff output row
FC1 = 120
FC2 = 84
NLANE = 128              # lane-dense logits width (num_classes padded to 128)


# ------------------------------- Pallas kernel --------------------------------

def _lenet5_fused_kernel(x_ref, w1_ref, b1_ref, w2_ref, b2_ref, sel_ref,
                         f1_ref, fb1_ref, w2f_ref, fb2_ref, w3f_ref, fb3_ref,
                         o_ref, *, images):
    """Whole LeNet5 forward for one tile of `images` images.

    x_ref   : [images*32, 96]  bf16   row-flattened padded NHWC input
    w1_ref  : [5, 96, 168]     bf16   banded conv1 weights (per row offset di)
    w2_ref  : [10, 168, 160]   bf16   banded (pool1∘conv2) weights (per offset p)
    sel_ref : [10, images, RU] bf16   0/1 stride-2 row pickers (per u)
    f1_ref  : [10, 160, 120]   bf16   (pool2+flatten)∘fc1 weight slices (per u)
    w2f/w3f : fc2 / fc3 (fc3 padded to 128 output lanes)
    o_ref   : [1, images, 128] f32    lane-dense logits block
    """
    rows_in = images * IMG_P
    r1 = rows_in - (K1 - 1)        # conv1 rows computed (incl. per-image junk rows)
    ru = r1 - (K2EFF - 1)          # conv2eff rows computed (incl. junk rows)

    xf = x_ref[...].astype(jnp.float32)

    # conv1 (5x5, pad=2) + bias + ReLU : 5 row-shifted banded matmuls.
    y1 = jnp.zeros((r1, Y1COLS), jnp.float32)
    for di in range(K1):
        y1 = y1 + jnp.dot(xf[di:di + r1, :].astype(jnp.bfloat16), w1_ref[di],
                          preferred_element_type=jnp.float32)
    y1 = jnp.maximum(y1 + b1_ref[...], 0.0)

    # avgpool1 folded into conv2 -> 10x10 stride-2 conv : 10 banded matmuls.
    z = jnp.zeros((ru, UCOLS), jnp.float32)
    for p in range(K2EFF):
        z = z + jnp.dot(y1[p:p + ru, :].astype(jnp.bfloat16), w2_ref[p],
                        preferred_element_type=jnp.float32)
    z = jnp.maximum(z + b2_ref[...], 0.0).astype(jnp.bfloat16)

    # avgpool2 + flatten folded into fc1 : pick the stride-2 rows with a 0/1
    # matmul, contract with the matching folded fc1 slice, accumulate over u.
    h = jnp.zeros((images, FC1), jnp.float32)
    for u in range(H2):
        picked = jnp.dot(sel_ref[u], z, preferred_element_type=jnp.float32)
        h = h + jnp.dot(picked.astype(jnp.bfloat16), f1_ref[u],
                        preferred_element_type=jnp.float32)
    h = jnp.maximum(h + fb1_ref[...], 0.0).astype(jnp.bfloat16)

    # fc2 + ReLU
    h = jnp.dot(h, w2f_ref[...], preferred_element_type=jnp.float32) + fb2_ref[...]
    h = jnp.maximum(h, 0.0).astype(jnp.bfloat16)

    # fc3 -> lane-dense 128-wide logits
    o_ref[0] = jnp.dot(h, w3f_ref[...],
                       preferred_element_type=jnp.float32) + fb3_ref[...]


# ------------------------------ forward wrapper --------------------------------

def lenet5_rsc_forward(kp, x_nchw, *, num_classes, images_per_block=1):
    """LeNet5RSC forward with flag=None: x [B,3,28,28] f32 -> logits [B, num_classes]."""
    b = x_nchw.shape[0]
    t = max(1, min(images_per_block, b))         # images per grid step (static)
    n_tiles = (b + t - 1) // t
    bp = n_tiles * t                              # batch padded to a tile multiple

    # NCHW -> padded NHWC -> bf16 -> row-flattened [(img, h) rows, (w, cin) cols].
    x = jnp.transpose(x_nchw, (0, 2, 3, 1))                       # [B,28,28,3]
    x = jnp.pad(x, ((0, bp - b), (PAD, PAD), (PAD, PAD), (0, 0)))  # [Bp,32,32,3]
    x = x.astype(jnp.bfloat16).reshape(bp * IMG_P, XCOLS)          # [Bp*32, 96]

    # 0/1 stride-2 row pickers (depend only on the static tile size t).
    ru = t * IMG_P - (K1 - 1) - (K2EFF - 1)
    sel_np = np.zeros((H2, t, ru), np.float32)
    for u in range(H2):
        for ti in range(t):
            sel_np[u, ti, ti * IMG_P + 2 * u] = 1.0
    sel = jnp.asarray(sel_np, jnp.bfloat16)

    r1 = t * IMG_P - (K1 - 1)
    flops_tile = 2 * (K1 * r1 * XCOLS * Y1COLS
                      + K2EFF * ru * Y1COLS * UCOLS
                      + H2 * (t * ru * UCOLS + t * UCOLS * FC1)
                      + t * FC1 * FC2 + t * FC2 * NLANE)
    bytes_acc = int(x.size) * 2 + int(sel.size) * 2 + n_tiles * t * NLANE * 4
    for v in kp.values():
        bytes_acc += int(v.size) * v.dtype.itemsize
    cost = pl.CostEstimate(flops=n_tiles * flops_tile, transcendentals=0,
                           bytes_accessed=bytes_acc)

    def resident(shape):
        return pl.BlockSpec(shape, lambda i, _s=len(shape): (0,) * _s)

    out = pl.pallas_call(
        functools.partial(_lenet5_fused_kernel, images=t),
        out_shape=jax.ShapeDtypeStruct((n_tiles, t, NLANE), jnp.float32),
        grid=(n_tiles,),
        in_specs=[
            pl.BlockSpec((t * IMG_P, XCOLS), lambda i: (i, 0)),   # per-tile input rows
            resident((K1, XCOLS, Y1COLS)),                        # conv1 banded
            resident((1, Y1COLS)),                                # conv1 bias row
            resident((K2EFF, Y1COLS, UCOLS)),                     # pool1∘conv2 banded
            resident((1, UCOLS)),                                 # conv2 bias row
            resident((H2, t, ru)),                                # row pickers
            resident((H2, UCOLS, FC1)),                           # pool2∘fc1 slices
            resident((1, FC1)),
            resident((FC1, FC2)),
            resident((1, FC2)),
            resident((FC2, NLANE)),
            resident((1, NLANE)),
        ],
        out_specs=pl.BlockSpec((1, t, NLANE), lambda i: (i, 0, 0)),
        compiler_params=pltpu.CompilerParams(
            dimension_semantics=("parallel",)),
        cost_estimate=cost,
    )(x, kp["w1_band"], kp["b1_row"], kp["w2_band"], kp["b2_row"], sel,
      kp["fc1_fold"], kp["fc1_b"], kp["fc2_w"], kp["fc2_b"],
      kp["fc3_w"], kp["fc3_b"])

    return out.reshape(bp, NLANE)[:b, :num_classes]


# ------------------ parameter init (torch layout) + folding --------------------

def init_raw_params(key, num_classes=2):
    """Matches initialize_lenet_weights: kaiming_normal(fan_out, relu) for conv,
    xavier_uniform for linear, zero biases. Stored in PyTorch layouts."""
    ks = jax.random.split(key, 5)

    def kaiming_conv(k, cout, cin, kh, kw):
        std = math.sqrt(2.0 / (cout * kh * kw))
        return jax.random.normal(k, (cout, cin, kh, kw), jnp.float32) * std

    def xavier_linear(k, fout, fin):
        lim = math.sqrt(6.0 / (fin + fout))
        return jax.random.uniform(k, (fout, fin), jnp.float32, -lim, lim)

    return {
        "conv1_w": kaiming_conv(ks[0], C1, CIN, K1, K1),
        "conv1_b": jnp.zeros((C1,), jnp.float32),
        "conv2_w": kaiming_conv(ks[1], C2, C1, K1, K1),
        "conv2_b": jnp.zeros((C2,), jnp.float32),
        "fc1_w": xavier_linear(ks[2], FC1, C2 * 5 * 5),
        "fc1_b": jnp.zeros((FC1,), jnp.float32),
        "fc2_w": xavier_linear(ks[3], FC2, FC1),
        "fc2_b": jnp.zeros((FC2,), jnp.float32),
        "fc3_w": xavier_linear(ks[4], num_classes, FC2),
        "fc3_b": jnp.zeros((num_classes,), jnp.float32),
    }


def build_kernel_params(raw, num_classes):
    """Turn PyTorch-layout weights into the kernel's banded / pool-folded,
    bf16, lane-padded layout.  Runs once (numpy, host side)."""
    w1 = np.asarray(raw["conv1_w"], np.float32)       # [6,3,5,5]
    b1 = np.asarray(raw["conv1_b"], np.float32)
    w2 = np.asarray(raw["conv2_w"], np.float32)       # [16,6,5,5]
    b2 = np.asarray(raw["conv2_b"], np.float32)
    f1 = np.asarray(raw["fc1_w"], np.float32)          # [120,400]  (in order c*25+pi*5+pj)
    f2 = np.asarray(raw["fc2_w"], np.float32)          # [84,120]
    f3 = np.asarray(raw["fc3_w"], np.float32)          # [nc,84]

    # conv1 -> banded row-matmul weights: W1[di, jw*3+ci, j*6+co] = w1[co,ci,di,jw-j]
    w1_band = np.zeros((K1, XCOLS, Y1COLS), np.float32)
    for di in range(K1):
        for dj in range(K1):
            blk = w1[:, :, di, dj].T                   # [cin, cout]
            for j in range(H1):
                jw = j + dj
                w1_band[di, jw * CIN:(jw + 1) * CIN, j * C1:(j + 1) * C1] = blk

    # (avgpool1 ∘ conv2) == 10x10 stride-2 conv with weight 0.25*w2[.,.,p//2,q//2]
    w2_band = np.zeros((K2EFF, Y1COLS, UCOLS), np.float32)
    for p in range(K2EFF):
        for q in range(K2EFF):
            blk = 0.25 * w2[:, :, p // 2, q // 2].T    # [c1, c2]
            for v in range(H2):
                jw = 2 * v + q
                w2_band[p, jw * C1:(jw + 1) * C1, v * C2:(v + 1) * C2] = blk

    # (fc1 ∘ flatten ∘ avgpool2): per-u slices over columns (v*16 + c)
    fc1_fold = np.zeros((H2, UCOLS, FC1), np.float32)
    for u in range(H2):
        for v in range(H2):
            for c in range(C2):
                m = c * 25 + (u // 2) * 5 + (v // 2)
                fc1_fold[u, v * C2 + c, :] = 0.25 * f1[:, m]

    # fc3 padded to 128 output lanes (lane-dense final store).
    fc3_w = np.zeros((FC2, NLANE), np.float32)
    fc3_w[:, :num_classes] = f3.T
    fc3_b = np.zeros((NLANE,), np.float32)
    fc3_b[:num_classes] = np.asarray(raw["fc3_b"], np.float32)

    bf = lambda a: jnp.asarray(a, jnp.bfloat16)
    f32row = lambda a: jnp.asarray(np.asarray(a, np.float32).reshape(1, -1))
    return {
        "w1_band": bf(w1_band),
        "b1_row": f32row(np.tile(b1, H1)),
        "w2_band": bf(w2_band),
        "b2_row": f32row(np.tile(b2, H2)),
        "fc1_fold": bf(fc1_fold),
        "fc1_b": f32row(raw["fc1_b"]),
        "fc2_w": bf(f2.T),
        "fc2_b": f32row(raw["fc2_b"]),
        "fc3_w": bf(fc3_w),
        "fc3_b": f32row(fc3_b),
    }


# ------------------------------ pure-JAX reference ------------------------------

def lenet5_reference(raw, x_nchw):
    """f32 reference of the flag=None forward (weights rounded to bf16 exactly
    like the kernel's, so only accumulation order / activation casts differ)."""
    q = lambda a: a.astype(jnp.bfloat16).astype(jnp.float32)
    x = x_nchw.astype(jnp.bfloat16).astype(jnp.float32)
    y = lax.conv_general_dilated(x, q(raw["conv1_w"]), (1, 1),
                                 ((PAD, PAD), (PAD, PAD)),
                                 dimension_numbers=("NCHW", "OIHW", "NCHW"))
    y = jax.nn.relu(y + raw["conv1_b"][None, :, None, None])
    b_, c_, h_, w_ = y.shape
    y = y.reshape(b_, c_, h_ // 2, 2, w_ // 2, 2).mean(axis=(3, 5))
    y = lax.conv_general_dilated(y, q(raw["conv2_w"]), (1, 1), "VALID",
                                 dimension_numbers=("NCHW", "OIHW", "NCHW"))
    y = jax.nn.relu(y + raw["conv2_b"][None, :, None, None])
    b_, c_, h_, w_ = y.shape
    y = y.reshape(b_, c_, h_ // 2, 2, w_ // 2, 2).mean(axis=(3, 5))
    y = y.reshape(b_, -1)                                   # torch .view order (C,H,W)
    y = jax.nn.relu(y @ q(raw["fc1_w"]).T + raw["fc1_b"])
    y = jax.nn.relu(y @ q(raw["fc2_w"]).T + raw["fc2_b"])
    return y @ q(raw["fc3_w"]).T + raw["fc3_b"]


# ------------------------------------ main --------------------------------------

if __name__ == "__main__":
    key = jax.random.PRNGKey(0)
    k_params, k_x = jax.random.split(key)

    num_classes = 2
    batch = 2                         # LeNet5 with a 16*5*5 classifier => 3x28x28 inputs
    raw = init_raw_params(k_params, num_classes=num_classes)
    kparams = build_kernel_params(raw, num_classes)

    x = jax.random.normal(k_x, (batch, CIN, IMG, IMG), jnp.float32)

    # images_per_block=1 -> grid=(2,): even and >=2, so both v7x TensorCores are used.
    fwd = jax.jit(functools.partial(lenet5_rsc_forward,
                                    num_classes=num_classes,
                                    images_per_block=1))
    logits = jax.block_until_ready(fwd(kparams, x))

    assert logits.shape == (batch, num_classes), logits.shape
    assert bool(jnp.all(jnp.isfinite(logits)))

    ref = jax.block_until_ready(jax.jit(lenet5_reference)(raw, x))
    np.testing.assert_allclose(np.asarray(logits), np.asarray(ref),
                               rtol=5e-2, atol=5e-2)
    print("KERNEL_OK")
</pallas_src>

<mosaic_0001>
module attributes {stable_mosaic.version = 11 : i64} {
  func.func @_lenet5_fused_kernel(%arg0: i32, %arg1: memref<32x96xbf16, #tpu.memory_space<vmem>>, %arg2: memref<5x96x168xbf16, #tpu.memory_space<vmem>>, %arg3: memref<1x168xf32, #tpu.memory_space<vmem>>, %arg4: memref<10x168x160xbf16, #tpu.memory_space<vmem>>, %arg5: memref<1x160xf32, #tpu.memory_space<vmem>>, %arg6: memref<10x1x19xbf16, #tpu.memory_space<vmem>>, %arg7: memref<10x160x120xbf16, #tpu.memory_space<vmem>>, %arg8: memref<1x120xf32, #tpu.memory_space<vmem>>, %arg9: memref<120x84xbf16, #tpu.memory_space<vmem>>, %arg10: memref<1x84xf32, #tpu.memory_space<vmem>>, %arg11: memref<84x128xbf16, #tpu.memory_space<vmem>>, %arg12: memref<1x128xf32, #tpu.memory_space<vmem>>, %arg13: memref<1x1x128xf32, #tpu.memory_space<vmem>>) attributes {dimension_semantics = [#tpu.dimension_semantics<parallel>], iteration_bounds = array<i64: 2>, scalar_prefetch = 0 : i64, scratch_operands = 0 : i64, tpu.core_type = #tpu.core_type<tc>, window_params = [{transform_indices = @transform_0, window_bounds = array<i64: 32, 96>}, {pipeline_mode = #tpu.pipeline_mode<synchronous>, transform_indices = @transform_1, window_bounds = array<i64: 5, 96, 168>}, {pipeline_mode = #tpu.pipeline_mode<synchronous>, transform_indices = @transform_2, window_bounds = array<i64: 1, 168>}, {pipeline_mode = #tpu.pipeline_mode<synchronous>, transform_indices = @transform_3, window_bounds = array<i64: 10, 168, 160>}, {pipeline_mode = #tpu.pipeline_mode<synchronous>, transform_indices = @transform_4, window_bounds = array<i64: 1, 160>}, {pipeline_mode = #tpu.pipeline_mode<synchronous>, transform_indices = @transform_5, window_bounds = array<i64: 10, 1, 19>}, {pipeline_mode = #tpu.pipeline_mode<synchronous>, transform_indices = @transform_6, window_bounds = array<i64: 10, 160, 120>}, {pipeline_mode = #tpu.pipeline_mode<synchronous>, transform_indices = @transform_7, window_bounds = array<i64: 1, 120>}, {pipeline_mode = #tpu.pipeline_mode<synchronous>, transform_indices = @transform_8, window_bounds = array<i64: 120, 84>}, {pipeline_mode = #tpu.pipeline_mode<synchronous>, transform_indices = @transform_9, window_bounds = array<i64: 1, 84>}, {pipeline_mode = #tpu.pipeline_mode<synchronous>, transform_indices = @transform_10, window_bounds = array<i64: 84, 128>}, {pipeline_mode = #tpu.pipeline_mode<synchronous>, transform_indices = @transform_11, window_bounds = array<i64: 1, 128>}, {transform_indices = @transform_12, window_bounds = array<i64: 1, 1, 128>}]} {
    %c0 = arith.constant 0 : index
    %c0_0 = arith.constant 0 : index
    %0 = vector.load %arg1[%c0, %c0_0] : memref<32x96xbf16, #tpu.memory_space<vmem>>, vector<32x96xbf16>
    %1 = arith.extf %0 : vector<32x96xbf16> to vector<32x96xf32>
    %cst = arith.constant 0.000000e+00 : f32
    %2 = vector.broadcast %cst : f32 to vector<28x168xf32>
    %3 = vector.extract_strided_slice %1 {offsets = [0, 0], sizes = [28, 96], strides = [1, 1]} : vector<32x96xf32> to vector<28x96xf32>
    %4 = arith.truncf %3 : vector<28x96xf32> to vector<28x96xbf16>
    %c0_1 = arith.constant 0 : index
    %c0_2 = arith.constant 0 : index
    %c0_3 = arith.constant 0 : index
    %5 = vector.load %arg2[%c0_1, %c0_2, %c0_3] : memref<5x96x168xbf16, #tpu.memory_space<vmem>>, vector<1x96x168xbf16>
    %6 = vector.shape_cast %5 : vector<1x96x168xbf16> to vector<96x168xbf16>
    %cst_4 = arith.constant dense<0.000000e+00> : vector<28x168xf32>
    %7 = tpu.matmul %4, %6, %cst_4 {dimension_numbers = #tpu.dot_dimension_numbers<[1], [0], [0], [1], [0, 0, 1, 1], [], []>} : vector<28x96xbf16>, vector<96x168xbf16>, vector<28x168xf32> -> vector<28x168xf32>
    %8 = arith.addf %2, %7 : vector<28x168xf32>
    %9 = vector.extract_strided_slice %1 {offsets = [1, 0], sizes = [28, 96], strides = [1, 1]} : vector<32x96xf32> to vector<28x96xf32>
    %10 = arith.truncf %9 : vector<28x96xf32> to vector<28x96xbf16>
    %c1 = arith.constant 1 : index
    %c0_5 = arith.constant 0 : index
    %c0_6 = arith.constant 0 : index
    %11 = vector.load %arg2[%c1, %c0_5, %c0_6] : memref<5x96x168xbf16, #tpu.memory_space<vmem>>, vector<1x96x168xbf16>
    %12 = vector.shape_cast %11 : vector<1x96x168xbf16> to vector<96x168xbf16>
    %cst_7 = arith.constant dense<0.000000e+00> : vector<28x168xf32>
    %13 = tpu.matmul %10, %12, %cst_7 {dimension_numbers = #tpu.dot_dimension_numbers<[1], [0], [0], [1], [0, 0, 1, 1], [], []>} : vector<28x96xbf16>, vector<96x168xbf16>, vector<28x168xf32> -> vector<28x168xf32>
    %14 = arith.addf %8, %13 : vector<28x168xf32>
    %15 = vector.extract_strided_slice %1 {offsets = [2, 0], sizes = [28, 96], strides = [1, 1]} : vector<32x96xf32> to vector<28x96xf32>
    %16 = arith.truncf %15 : vector<28x96xf32> to vector<28x96xbf16>
    %c2 = arith.constant 2 : index
    %c0_8 = arith.constant 0 : index
    %c0_9 = arith.constant 0 : index
    %17 = vector.load %arg2[%c2, %c0_8, %c0_9] : memref<5x96x168xbf16, #tpu.memory_space<vmem>>, vector<1x96x168xbf16>
    %18 = vector.shape_cast %17 : vector<1x96x168xbf16> to vector<96x168xbf16>
    %cst_10 = arith.constant dense<0.000000e+00> : vector<28x168xf32>
    %19 = tpu.matmul %16, %18, %cst_10 {dimension_numbers = #tpu.dot_dimension_numbers<[1], [0], [0], [1], [0, 0, 1, 1], [], []>} : vector<28x96xbf16>, vector<96x168xbf16>, vector<28x168xf32> -> vector<28x168xf32>
    %20 = arith.addf %14, %19 : vector<28x168xf32>
    %21 = vector.extract_strided_slice %1 {offsets = [3, 0], sizes = [28, 96], strides = [1, 1]} : vector<32x96xf32> to vector<28x96xf32>
    %22 = arith.truncf %21 : vector<28x96xf32> to vector<28x96xbf16>
    %c3 = arith.constant 3 : index
    %c0_11 = arith.constant 0 : index
    %c0_12 = arith.constant 0 : index
    %23 = vector.load %arg2[%c3, %c0_11, %c0_12] : memref<5x96x168xbf16, #tpu.memory_space<vmem>>, vector<1x96x168xbf16>
    %24 = vector.shape_cast %23 : vector<1x96x168xbf16> to vector<96x168xbf16>
    %cst_13 = arith.constant dense<0.000000e+00> : vector<28x168xf32>
    %25 = tpu.matmul %22, %24, %cst_13 {dimension_numbers = #tpu.dot_dimension_numbers<[1], [0], [0], [1], [0, 0, 1, 1], [], []>} : vector<28x96xbf16>, vector<96x168xbf16>, vector<28x168xf32> -> vector<28x168xf32>
    %26 = arith.addf %20, %25 : vector<28x168xf32>
    %27 = vector.extract_strided_slice %1 {offsets = [4, 0], sizes = [28, 96], strides = [1, 1]} : vector<32x96xf32> to vector<28x96xf32>
    %28 = arith.truncf %27 : vector<28x96xf32> to vector<28x96xbf16>
    %c4 = arith.constant 4 : index
    %c0_14 = arith.constant 0 : index
    %c0_15 = arith.constant 0 : index
    %29 = vector.load %arg2[%c4, %c0_14, %c0_15] : memref<5x96x168xbf16, #tpu.memory_space<vmem>>, vector<1x96x168xbf16>
    %30 = vector.shape_cast %29 : vector<1x96x168xbf16> to vector<96x168xbf16>
    %cst_16 = arith.constant dense<0.000000e+00> : vector<28x168xf32>
    %31 = tpu.matmul %28, %30, %cst_16 {dimension_numbers = #tpu.dot_dimension_numbers<[1], [0], [0], [1], [0, 0, 1, 1], [], []>} : vector<28x96xbf16>, vector<96x168xbf16>, vector<28x168xf32> -> vector<28x168xf32>
    %32 = arith.addf %26, %31 : vector<28x168xf32>
    %c0_17 = arith.constant 0 : index
    %c0_18 = arith.constant 0 : index
    %33 = vector.load %arg3[%c0_17, %c0_18] : memref<1x168xf32, #tpu.memory_space<vmem>>, vector<1x168xf32>
    %34 = vector.broadcast %33 : vector<1x168xf32> to vector<28x168xf32>
    %35 = arith.addf %32, %34 : vector<28x168xf32>
    %cst_19 = arith.constant 0.000000e+00 : f32
    %36 = vector.broadcast %cst_19 : f32 to vector<28x168xf32>
    %37 = arith.maximumf %35, %36 : vector<28x168xf32>
    %cst_20 = arith.constant 0.000000e+00 : f32
    %38 = vector.broadcast %cst_20 : f32 to vector<19x160xf32>
    %39 = vector.extract_strided_slice %37 {offsets = [0, 0], sizes = [19, 168], strides = [1, 1]} : vector<28x168xf32> to vector<19x168xf32>
    %40 = arith.truncf %39 : vector<19x168xf32> to vector<19x168xbf16>
    %c0_21 = arith.constant 0 : index
    %c0_22 = arith.constant 0 : index
    %c0_23 = arith.constant 0 : index
    %41 = vector.load %arg4[%c0_21, %c0_22, %c0_23] : memref<10x168x160xbf16, #tpu.memory_space<vmem>>, vector<1x168x160xbf16>
    %42 = vector.shape_cast %41 : vector<1x168x160xbf16> to vector<168x160xbf16>
    %cst_24 = arith.constant dense<0.000000e+00> : vector<19x160xf32>
    %43 = tpu.matmul %40, %42, %cst_24 {dimension_numbers = #tpu.dot_dimension_numbers<[1], [0], [0], [1], [0, 0, 1, 1], [], []>} : vector<19x168xbf16>, vector<168x160xbf16>, vector<19x160xf32> -> vector<19x160xf32>
    %44 = arith.addf %38, %43 : vector<19x160xf32>
    %45 = vector.extract_strided_slice %37 {offsets = [1, 0], sizes = [19, 168], strides = [1, 1]} : vector<28x168xf32> to vector<19x168xf32>
    %46 = arith.truncf %45 : vector<19x168xf32> to vector<19x168xbf16>
    %c1_25 = arith.constant 1 : index
    %c0_26 = arith.constant 0 : index
    %c0_27 = arith.constant 0 : index
    %47 = vector.load %arg4[%c1_25, %c0_26, %c0_27] : memref<10x168x160xbf16, #tpu.memory_space<vmem>>, vector<1x168x160xbf16>
    %48 = vector.shape_cast %47 : vector<1x168x160xbf16> to vector<168x160xbf16>
    %cst_28 = arith.constant dense<0.000000e+00> : vector<19x160xf32>
    %49 = tpu.matmul %46, %48, %cst_28 {dimension_numbers = #tpu.dot_dimension_numbers<[1], [0], [0], [1], [0, 0, 1, 1], [], []>} : vector<19x168xbf16>, vector<168x160xbf16>, vector<19x160xf32> -> vector<19x160xf32>
    %50 = arith.addf %44, %49 : vector<19x160xf32>
    %51 = vector.extract_strided_slice %37 {offsets = [2, 0], sizes = [19, 168], strides = [1, 1]} : vector<28x168xf32> to vector<19x168xf32>
    %52 = arith.truncf %51 : vector<19x168xf32> to vector<19x168xbf16>
    %c2_29 = arith.constant 2 : index
    %c0_30 = arith.constant 0 : index
    %c0_31 = arith.constant 0 : index
    %53 = vector.load %arg4[%c2_29, %c0_30, %c0_31] : memref<10x168x160xbf16, #tpu.memory_space<vmem>>, vector<1x168x160xbf16>
    %54 = vector.shape_cast %53 : vector<1x168x160xbf16> to vector<168x160xbf16>
    %cst_32 = arith.constant dense<0.000000e+00> : vector<19x160xf32>
    %55 = tpu.matmul %52, %54, %cst_32 {dimension_numbers = #tpu.dot_dimension_numbers<[1], [0], [0], [1], [0, 0, 1, 1], [], []>} : vector<19x168xbf16>, vector<168x160xbf16>, vector<19x160xf32> -> vector<19x160xf32>
    %56 = arith.addf %50, %55 : vector<19x160xf32>
    %57 = vector.extract_strided_slice %37 {offsets = [3, 0], sizes = [19, 168], strides = [1, 1]} : vector<28x168xf32> to vector<19x168xf32>
    %58 = arith.truncf %57 : vector<19x168xf32> to vector<19x168xbf16>
    %c3_33 = arith.constant 3 : index
    %c0_34 = arith.constant 0 : index
    %c0_35 = arith.constant 0 : index
    %59 = vector.load %arg4[%c3_33, %c0_34, %c0_35] : memref<10x168x160xbf16, #tpu.memory_space<vmem>>, vector<1x168x160xbf16>
    %60 = vector.shape_cast %59 : vector<1x168x160xbf16> to vector<168x160xbf16>
    %cst_36 = arith.constant dense<0.000000e+00> : vector<19x160xf32>
    %61 = tpu.matmul %58, %60, %cst_36 {dimension_numbers = #tpu.dot_dimension_numbers<[1], [0], [0], [1], [0, 0, 1, 1], [], []>} : vector<19x168xbf16>, vector<168x160xbf16>, vector<19x160xf32> -> vector<19x160xf32>
    %62 = arith.addf %56, %61 : vector<19x160xf32>
    %63 = vector.extract_strided_slice %37 {offsets = [4, 0], sizes = [19, 168], strides = [1, 1]} : vector<28x168xf32> to vector<19x168xf32>
    %64 = arith.truncf %63 : vector<19x168xf32> to vector<19x168xbf16>
    %c4_37 = arith.constant 4 : index
    %c0_38 = arith.constant 0 : index
    %c0_39 = arith.constant 0 : index
    %65 = vector.load %arg4[%c4_37, %c0_38, %c0_39] : memref<10x168x160xbf16, #tpu.memory_space<vmem>>, vector<1x168x160xbf16>
    %66 = vector.shape_cast %65 : vector<1x168x160xbf16> to vector<168x160xbf16>
    %cst_40 = arith.constant dense<0.000000e+00> : vector<19x160xf32>
    %67 = tpu.matmul %64, %66, %cst_40 {dimension_numbers = #tpu.dot_dimension_numbers<[1], [0], [0], [1], [0, 0, 1, 1], [], []>} : vector<19x168xbf16>, vector<168x160xbf16>, vector<19x160xf32> -> vector<19x160xf32>
    %68 = arith.addf %62, %67 : vector<19x160xf32>
    %69 = vector.extract_strided_slice %37 {offsets = [5, 0], sizes = [19, 168], strides = [1, 1]} : vector<28x168xf32> to vector<19x168xf32>
    %70 = arith.truncf %69 : vector<19x168xf32> to vector<19x168xbf16>
    %c5 = arith.constant 5 : index
    %c0_41 = arith.constant 0 : index
    %c0_42 = arith.constant 0 : index
    %71 = vector.load %arg4[%c5, %c0_41, %c0_42] : memref<10x168x160xbf16, #tpu.memory_space<vmem>>, vector<1x168x160xbf16>
    %72 = vector.shape_cast %71 : vector<1x168x160xbf16> to vector<168x160xbf16>
    %cst_43 = arith.constant dense<0.000000e+00> : vector<19x160xf32>
    %73 = tpu.matmul %70, %72, %cst_43 {dimension_numbers = #tpu.dot_dimension_numbers<[1], [0], [0], [1], [0, 0, 1, 1], [], []>} : vector<19x168xbf16>, vector<168x160xbf16>, vector<19x160xf32> -> vector<19x160xf32>
    %74 = arith.addf %68, %73 : vector<19x160xf32>
    %75 = vector.extract_strided_slice %37 {offsets = [6, 0], sizes = [19, 168], strides = [1, 1]} : vector<28x168xf32> to vector<19x168xf32>
    %76 = arith.truncf %75 : vector<19x168xf32> to vector<19x168xbf16>
    %c6 = arith.constant 6 : index
    %c0_44 = arith.constant 0 : index
    %c0_45 = arith.constant 0 : index
    %77 = vector.load %arg4[%c6, %c0_44, %c0_45] : memref<10x168x160xbf16, #tpu.memory_space<vmem>>, vector<1x168x160xbf16>
    %78 = vector.shape_cast %77 : vector<1x168x160xbf16> to vector<168x160xbf16>
    %cst_46 = arith.constant dense<0.000000e+00> : vector<19x160xf32>
    %79 = tpu.matmul %76, %78, %cst_46 {dimension_numbers = #tpu.dot_dimension_numbers<[1], [0], [0], [1], [0, 0, 1, 1], [], []>} : vector<19x168xbf16>, vector<168x160xbf16>, vector<19x160xf32> -> vector<19x160xf32>
    %80 = arith.addf %74, %79 : vector<19x160xf32>
    %81 = vector.extract_strided_slice %37 {offsets = [7, 0], sizes = [19, 168], strides = [1, 1]} : vector<28x168xf32> to vector<19x168xf32>
    %82 = arith.truncf %81 : vector<19x168xf32> to vector<19x168xbf16>
    %c7 = arith.constant 7 : index
    %c0_47 = arith.constant 0 : index
    %c0_48 = arith.constant 0 : index
    %83 = vector.load %arg4[%c7, %c0_47, %c0_48] : memref<10x168x160xbf16, #tpu.memory_space<vmem>>, vector<1x168x160xbf16>
    %84 = vector.shape_cast %83 : vector<1x168x160xbf16> to vector<168x160xbf16>
    %cst_49 = arith.constant dense<0.000000e+00> : vector<19x160xf32>
    %85 = tpu.matmul %82, %84, %cst_49 {dimension_numbers = #tpu.dot_dimension_numbers<[1], [0], [0], [1], [0, 0, 1, 1], [], []>} : vector<19x168xbf16>, vector<168x160xbf16>, vector<19x160xf32> -> vector<19x160xf32>
    %86 = arith.addf %80, %85 : vector<19x160xf32>
    %87 = vector.extract_strided_slice %37 {offsets = [8, 0], sizes = [19, 168], strides = [1, 1]} : vector<28x168xf32> to vector<19x168xf32>
    %88 = arith.truncf %87 : vector<19x168xf32> to vector<19x168xbf16>
    %c8 = arith.constant 8 : index
    %c0_50 = arith.constant 0 : index
    %c0_51 = arith.constant 0 : index
    %89 = vector.load %arg4[%c8, %c0_50, %c0_51] : memref<10x168x160xbf16, #tpu.memory_space<vmem>>, vector<1x168x160xbf16>
    %90 = vector.shape_cast %89 : vector<1x168x160xbf16> to vector<168x160xbf16>
    %cst_52 = arith.constant dense<0.000000e+00> : vector<19x160xf32>
    %91 = tpu.matmul %88, %90, %cst_52 {dimension_numbers = #tpu.dot_dimension_numbers<[1], [0], [0], [1], [0, 0, 1, 1], [], []>} : vector<19x168xbf16>, vector<168x160xbf16>, vector<19x160xf32> -> vector<19x160xf32>
    %92 = arith.addf %86, %91 : vector<19x160xf32>
    %93 = vector.extract_strided_slice %37 {offsets = [9, 0], sizes = [19, 168], strides = [1, 1]} : vector<28x168xf32> to vector<19x168xf32>
    %94 = arith.truncf %93 : vector<19x168xf32> to vector<19x168xbf16>
    %c9 = arith.constant 9 : index
    %c0_53 = arith.constant 0 : index
    %c0_54 = arith.constant 0 : index
    %95 = vector.load %arg4[%c9, %c0_53, %c0_54] : memref<10x168x160xbf16, #tpu.memory_space<vmem>>, vector<1x168x160xbf16>
    %96 = vector.shape_cast %95 : vector<1x168x160xbf16> to vector<168x160xbf16>
    %cst_55 = arith.constant dense<0.000000e+00> : vector<19x160xf32>
    %97 = tpu.matmul %94, %96, %cst_55 {dimension_numbers = #tpu.dot_dimension_numbers<[1], [0], [0], [1], [0, 0, 1, 1], [], []>} : vector<19x168xbf16>, vector<168x160xbf16>, vector<19x160xf32> -> vector<19x160xf32>
    %98 = arith.addf %92, %97 : vector<19x160xf32>
    %c0_56 = arith.constant 0 : index
    %c0_57 = arith.constant 0 : index
    %99 = vector.load %arg5[%c0_56, %c0_57] : memref<1x160xf32, #tpu.memory_space<vmem>>, vector<1x160xf32>
    %100 = vector.broadcast %99 : vector<1x160xf32> to vector<19x160xf32>
    %101 = arith.addf %98, %100 : vector<19x160xf32>
    %cst_58 = arith.constant 0.000000e+00 : f32
    %102 = vector.broadcast %cst_58 : f32 to vector<19x160xf32>
    %103 = arith.maximumf %101, %102 : vector<19x160xf32>
    %104 = arith.truncf %103 : vector<19x160xf32> to vector<19x160xbf16>
    %cst_59 = arith.constant 0.000000e+00 : f32
    %105 = vector.broadcast %cst_59 : f32 to vector<1x120xf32>
    %c0_60 = arith.constant 0 : index
    %c0_61 = arith.constant 0 : index
    %c0_62 = arith.constant 0 : index
    %106 = vector.load %arg6[%c0_60, %c0_61, %c0_62] : memref<10x1x19xbf16, #tpu.memory_space<vmem>>, vector<1x1x19xbf16>
    %107 = vector.shape_cast %106 : vector<1x1x19xbf16> to vector<1x19xbf16>
    %cst_63 = arith.constant dense<0.000000e+00> : vector<1x160xf32>
    %108 = tpu.matmul %107, %104, %cst_63 {dimension_numbers = #tpu.dot_dimension_numbers<[1], [0], [0], [1], [0, 0, 1, 1], [], []>} : vector<1x19xbf16>, vector<19x160xbf16>, vector<1x160xf32> -> vector<1x160xf32>
    %109 = arith.truncf %108 : vector<1x160xf32> to vector<1x160xbf16>
    %c0_64 = arith.constant 0 : index
    %c0_65 = arith.constant 0 : index
    %c0_66 = arith.constant 0 : index
    %110 = vector.load %arg7[%c0_64, %c0_65, %c0_66] : memref<10x160x120xbf16, #tpu.memory_space<vmem>>, vector<1x160x120xbf16>
    %111 = vector.shape_cast %110 : vector<1x160x120xbf16> to vector<160x120xbf16>
    %cst_67 = arith.constant dense<0.000000e+00> : vector<1x120xf32>
    %112 = tpu.matmul %109, %111, %cst_67 {dimension_numbers = #tpu.dot_dimension_numbers<[1], [0], [0], [1], [0, 0, 1, 1], [], []>} : vector<1x160xbf16>, vector<160x120xbf16>, vector<1x120xf32> -> vector<1x120xf32>
    %113 = arith.addf %105, %112 : vector<1x120xf32>
    %c1_68 = arith.constant 1 : index
    %c0_69 = arith.constant 0 : index
    %c0_70 = arith.constant 0 : index
    %114 = vector.load %arg6[%c1_68, %c0_69, %c0_70] : memref<10x1x19xbf16, #tpu.memory_space<vmem>>, vector<1x1x19xbf16>
    %115 = vector.shape_cast %114 : vector<1x1x19xbf16> to vector<1x19xbf16>
    %cst_71 = arith.constant dense<0.000000e+00> : vector<1x160xf32>
    %116 = tpu.matmul %115, %104, %cst_71 {dimension_numbers = #tpu.dot_dimension_numbers<[1], [0], [0], [1], [0, 0, 1, 1], [], []>} : vector<1x19xbf16>, vector<19x160xbf16>, vector<1x160xf32> -> vector<1x160xf32>
    %117 = arith.truncf %116 : vector<1x160xf32> to vector<1x160xbf16>
    %c1_72 = arith.constant 1 : index
    %c0_73 = arith.constant 0 : index
    %c0_74 = arith.constant 0 : index
    %118 = vector.load %arg7[%c1_72, %c0_73, %c0_74] : memref<10x160x120xbf16, #tpu.memory_space<vmem>>, vector<1x160x120xbf16>
    %119 = vector.shape_cast %118 : vector<1x160x120xbf16> to vector<160x120xbf16>
    %cst_75 = arith.constant dense<0.000000e+00> : vector<1x120xf32>
    %120 = tpu.matmul %117, %119, %cst_75 {dimension_numbers = #tpu.dot_dimension_numbers<[1], [0], [0], [1], [0, 0, 1, 1], [], []>} : vector<1x160xbf16>, vector<160x120xbf16>, vector<1x120xf32> -> vector<1x120xf32>
    %121 = arith.addf %113, %120 : vector<1x120xf32>
    %c2_76 = arith.constant 2 : index
    %c0_77 = arith.constant 0 : index
    %c0_78 = arith.constant 0 : index
    %122 = vector.load %arg6[%c2_76, %c0_77, %c0_78] : memref<10x1x19xbf16, #tpu.memory_space<vmem>>, vector<1x1x19xbf16>
    %123 = vector.shape_cast %122 : vector<1x1x19xbf16> to vector<1x19xbf16>
    %cst_79 = arith.constant dense<0.000000e+00> : vector<1x160xf32>
    %124 = tpu.matmul %123, %104, %cst_79 {dimension_numbers = #tpu.dot_dimension_numbers<[1], [0], [0], [1], [0, 0, 1, 1], [], []>} : vector<1x19xbf16>, vector<19x160xbf16>, vector<1x160xf32> -> vector<1x160xf32>
    %125 = arith.truncf %124 : vector<1x160xf32> to vector<1x160xbf16>
    %c2_80 = arith.constant 2 : index
    %c0_81 = arith.constant 0 : index
    %c0_82 = arith.constant 0 : index
    %126 = vector.load %arg7[%c2_80, %c0_81, %c0_82] : memref<10x160x120xbf16, #tpu.memory_space<vmem>>, vector<1x160x120xbf16>
    %127 = vector.shape_cast %126 : vector<1x160x120xbf16> to vector<160x120xbf16>
    %cst_83 = arith.constant dense<0.000000e+00> : vector<1x120xf32>
    %128 = tpu.matmul %125, %127, %cst_83 {dimension_numbers = #tpu.dot_dimension_numbers<[1], [0], [0], [1], [0, 0, 1, 1], [], []>} : vector<1x160xbf16>, vector<160x120xbf16>, vector<1x120xf32> -> vector<1x120xf32>
    %129 = arith.addf %121, %128 : vector<1x120xf32>
    %c3_84 = arith.constant 3 : index
    %c0_85 = arith.constant 0 : index
    %c0_86 = arith.constant 0 : index
    %130 = vector.load %arg6[%c3_84, %c0_85, %c0_86] : memref<10x1x19xbf16, #tpu.memory_space<vmem>>, vector<1x1x19xbf16>
    %131 = vector.shape_cast %130 : vector<1x1x19xbf16> to vector<1x19xbf16>
    %cst_87 = arith.constant dense<0.000000e+00> : vector<1x160xf32>
    %132 = tpu.matmul %131, %104, %cst_87 {dimension_numbers = #tpu.dot_dimension_numbers<[1], [0], [0], [1], [0, 0, 1, 1], [], []>} : vector<1x19xbf16>, vector<19x160xbf16>, vector<1x160xf32> -> vector<1x160xf32>
    %133 = arith.truncf %132 : vector<1x160xf32> to vector<1x160xbf16>
    %c3_88 = arith.constant 3 : index
    %c0_89 = arith.constant 0 : index
    %c0_90 = arith.constant 0 : index
    %134 = vector.load %arg7[%c3_88, %c0_89, %c0_90] : memref<10x160x120xbf16, #tpu.memory_space<vmem>>, vector<1x160x120xbf16>
    %135 = vector.shape_cast %134 : vector<1x160x120xbf16> to vector<160x120xbf16>
    %cst_91 = arith.constant dense<0.000000e+00> : vector<1x120xf32>
    %136 = tpu.matmul %133, %135, %cst_91 {dimension_numbers = #tpu.dot_dimension_numbers<[1], [0], [0], [1], [0, 0, 1, 1], [], []>} : vector<1x160xbf16>, vector<160x120xbf16>, vector<1x120xf32> -> vector<1x120xf32>
    %137 = arith.addf %129, %136 : vector<1x120xf32>
    %c4_92 = arith.constant 4 : index
    %c0_93 = arith.constant 0 : index
    %c0_94 = arith.constant 0 : index
    %138 = vector.load %arg6[%c4_92, %c0_93, %c0_94] : memref<10x1x19xbf16, #tpu.memory_space<vmem>>, vector<1x1x19xbf16>
    %139 = vector.shape_cast %138 : vector<1x1x19xbf16> to vector<1x19xbf16>
    %cst_95 = arith.constant dense<0.000000e+00> : vector<1x160xf32>
    %140 = tpu.matmul %139, %104, %cst_95 {dimension_numbers = #tpu.dot_dimension_numbers<[1], [0], [0], [1], [0, 0, 1, 1], [], []>} : vector<1x19xbf16>, vector<19x160xbf16>, vector<1x160xf32> -> vector<1x160xf32>
    %141 = arith.truncf %140 : vector<1x160xf32> to vector<1x160xbf16>
    %c4_96 = arith.constant 4 : index
    %c0_97 = arith.constant 0 : index
    %c0_98 = arith.constant 0 : index
    %142 = vector.load %arg7[%c4_96, %c0_97, %c0_98] : memref<10x160x120xbf16, #tpu.memory_space<vmem>>, vector<1x160x120xbf16>
    %143 = vector.shape_cast %142 : vector<1x160x120xbf16> to vector<160x120xbf16>
    %cst_99 = arith.constant dense<0.000000e+00> : vector<1x120xf32>
    %144 = tpu.matmul %141, %143, %cst_99 {dimension_numbers = #tpu.dot_dimension_numbers<[1], [0], [0], [1], [0, 0, 1, 1], [], []>} : vector<1x160xbf16>, vector<160x120xbf16>, vector<1x120xf32> -> vector<1x120xf32>
    %145 = arith.addf %137, %144 : vector<1x120xf32>
    %c5_100 = arith.constant 5 : index
    %c0_101 = arith.constant 0 : index
    %c0_102 = arith.constant 0 : index
    %146 = vector.load %arg6[%c5_100, %c0_101, %c0_102] : memref<10x1x19xbf16, #tpu.memory_space<vmem>>, vector<1x1x19xbf16>
    %147 = vector.shape_cast %146 : vector<1x1x19xbf16> to vector<1x19xbf16>
    %cst_103 = arith.constant dense<0.000000e+00> : vector<1x160xf32>
    %148 = tpu.matmul %147, %104, %cst_103 {dimension_numbers = #tpu.dot_dimension_numbers<[1], [0], [0], [1], [0, 0, 1, 1], [], []>} : vector<1x19xbf16>, vector<19x160xbf16>, vector<1x160xf32> -> vector<1x160xf32>
    %149 = arith.truncf %148 : vector<1x160xf32> to vector<1x160xbf16>
    %c5_104 = arith.constant 5 : index
    %c0_105 = arith.constant 0 : index
    %c0_106 = arith.constant 0 : index
    %150 = vector.load %arg7[%c5_104, %c0_105, %c0_106] : memref<10x160x120xbf16, #tpu.memory_space<vmem>>, vector<1x160x120xbf16>
    %151 = vector.shape_cast %150 : vector<1x160x120xbf16> to vector<160x120xbf16>
    %cst_107 = arith.constant dense<0.000000e+00> : vector<1x120xf32>
    %152 = tpu.matmul %149, %151, %cst_107 {dimension_numbers = #tpu.dot_dimension_numbers<[1], [0], [0], [1], [0, 0, 1, 1], [], []>} : vector<1x160xbf16>, vector<160x120xbf16>, vector<1x120xf32> -> vector<1x120xf32>
    %153 = arith.addf %145, %152 : vector<1x120xf32>
    %c6_108 = arith.constant 6 : index
    %c0_109 = arith.constant 0 : index
    %c0_110 = arith.constant 0 : index
    %154 = vector.load %arg6[%c6_108, %c0_109, %c0_110] : memref<10x1x19xbf16, #tpu.memory_space<vmem>>, vector<1x1x19xbf16>
    %155 = vector.shape_cast %154 : vector<1x1x19xbf16> to vector<1x19xbf16>
    %cst_111 = arith.constant dense<0.000000e+00> : vector<1x160xf32>
    %156 = tpu.matmul %155, %104, %cst_111 {dimension_numbers = #tpu.dot_dimension_numbers<[1], [0], [0], [1], [0, 0, 1, 1], [], []>} : vector<1x19xbf16>, vector<19x160xbf16>, vector<1x160xf32> -> vector<1x160xf32>
    %157 = arith.truncf %156 : vector<1x160xf32> to vector<1x160xbf16>
    %c6_112 = arith.constant 6 : index
    %c0_113 = arith.constant 0 : index
    %c0_114 = arith.constant 0 : index
    %158 = vector.load %arg7[%c6_112, %c0_113, %c0_114] : memref<10x160x120xbf16, #tpu.memory_space<vmem>>, vector<1x160x120xbf16>
    %159 = vector.shape_cast %158 : vector<1x160x120xbf16> to vector<160x120xbf16>
    %cst_115 = arith.constant dense<0.000000e+00> : vector<1x120xf32>
    %160 = tpu.matmul %157, %159, %cst_115 {dimension_numbers = #tpu.dot_dimension_numbers<[1], [0], [0], [1], [0, 0, 1, 1], [], []>} : vector<1x160xbf16>, vector<160x120xbf16>, vector<1x120xf32> -> vector<1x120xf32>
    %161 = arith.addf %153, %160 : vector<1x120xf32>
    %c7_116 = arith.constant 7 : index
    %c0_117 = arith.constant 0 : index
    %c0_118 = arith.constant 0 : index
    %162 = vector.load %arg6[%c7_116, %c0_117, %c0_118] : memref<10x1x19xbf16, #tpu.memory_space<vmem>>, vector<1x1x19xbf16>
    %163 = vector.shape_cast %162 : vector<1x1x19xbf16> to vector<1x19xbf16>
    %cst_119 = arith.constant dense<0.000000e+00> : vector<1x160xf32>
    %164 = tpu.matmul %163, %104, %cst_119 {dimension_numbers = #tpu.dot_dimension_numbers<[1], [0], [0], [1], [0, 0, 1, 1], [], []>} : vector<1x19xbf16>, vector<19x160xbf16>, vector<1x160xf32> -> vector<1x160xf32>
    %165 = arith.truncf %164 : vector<1x160xf32> to vector<1x160xbf16>
    %c7_120 = arith.constant 7 : index
    %c0_121 = arith.constant 0 : index
    %c0_122 = arith.constant 0 : index
    %166 = vector.load %arg7[%c7_120, %c0_121, %c0_122] : memref<10x160x120xbf16, #tpu.memory_space<vmem>>, vector<1x160x120xbf16>
    %167 = vector.shape_cast %166 : vector<1x160x120xbf16> to vector<160x120xbf16>
    %cst_123 = arith.constant dense<0.000000e+00> : vector<1x120xf32>
    %168 = tpu.matmul %165, %167, %cst_123 {dimension_numbers = #tpu.dot_dimension_numbers<[1], [0], [0], [1], [0, 0, 1, 1], [], []>} : vector<1x160xbf16>, vector<160x120xbf16>, vector<1x120xf32> -> vector<1x120xf32>
    %169 = arith.addf %161, %168 : vector<1x120xf32>
    %c8_124 = arith.constant 8 : index
    %c0_125 = arith.constant 0 : index
    %c0_126 = arith.constant 0 : index
    %170 = vector.load %arg6[%c8_124, %c0_125, %c0_126] : memref<10x1x19xbf16, #tpu.memory_space<vmem>>, vector<1x1x19xbf16>
    %171 = vector.shape_cast %170 : vector<1x1x19xbf16> to vector<1x19xbf16>
    %cst_127 = arith.constant dense<0.000000e+00> : vector<1x160xf32>
    %172 = tpu.matmul %171, %104, %cst_127 {dimension_numbers = #tpu.dot_dimension_numbers<[1], [0], [0], [1], [0, 0, 1, 1], [], []>} : vector<1x19xbf16>, vector<19x160xbf16>, vector<1x160xf32> -> vector<1x160xf32>
    %173 = arith.truncf %172 : vector<1x160xf32> to vector<1x160xbf16>
    %c8_128 = arith.constant 8 : index
    %c0_129 = arith.constant 0 : index
    %c0_130 = arith.constant 0 : index
    %174 = vector.load %arg7[%c8_128, %c0_129, %c0_130] : memref<10x160x120xbf16, #tpu.memory_space<vmem>>, vector<1x160x120xbf16>
    %175 = vector.shape_cast %174 : vector<1x160x120xbf16> to vector<160x120xbf16>
    %cst_131 = arith.constant dense<0.000000e+00> : vector<1x120xf32>
    %176 = tpu.matmul %173, %175, %cst_131 {dimension_numbers = #tpu.dot_dimension_numbers<[1], [0], [0], [1], [0, 0, 1, 1], [], []>} : vector<1x160xbf16>, vector<160x120xbf16>, vector<1x120xf32> -> vector<1x120xf32>
    %177 = arith.addf %169, %176 : vector<1x120xf32>
    %c9_132 = arith.constant 9 : index
    %c0_133 = arith.constant 0 : index
    %c0_134 = arith.constant 0 : index
    %178 = vector.load %arg6[%c9_132, %c0_133, %c0_134] : memref<10x1x19xbf16, #tpu.memory_space<vmem>>, vector<1x1x19xbf16>
    %179 = vector.shape_cast %178 : vector<1x1x19xbf16> to vector<1x19xbf16>
    %cst_135 = arith.constant dense<0.000000e+00> : vector<1x160xf32>
    %180 = tpu.matmul %179, %104, %cst_135 {dimension_numbers = #tpu.dot_dimension_numbers<[1], [0], [0], [1], [0, 0, 1, 1], [], []>} : vector<1x19xbf16>, vector<19x160xbf16>, vector<1x160xf32> -> vector<1x160xf32>
    %181 = arith.truncf %180 : vector<1x160xf32> to vector<1x160xbf16>
    %c9_136 = arith.constant 9 : index
    %c0_137 = arith.constant 0 : index
    %c0_138 = arith.constant 0 : index
    %182 = vector.load %arg7[%c9_136, %c0_137, %c0_138] : memref<10x160x120xbf16, #tpu.memory_space<vmem>>, vector<1x160x120xbf16>
    %183 = vector.shape_cast %182 : vector<1x160x120xbf16> to vector<160x120xbf16>
    %cst_139 = arith.constant dense<0.000000e+00> : vector<1x120xf32>
    %184 = tpu.matmul %181, %183, %cst_139 {dimension_numbers = #tpu.dot_dimension_numbers<[1], [0], [0], [1], [0, 0, 1, 1], [], []>} : vector<1x160xbf16>, vector<160x120xbf16>, vector<1x120xf32> -> vector<1x120xf32>
    %185 = arith.addf %177, %184 : vector<1x120xf32>
    %c0_140 = arith.constant 0 : index
    %c0_141 = arith.constant 0 : index
    %186 = vector.load %arg8[%c0_140, %c0_141] : memref<1x120xf32, #tpu.memory_space<vmem>>, vector<1x120xf32>
    %187 = arith.addf %185, %186 : vector<1x120xf32>
    %cst_142 = arith.constant 0.000000e+00 : f32
    %188 = vector.broadcast %cst_142 : f32 to vector<1x120xf32>
    %189 = arith.maximumf %187, %188 : vector<1x120xf32>
    %190 = arith.truncf %189 : vector<1x120xf32> to vector<1x120xbf16>
    %c0_143 = arith.constant 0 : index
    %c0_144 = arith.constant 0 : index
    %191 = vector.load %arg9[%c0_143, %c0_144] : memref<120x84xbf16, #tpu.memory_space<vmem>>, vector<120x84xbf16>
    %cst_145 = arith.constant dense<0.000000e+00> : vector<1x84xf32>
    %192 = tpu.matmul %190, %191, %cst_145 {dimension_numbers = #tpu.dot_dimension_numbers<[1], [0], [0], [1], [0, 0, 1, 1], [], []>} : vector<1x120xbf16>, vector<120x84xbf16>, vector<1x84xf32> -> vector<1x84xf32>
    %c0_146 = arith.constant 0 : index
    %c0_147 = arith.constant 0 : index
    %193 = vector.load %arg10[%c0_146, %c0_147] : memref<1x84xf32, #tpu.memory_space<vmem>>, vector<1x84xf32>
    %194 = arith.addf %192, %193 : vector<1x84xf32>
    %cst_148 = arith.constant 0.000000e+00 : f32
    %195 = vector.broadcast %cst_148 : f32 to vector<1x84xf32>
    %196 = arith.maximumf %194, %195 : vector<1x84xf32>
    %197 = arith.truncf %196 : vector<1x84xf32> to vector<1x84xbf16>
    %c0_149 = arith.constant 0 : index
    %c0_150 = arith.constant 0 : index
    %198 = vector.load %arg11[%c0_149, %c0_150] : memref<84x128xbf16, #tpu.memory_space<vmem>>, vector<84x128xbf16>
    %cst_151 = arith.constant dense<0.000000e+00> : vector<1x128xf32>
    %199 = tpu.matmul %197, %198, %cst_151 {dimension_numbers = #tpu.dot_dimension_numbers<[1], [0], [0], [1], [0, 0, 1, 1], [], []>} : vector<1x84xbf16>, vector<84x128xbf16>, vector<1x128xf32> -> vector<1x128xf32>
    %c0_152 = arith.constant 0 : index
    %c0_153 = arith.constant 0 : index
    %200 = vector.load %arg12[%c0_152, %c0_153] : memref<1x128xf32, #tpu.memory_space<vmem>>, vector<1x128xf32>
    %201 = arith.addf %199, %200 : vector<1x128xf32>
    %c0_154 = arith.constant 0 : index
    %c0_155 = arith.constant 0 : index
    %c0_156 = arith.constant 0 : index
    %202 = vector.load %arg13[%c0_154, %c0_155, %c0_156] : memref<1x1x128xf32, #tpu.memory_space<vmem>>, vector<1x1x128xf32>
    %203 = vector.shape_cast %202 : vector<1x1x128xf32> to vector<1x128xf32>
    %204 = vector.shape_cast %201 : vector<1x128xf32> to vector<1x1x128xf32>
    tpu.vector_store %arg13[%c0_154, %c0_155, %c0_156], %204 {strides = array<i32>} : memref<1x1x128xf32, #tpu.memory_space<vmem>>, vector<1x1x128xf32>,
    return
  }
  func.func @transform_0(%arg0: i32) -> (i32, i32) {
    %c0_i32 = arith.constant 0 : i32
    %c0_i32_0 = arith.constant 0 : i32
    return %arg0, %c0_i32 : i32, i32
  }
  func.func @transform_1(%arg0: i32) -> (i32, i32, i32) {
    %c0_i32 = arith.constant 0 : i32
    %c0_i32_0 = arith.constant 0 : i32
    %c0_i32_1 = arith.constant 0 : i32
    %c0_i32_2 = arith.constant 0 : i32
    return %c0_i32, %c0_i32_0, %c0_i32_1 : i32, i32, i32
  }
  func.func @transform_2(%arg0: i32) -> (i32, i32) {
    %c0_i32 = arith.constant 0 : i32
    %c0_i32_0 = arith.constant 0 : i32
    %c0_i32_1 = arith.constant 0 : i32
    return %c0_i32, %c0_i32_0 : i32, i32
  }
  func.func @transform_3(%arg0: i32) -> (i32, i32, i32) {
    %c0_i32 = arith.constant 0 : i32
    %c0_i32_0 = arith.constant 0 : i32
    %c0_i32_1 = arith.constant 0 : i32
    %c0_i32_2 = arith.constant 0 : i32
    return %c0_i32, %c0_i32_0, %c0_i32_1 : i32, i32, i32
  }
  func.func @transform_4(%arg0: i32) -> (i32, i32) {
    %c0_i32 = arith.constant 0 : i32
    %c0_i32_0 = arith.constant 0 : i32
    %c0_i32_1 = arith.constant 0 : i32
    return %c0_i32, %c0_i32_0 : i32, i32
  }
  func.func @transform_5(%arg0: i32) -> (i32, i32, i32) {
    %c0_i32 = arith.constant 0 : i32
    %c0_i32_0 = arith.constant 0 : i32
    %c0_i32_1 = arith.constant 0 : i32
    %c0_i32_2 = arith.constant 0 : i32
    return %c0_i32, %c0_i32_0, %c0_i32_1 : i32, i32, i32
  }
  func.func @transform_6(%arg0: i32) -> (i32, i32, i32) {
    %c0_i32 = arith.constant 0 : i32
    %c0_i32_0 = arith.constant 0 : i32
    %c0_i32_1 = arith.constant 0 : i32
    %c0_i32_2 = arith.constant 0 : i32
    return %c0_i32, %c0_i32_0, %c0_i32_1 : i32, i32, i32
  }
  func.func @transform_7(%arg0: i32) -> (i32, i32) {
    %c0_i32 = arith.constant 0 : i32
    %c0_i32_0 = arith.constant 0 : i32
    %c0_i32_1 = arith.constant 0 : i32
    return %c0_i32, %c0_i32_0 : i32, i32
  }
  func.func @transform_8(%arg0: i32) -> (i32, i32) {
    %c0_i32 = arith.constant 0 : i32
    %c0_i32_0 = arith.constant 0 : i32
    %c0_i32_1 = arith.constant 0 : i32
    return %c0_i32, %c0_i32_0 : i32, i32
  }
  func.func @transform_9(%arg0: i32) -> (i32, i32) {
    %c0_i32 = arith.constant 0 : i32
    %c0_i32_0 = arith.constant 0 : i32
    %c0_i32_1 = arith.constant 0 : i32
    return %c0_i32, %c0_i32_0 : i32, i32
  }
  func.func @transform_10(%arg0: i32) -> (i32, i32) {
    %c0_i32 = arith.constant 0 : i32
    %c0_i32_0 = arith.constant 0 : i32
    %c0_i32_1 = arith.constant 0 : i32
    return %c0_i32, %c0_i32_0 : i32, i32
  }
  func.func @transform_11(%arg0: i32) -> (i32, i32) {
    %c0_i32 = arith.constant 0 : i32
    %c0_i32_0 = arith.constant 0 : i32
    %c0_i32_1 = arith.constant 0 : i32
    return %c0_i32, %c0_i32_0 : i32, i32
  }
  func.func @transform_12(%arg0: i32) -> (i32, i32, i32) {
    %c0_i32 = arith.constant 0 : i32
    %c0_i32_0 = arith.constant 0 : i32
    %c0_i32_1 = arith.constant 0 : i32
    return %arg0, %c0_i32, %c0_i32_0 : i32, i32, i32
  }
}

</mosaic_0001>

<llo_original>
// kernel: lenet5_rsc_forward.1
$region0: #{lenet5_rsc_forward.1}
  #allocation0 [shape = 'u32[]', space=smem, size = 0x4, offset = 0x4, fixed_abs, tag = 'smem constant byte address 0x4 - core index']
  #allocation1 [shape = 'u32[144,128]{1,0:T(1,128)}', space=vmem, size = 0x12000, scoped, tag = 'internal scratch']
  %s0 = inlined_call_operand.vmem [shape: bf16[64,96], index: 0, kind: input, shape index: {}]
  %s1 = inlined_call_operand.vmem [shape: bf16[5,96,168], index: 1, kind: input, shape index: {}]
  %s2 = inlined_call_operand.vmem [shape: f32[1,168], index: 2, kind: input, shape index: {}]
  %s3 = inlined_call_operand.vmem [shape: bf16[10,168,160], index: 3, kind: input, shape index: {}]
  %s4 = inlined_call_operand.vmem [shape: f32[1,160], index: 4, kind: input, shape index: {}]
  %s5 = inlined_call_operand.vmem [shape: bf16[10,1,19], index: 5, kind: input, shape index: {}]
  %s6 = inlined_call_operand.vmem [shape: bf16[10,160,120], index: 6, kind: input, shape index: {}]
  %s7 = inlined_call_operand.vmem [shape: f32[1,120], index: 7, kind: input, shape index: {}]
  %s8 = inlined_call_operand.vmem [shape: bf16[120,84], index: 8, kind: input, shape index: {}]
  %s9 = inlined_call_operand.vmem [shape: f32[1,84], index: 9, kind: input, shape index: {}]
  %s10 = inlined_call_operand.vmem [shape: bf16[84,128], index: 10, kind: input, shape index: {}]
  %s11 = inlined_call_operand.vmem [shape: f32[1,128], index: 11, kind: input, shape index: {}]
  %s12 = inlined_call_operand.hbm [shape: f32[2,1,128], index: 12, kind: output, shape index: {}]
  %s13 = sld [smem:[#allocation0]]
  $region81: #{lenet5_rsc_forward.1} parent=0
    _
  %s15 = ssub.s32 1, %s13
  %s16 = scalar_select 0, %s15, %s13
  $region1: #{lenet5_rsc_forward.1} parent=0
    #allocation2 [shape = 'u8[1024]{0}', space=vmem, size = 0x400, scoped, tag = 'output window, operand 0']
    #allocation3 [shape = 's32[2]{0}', space=sflag, size = 0x8, scoped, tag = 'scoped memory for lenet5_rsc_forward.1']
    %17 = vsyncpa [#allocation3], 0
    %s18 = scalar_lea.sflag [#allocation3], 1
    %19 = vsyncpa %s18, 0
    loop: start=0, step=1, limit=4
    $region2: #{lenet5_rsc_forward.1} parent=1 // loop_pre_header
      _
    $region3: #{lenet5_rsc_forward.1} parent=1 // loop_header
      %s21 = sphi 0, %s25
      %p22 = scmp.ge.s32.totalorder %s21, 4
      %s31 = sphi 0, %s33
      %s34 = sphi 0, %s31
      %s35 = sphi 0, %s34
      %s51 = sphi 0, %s35
      %s55 = sphi 0, %s55
      %s57 = sphi 0, %s55
      %s58 = sphi 0, %s57
      %s72 = sphi 0, %s58
      %s76 = sphi 0, %s76
      %s78 = sphi 0, %s76
      %s79 = sphi 0, %s78
      %s93 = sphi 0, %s79
      %s97 = sphi 0, %s97
      %s99 = sphi 0, %s97
      %s100 = sphi 0, %s99
      %s114 = sphi 0, %s100
      %s118 = sphi 0, %s118
      %s120 = sphi 0, %s118
      %s121 = sphi 0, %s120
      %s135 = sphi 0, %s121
      %s139 = sphi 0, %s139
      %s141 = sphi 0, %s139
      %s142 = sphi 0, %s141
      %s156 = sphi 0, %s142
      %s160 = sphi 0, %s160
      %s162 = sphi 0, %s160
      %s163 = sphi 0, %s162
      %s177 = sphi 0, %s163
      %s181 = sphi 0, %s181
      %s183 = sphi 0, %s181
      %s184 = sphi 0, %s183
      %s198 = sphi 0, %s184
      %s202 = sphi 0, %s202
      %s204 = sphi 0, %s202
      %s205 = sphi 0, %s204
      %s219 = sphi 0, %s205
      %s223 = sphi 0, %s223
      %s225 = sphi 0, %s223
      %s226 = sphi 0, %s225
      %s240 = sphi 0, %s226
      %s244 = sphi 0, %s244
      %s246 = sphi 0, %s244
      %s247 = sphi 0, %s246
      %s261 = sphi 0, %s247
      %s265 = sphi 0, %s265
      %s267 = sphi 0, %s265
      %s268 = sphi 0, %s267
      %s282 = sphi 0, %s268
      %s288 = sphi 0, %s290
      %s291 = sphi 0, %s288
      %s292 = sphi 0, %s291
      %s308 = sphi 0, %s292
    $region4: #{lenet5_rsc_forward.1} parent=1 // loop_header_branch
      %24 = sbr.rel (%p22) target = $region8
    $region5: #{lenet5_rsc_forward.1} parent=1 // loop_body
      %s26 = ssub.s32 %s21, 1
      %s27 = ssub.s32 %s21, 2
      %s28 = sadd.s32 %s21, 1
      %s29 = ssub.s32 %s21, %s28
      %p30 = scmp.eq.s32.totalorder %s29, 0
      %s32 = sadd.s32 %s31, 1
      %s33 = scalar_select %p30, %s31, %s32
      %p36 = pneg %p30
      %p37 = scmp.eq.s32.totalorder %s21, 1
      %p38 = por %p36, %p37
      %p39 = scmp.ne.s32.totalorder %s31, %s34
      %p40 = scmp.eq.s32.totalorder %s21, 0
      %p41 = por %p39, %p40
      %p42 = scmp.ne.s32.totalorder %s31, %s34
      %p43 = scmp.eq.s32.totalorder %s26, 1
      %p44 = por %p42, %p43
      %p45 = scmp.ne.s32.totalorder %s34, %s35
      %p46 = scmp.eq.s32.totalorder %s26, 0
      %p47 = por %p45, %p46
      %p48 = scmp.ne.s32.totalorder %s34, %s35
      %p49 = scmp.eq.s32.totalorder %s27, 1
      %p50 = por %p48, %p49
      %p52 = scmp.ne.s32.totalorder %s35, %s51
      %p53 = scmp.eq.s32.totalorder %s27, 0
      %p54 = por %p52, %p53
      %s56 = sadd.s32 %s55, 1
      %p59 = scmp.eq.s32.totalorder %s21, 1
      %p60 = scmp.ne.s32.totalorder %s55, %s57
      %p61 = scmp.eq.s32.totalorder %s21, 0
      %p62 = por %p60, %p61
      %p63 = scmp.ne.s32.totalorder %s55, %s57
      %p64 = scmp.eq.s32.totalorder %s26, 1
      %p65 = por %p63, %p64
      %p66 = scmp.ne.s32.totalorder %s57, %s58
      %p67 = scmp.eq.s32.totalorder %s26, 0
      %p68 = por %p66, %p67
      %p69 = scmp.ne.s32.totalorder %s57, %s58
      %p70 = scmp.eq.s32.totalorder %s27, 1
      %p71 = por %p69, %p70
      %p73 = scmp.ne.s32.totalorder %s58, %s72
      %p74 = scmp.eq.s32.totalorder %s27, 0
      %p75 = por %p73, %p74
      %s77 = sadd.s32 %s76, 1
      %p80 = scmp.eq.s32.totalorder %s21, 1
      %p81 = scmp.ne.s32.totalorder %s76, %s78
      %p82 = scmp.eq.s32.totalorder %s21, 0
      %p83 = por %p81, %p82
      %p84 = scmp.ne.s32.totalorder %s76, %s78
      %p85 = scmp.eq.s32.totalorder %s26, 1
      %p86 = por %p84, %p85
      %p87 = scmp.ne.s32.totalorder %s78, %s79
      %p88 = scmp.eq.s32.totalorder %s26, 0
      %p89 = por %p87, %p88
      %p90 = scmp.ne.s32.totalorder %s78, %s79
      %p91 = scmp.eq.s32.totalorder %s27, 1
      %p92 = por %p90, %p91
      %p94 = scmp.ne.s32.totalorder %s79, %s93
      %p95 = scmp.eq.s32.totalorder %s27, 0
      %p96 = por %p94, %p95
      %s98 = sadd.s32 %s97, 1
      %p101 = scmp.eq.s32.totalorder %s21, 1
      %p102 = scmp.ne.s32.totalorder %s97, %s99
      %p103 = scmp.eq.s32.totalorder %s21, 0
      %p104 = por %p102, %p103
      %p105 = scmp.ne.s32.totalorder %s97, %s99
      %p106 = scmp.eq.s32.totalorder %s26, 1
      %p107 = por %p105, %p106
      %p108 = scmp.ne.s32.totalorder %s99, %s100
      %p109 = scmp.eq.s32.totalorder %s26, 0
      %p110 = por %p108, %p109
      %p111 = scmp.ne.s32.totalorder %s99, %s100
      %p112 = scmp.eq.s32.totalorder %s27, 1
      %p113 = por %p111, %p112
      %p115 = scmp.ne.s32.totalorder %s100, %s114
      %p116 = scmp.eq.s32.totalorder %s27, 0
      %p117 = por %p115, %p116
      %s119 = sadd.s32 %s118, 1
      %p122 = scmp.eq.s32.totalorder %s21, 1
      %p123 = scmp.ne.s32.totalorder %s118, %s120
      %p124 = scmp.eq.s32.totalorder %s21, 0
      %p125 = por %p123, %p124
      %p126 = scmp.ne.s32.totalorder %s118, %s120
      %p127 = scmp.eq.s32.totalorder %s26, 1
      %p128 = por %p126, %p127
      %p129 = scmp.ne.s32.totalorder %s120, %s121
      %p130 = scmp.eq.s32.totalorder %s26, 0
      %p131 = por %p129, %p130
      %p132 = scmp.ne.s32.totalorder %s120, %s121
      %p133 = scmp.eq.s32.totalorder %s27, 1
      %p134 = por %p132, %p133
      %p136 = scmp.ne.s32.totalorder %s121, %s135
      %p137 = scmp.eq.s32.totalorder %s27, 0
      %p138 = por %p136, %p137
      %s140 = sadd.s32 %s139, 1
      %p143 = scmp.eq.s32.totalorder %s21, 1
      %p144 = scmp.ne.s32.totalorder %s139, %s141
      %p145 = scmp.eq.s32.totalorder %s21, 0
      %p146 = por %p144, %p145
      %p147 = scmp.ne.s32.totalorder %s139, %s141
      %p148 = scmp.eq.s32.totalorder %s26, 1
      %p149 = por %p147, %p148
      %p150 = scmp.ne.s32.totalorder %s141, %s142
      %p151 = scmp.eq.s32.totalorder %s26, 0
      %p152 = por %p150, %p151
      %p153 = scmp.ne.s32.totalorder %s141, %s142
      %p154 = scmp.eq.s32.totalorder %s27, 1
      %p155 = por %p153, %p154
      %p157 = scmp.ne.s32.totalorder %s142, %s156
      %p158 = scmp.eq.s32.totalorder %s27, 0
      %p159 = por %p157, %p158
      %s161 = sadd.s32 %s160, 1
      %p164 = scmp.eq.s32.totalorder %s21, 1
      %p165 = scmp.ne.s32.totalorder %s160, %s162
      %p166 = scmp.eq.s32.totalorder %s21, 0
      %p167 = por %p165, %p166
      %p168 = scmp.ne.s32.totalorder %s160, %s162
      %p169 = scmp.eq.s32.totalorder %s26, 1
      %p170 = por %p168, %p169
      %p171 = scmp.ne.s32.totalorder %s162, %s163
      %p172 = scmp.eq.s32.totalorder %s26, 0
      %p173 = por %p171, %p172
      %p174 = scmp.ne.s32.totalorder %s162, %s163
      %p175 = scmp.eq.s32.totalorder %s27, 1
      %p176 = por %p174, %p175
      %p178 = scmp.ne.s32.totalorder %s163, %s177
      %p179 = scmp.eq.s32.totalorder %s27, 0
      %p180 = por %p178, %p179
      %s182 = sadd.s32 %s181, 1
      %p185 = scmp.eq.s32.totalorder %s21, 1
      %p186 = scmp.ne.s32.totalorder %s181, %s183
      %p187 = scmp.eq.s32.totalorder %s21, 0
      %p188 = por %p186, %p187
      %p189 = scmp.ne.s32.totalorder %s181, %s183
      %p190 = scmp.eq.s32.totalorder %s26, 1
      %p191 = por %p189, %p190
      %p192 = scmp.ne.s32.totalorder %s183, %s184
      %p193 = scmp.eq.s32.totalorder %s26, 0
      %p194 = por %p192, %p193
      %p195 = scmp.ne.s32.totalorder %s183, %s184
      %p196 = scmp.eq.s32.totalorder %s27, 1
      %p197 = por %p195, %p196
      %p199 = scmp.ne.s32.totalorder %s184, %s198
      %p200 = scmp.eq.s32.totalorder %s27, 0
      %p201 = por %p199, %p200
      %s203 = sadd.s32 %s202, 1
      %p206 = scmp.eq.s32.totalorder %s21, 1
      %p207 = scmp.ne.s32.totalorder %s202, %s204
      %p208 = scmp.eq.s32.totalorder %s21, 0
      %p209 = por %p207, %p208
      %p210 = scmp.ne.s32.totalorder %s202, %s204
      %p211 = scmp.eq.s32.totalorder %s26, 1
      %p212 = por %p210, %p211
      %p213 = scmp.ne.s32.totalorder %s204, %s205
      %p214 = scmp.eq.s32.totalorder %s26, 0
      %p215 = por %p213, %p214
      %p216 = scmp.ne.s32.totalorder %s204, %s205
      %p217 = scmp.eq.s32.totalorder %s27, 1
      %p218 = por %p216, %p217
      %p220 = scmp.ne.s32.totalorder %s205, %s219
      %p221 = scmp.eq.s32.totalorder %s27, 0
      %p222 = por %p220, %p221
      %s224 = sadd.s32 %s223, 1
      %p227 = scmp.eq.s32.totalorder %s21, 1
      %p228 = scmp.ne.s32.totalorder %s223, %s225
      %p229 = scmp.eq.s32.totalorder %s21, 0
      %p230 = por %p228, %p229
      %p231 = scmp.ne.s32.totalorder %s223, %s225
      %p232 = scmp.eq.s32.totalorder %s26, 1
      %p233 = por %p231, %p232
      %p234 = scmp.ne.s32.totalorder %s225, %s226
      %p235 = scmp.eq.s32.totalorder %s26, 0
      %p236 = por %p234, %p235
      %p237 = scmp.ne.s32.totalorder %s225, %s226
      %p238 = scmp.eq.s32.totalorder %s27, 1
      %p239 = por %p237, %p238
      %p241 = scmp.ne.s32.totalorder %s226, %s240
      %p242 = scmp.eq.s32.totalorder %s27, 0
      %p243 = por %p241, %p242
      %s245 = sadd.s32 %s244, 1
      %p248 = scmp.eq.s32.totalorder %s21, 1
      %p249 = scmp.ne.s32.totalorder %s244, %s246
      %p250 = scmp.eq.s32.totalorder %s21, 0
      %p251 = por %p249, %p250
      %p252 = scmp.ne.s32.totalorder %s244, %s246
      %p253 = scmp.eq.s32.totalorder %s26, 1
      %p254 = por %p252, %p253
      %p255 = scmp.ne.s32.totalorder %s246, %s247
      %p256 = scmp.eq.s32.totalorder %s26, 0
      %p257 = por %p255, %p256
      %p258 = scmp.ne.s32.totalorder %s246, %s247
      %p259 = scmp.eq.s32.totalorder %s27, 1
      %p260 = por %p258, %p259
      %p262 = scmp.ne.s32.totalorder %s247, %s261
      %p263 = scmp.eq.s32.totalorder %s27, 0
      %p264 = por %p262, %p263
      %s266 = sadd.s32 %s265, 1
      %p269 = scmp.eq.s32.totalorder %s21, 1
      %p270 = scmp.ne.s32.totalorder %s265, %s267
      %p271 = scmp.eq.s32.totalorder %s21, 0
      %p272 = por %p270, %p271
      %p273 = scmp.ne.s32.totalorder %s265, %s267
      %p274 = scmp.eq.s32.totalorder %s26, 1
      %p275 = por %p273, %p274
      %p276 = scmp.ne.s32.totalorder %s267, %s268
      %p277 = scmp.eq.s32.totalorder %s26, 0
      %p278 = por %p276, %p277
      %p279 = scmp.ne.s32.totalorder %s267, %s268
      %p280 = scmp.eq.s32.totalorder %s27, 1
      %p281 = por %p279, %p280
      %p283 = scmp.ne.s32.totalorder %s268, %s282
      %p284 = scmp.eq.s32.totalorder %s27, 0
      %p285 = por %p283, %p284
      %s286 = ssub.s32 %s21, %s28
      %p287 = scmp.eq.s32.totalorder %s286, 0
      %s289 = sadd.s32 %s288, 1
      %s290 = scalar_select %p287, %s288, %s289
      %p293 = pneg %p287
      %p294 = scmp.eq.s32.totalorder %s21, 1
      %p295 = por %p293, %p294
      %p296 = scmp.ne.s32.totalorder %s288, %s291
      %p297 = scmp.eq.s32.totalorder %s21, 0
      %p298 = por %p296, %p297
      %p299 = scmp.ne.s32.totalorder %s288, %s291
      %p300 = scmp.eq.s32.totalorder %s26, 1
      %p301 = por %p299, %p300
      %p302 = scmp.ne.s32.totalorder %s291, %s292
      %p303 = scmp.eq.s32.totalorder %s26, 0
      %p304 = por %p302, %p303
      %p305 = scmp.ne.s32.totalorder %s291, %s292
      %p306 = scmp.eq.s32.totalorder %s27, 1
      %p307 = por %p305, %p306
      %p309 = scmp.ne.s32.totalorder %s292, %s308
      %p310 = scmp.eq.s32.totalorder %s27, 0
      %p311 = por %p309, %p310
      %p312 = scmp.le.s32.totalorder 1, %s21
      %p313 = scmp.lt.s32.totalorder %s21, 3
      %p314 = pnand %p312, %p313
      %p315 = pneg %p314
      // Predicated region
      $region9: #{lenet5_rsc_forward.1} parent=5 // pred_check
        _
      $region10: #{lenet5_rsc_forward.1} parent=5 // pred_check_branch
        %317 = sbr.rel (%p314) target = $region12
      $region11: #{lenet5_rsc_forward.1} parent=5 // pred_region
        %s318 = ssub.s32 %s21, 1
        // Predicated region
        $region13: #{lenet5_rsc_forward.1} parent=11 // pred_check
          %p319 = pneg %p68
        $region14: #{lenet5_rsc_forward.1} parent=11 // pred_check_branch
          %321 = sbr.rel (%p319) target = $region16
        $region15: #{lenet5_rsc_forward.1} parent=11 // pred_region
          _
        $region16: #{lenet5_rsc_forward.1} parent=11 // pred_fallthru
          _
        // Predicated region
        $region17: #{lenet5_rsc_forward.1} parent=11 // pred_check
          %p322 = pneg %p89
        $region18: #{lenet5_rsc_forward.1} parent=11 // pred_check_branch
          %324 = sbr.rel (%p322) target = $region20
        $region19: #{lenet5_rsc_forward.1} parent=11 // pred_region
          _
        $region20: #{lenet5_rsc_forward.1} parent=11 // pred_fallthru
          _
        // Predicated region
        $region21: #{lenet5_rsc_forward.1} parent=11 // pred_check
          %p325 = pneg %p110
        $region22: #{lenet5_rsc_forward.1} parent=11 // pred_check_branch
          %327 = sbr.rel (%p325) target = $region24
        $region23: #{lenet5_rsc_forward.1} parent=11 // pred_region
          _
        $region24: #{lenet5_rsc_forward.1} parent=11 // pred_fallthru
          _
        // Predicated region
        $region25: #{lenet5_rsc_forward.1} parent=11 // pred_check
          %p328 = pneg %p131
        $region26: #{lenet5_rsc_forward.1} parent=11 // pred_check_branch
          %330 = sbr.rel (%p328) target = $region28
        $region27: #{lenet5_rsc_forward.1} parent=11 // pred_region
          _
        $region28: #{lenet5_rsc_forward.1} parent=11 // pred_fallthru
          _
        // Predicated region
        $region29: #{lenet5_rsc_forward.1} parent=11 // pred_check
          %p331 = pneg %p152
        $region30: #{lenet5_rsc_forward.1} parent=11 // pred_check_branch
          %333 = sbr.rel (%p331) target = $region32
        $region31: #{lenet5_rsc_forward.1} parent=11 // pred_region
          _
        $region32: #{lenet5_rsc_forward.1} parent=11 // pred_fallthru
          _
        // Predicated region
        $region33: #{lenet5_rsc_forward.1} parent=11 // pred_check
          %p334 = pneg %p173
        $region34: #{lenet5_rsc_forward.1} parent=11 // pred_check_branch
          %336 = sbr.rel (%p334) target = $region36
        $region35: #{lenet5_rsc_forward.1} parent=11 // pred_region
          _
        $region36: #{lenet5_rsc_forward.1} parent=11 // pred_fallthru
          _
        // Predicated region
        $region37: #{lenet5_rsc_forward.1} parent=11 // pred_check
          %p337 = pneg %p194
        $region38: #{lenet5_rsc_forward.1} parent=11 // pred_check_branch
          %339 = sbr.rel (%p337) target = $region40
        $region39: #{lenet5_rsc_forward.1} parent=11 // pred_region
          _
        $region40: #{lenet5_rsc_forward.1} parent=11 // pred_fallthru
          _
        // Predicated region
        $region41: #{lenet5_rsc_forward.1} parent=11 // pred_check
          %p340 = pneg %p215
        $region42: #{lenet5_rsc_forward.1} parent=11 // pred_check_branch
          %342 = sbr.rel (%p340) target = $region44
        $region43: #{lenet5_rsc_forward.1} parent=11 // pred_region
          _
        $region44: #{lenet5_rsc_forward.1} parent=11 // pred_fallthru
          _
        // Predicated region
        $region45: #{lenet5_rsc_forward.1} parent=11 // pred_check
          %p343 = pneg %p236
        $region46: #{lenet5_rsc_forward.1} parent=11 // pred_check_branch
          %345 = sbr.rel (%p343) target = $region48
        $region47: #{lenet5_rsc_forward.1} parent=11 // pred_region
          _
        $region48: #{lenet5_rsc_forward.1} parent=11 // pred_fallthru
          _
        // Predicated region
        $region49: #{lenet5_rsc_forward.1} parent=11 // pred_check
          %p346 = pneg %p257
        $region50: #{lenet5_rsc_forward.1} parent=11 // pred_check_branch
          %348 = sbr.rel (%p346) target = $region52
        $region51: #{lenet5_rsc_forward.1} parent=11 // pred_region
          _
        $region52: #{lenet5_rsc_forward.1} parent=11 // pred_fallthru
          _
        // Predicated region
        $region53: #{lenet5_rsc_forward.1} parent=11 // pred_check
          %p349 = pneg %p278
        $region54: #{lenet5_rsc_forward.1} parent=11 // pred_check_branch
          %351 = sbr.rel (%p349) target = $region56
        $region55: #{lenet5_rsc_forward.1} parent=11 // pred_region
          _
        $region56: #{lenet5_rsc_forward.1} parent=11 // pred_fallthru
          _
      $region12: #{lenet5_rsc_forward.1} parent=5 // pred_fallthru
        _
      %p352 = scmp.lt.s32.totalorder %s21, 2
      // Predicated region
      $region57: #{lenet5_rsc_forward.1} parent=5 // pred_check
        %p353 = pneg %p352
      $region58: #{lenet5_rsc_forward.1} parent=5 // pred_check_branch
        %355 = sbr.rel (%p353) target = $region60
      $region59: #{lenet5_rsc_forward.1} parent=5 // pred_region
        // Predicated region
        $region61: #{lenet5_rsc_forward.1} parent=59 // pred_check
          %p356 = pneg %p41
        $region62: #{lenet5_rsc_forward.1} parent=59 // pred_check_branch
          %358 = sbr.rel (%p356) target = $region64
        $region63: #{lenet5_rsc_forward.1} parent=59 // pred_region
          %s359 = smul.u32 4, %s21
          %p360 = scmp.lt.s32.totalorder %s359, 7
          %s361 = scalar_select %p360, %s359, 7
          %s362 = smul.addr %s361, 4
          %s363 = scalar_lea.vmem %s0, %s362
          %s364 = smul.u32 4, %s21
        $region64: #{lenet5_rsc_forward.1} parent=59 // pred_fallthru
          _
      $region60: #{lenet5_rsc_forward.1} parent=5 // pred_fallthru
        _
      %p365 = scmp.le.s32.totalorder 1, %s21
      %p366 = scmp.lt.s32.totalorder %s21, 3
      %p367 = pnand %p365, %p366
      %p368 = pneg %p367
      // Predicated region
      $region65: #{lenet5_rsc_forward.1} parent=5 // pred_check
        _
      $region66: #{lenet5_rsc_forward.1} parent=5 // pred_check_branch
        %370 = sbr.rel (%p367) target = $region68
      $region67: #{lenet5_rsc_forward.1} parent=5 // pred_region
        %s371 = ssub.s32 %s21, 1
        %s372 = smul.u32 4, %s26
        %p373 = scmp.lt.s32.totalorder %s372, 7
        %s374 = scalar_select %p373, %s372, 7
        %s375 = smul.addr %s374, 4
        %s376 = scalar_lea.vmem %s0, %s375
        %p377 = pneg %p47
        %p378 = pneg %p44
        %p379 = pneg %p68
        %p380 = pneg %p65
        %p381 = pneg %p89
        %p382 = pneg %p86
        %p383 = pneg %p110
        %p384 = pneg %p107
        %p385 = pneg %p131
        %p386 = pneg %p128
        %p387 = pneg %p152
        %p388 = pneg %p149
        %p389 = pneg %p173
        %p390 = pneg %p170
        %p391 = pneg %p194
        %p392 = pneg %p191
        %p393 = pneg %p215
        %p394 = pneg %p212
        %p395 = pneg %p236
        %p396 = pneg %p233
        %p397 = pneg %p257
        %p398 = pneg %p254
        %p399 = pneg %p278
        %p400 = pneg %p275
        %p401 = pneg %p304
        %p402 = pneg %p301
        %s403 = sand.u32 %s291, 1
        %s404 = scalar_lea.sflag [#allocation3], %s403
        %s405 = sand.u32 %s291, 1
        %s406 = scalar_lea.vmem [#allocation2], %s405
        %s407 = smul.u32 4, %s26
        %p408 = scmp.lt.s32.totalorder %s407, 7
        %s409 = scalar_select %p408, %s407, 7
        %s410 = smul.addr %s409, 4
        %s411 = scalar_lea.vmem %s0, %s410
        %s412 = smul.u32 4, %s26
        %v414 = vld [vmem:[%s411] sm:$0xf]
        %v415 = vld [vmem:[%s411 + $0x4] sm:$0xf]
        %v416 = vld [vmem:[%s411 + $0x8] sm:$0xf]
        %v417 = vld [vmem:[%s411 + $0xc] sm:$0xf]
        %v418 = vunpack.c.l.bf16 %v414
        %v419 = vunpack.c.l.bf16 %v415
        %v420 = vunpack.c.l.bf16 %v416
        %v421 = vunpack.c.l.bf16 %v417
        %v422 = vpack.c.bf16 %v419, %v418
        %v423 = vpack.c.bf16 %v421, %v420
        %v424 = vld [vmem:[%s1] sm:$0xff]
        %v425 = vld [vmem:[%s1 + $0x8] sm:$0xff]
        %v426 = vld [vmem:[%s1 + $0x10] sm:$0xff]
        %v427 = vld [vmem:[%s1 + $0x18] sm:$0xff]
        %v428 = vld [vmem:[%s1 + $0x20] sm:$0xff]
        %v429 = vld [vmem:[%s1 + $0x28] sm:$0xff]
        %v430 = vld [vmem:[%s1 + $0x30] sm:$0xff]
        %v431 = vld [vmem:[%s1 + $0x38] sm:$0xff]
        %v432 = vld [vmem:[%s1 + $0x40] sm:$0xff]
        %v433 = vld [vmem:[%s1 + $0x48] sm:$0xff]
        %v434 = vld [vmem:[%s1 + $0x50] sm:$0xff]
        %v435 = vld [vmem:[%s1 + $0x58] sm:$0xff]
        %s436 = scalar_lea.vmem %s1, 96
        %v437 = vld [vmem:[%s436] sm:$0xff]
        %v438 = vld [vmem:[%s436 + $0x8] sm:$0xff]
        %v439 = vld [vmem:[%s436 + $0x10] sm:$0xff]
        %v440 = vld [vmem:[%s436 + $0x18] sm:$0xff]
        %v441 = vld [vmem:[%s436 + $0x20] sm:$0xff]
        %v442 = vld [vmem:[%s436 + $0x28] sm:$0xff]
        %v443 = vld [vmem:[%s436 + $0x30] sm:$0xff]
        %v444 = vld [vmem:[%s436 + $0x38] sm:$0xff]
        %v445 = vld [vmem:[%s436 + $0x40] sm:$0xff]
        %v446 = vld [vmem:[%s436 + $0x48] sm:$0xff]
        %v447 = vld [vmem:[%s436 + $0x50] sm:$0xff]
        %v448 = vld [vmem:[%s436 + $0x58] sm:$0xff]
        %vm449 = vsmask.f32 7424
        %v451 = vshrl.u32 %v422, 16
        %v453 = vshll.u32 %v422, 16
        %v455 = vrot.slane %v453, 1
        %v456 = vor.u32 %v451, %v455
        %v458 = vshll.u32 %v423, 16
        %v460 = vrot.slane %v458, 1
        %v461 = vsel %vm449, %v456, %v460
        %v462 = vshrl.u32 %v423, 16
        %v464 = vor.u32 %v462, %v460
        %v477 = vunpack.c.l.b16 %v437
        %v478 = vunpack.c.h.b16 %v437
        %v479 = vunpack.c.l.b16 %v438
        %v480 = vunpack.c.h.b16 %v438
        %v481 = vunpack.c.l.b16 %v439
        %v482 = vunpack.c.h.b16 %v439
        %v483 = vunpack.c.l.b16 %v440
        %v484 = vunpack.c.h.b16 %v440
        %v485 = vunpack.c.l.b16 %v441
        %v486 = vunpack.c.h.b16 %v441
        %v487 = vunpack.c.l.b16 %v442
        %v488 = vunpack.c.h.b16 %v442
        %v489 = vunpack.c.l.b16 %v443
        %v490 = vunpack.c.h.b16 %v443
        %v491 = vunpack.c.l.b16 %v444
        %v492 = vunpack.c.h.b16 %v444
        %v493 = vunpack.c.l.b16 %v445
        %v494 = vunpack.c.h.b16 %v445
        %v495 = vunpack.c.l.b16 %v446
        %v496 = vunpack.c.h.b16 %v446
        %v497 = vunpack.c.l.b16 %v447
        %v498 = vunpack.c.h.b16 %v447
        %v499 = vunpack.c.l.b16 %v448
        %v500 = vunpack.c.h.b16 %v448
        %v501 = vpack.c.b16 %v479, %v477
        %v502 = vpack.c.b16 %v480, %v478
        %v503 = vpack.c.b16 %v483, %v481
        %v504 = vpack.c.b16 %v484, %v482
        %v505 = vpack.c.b16 %v487, %v485
        %v506 = vpack.c.b16 %v488, %v486
        %v507 = vpack.c.b16 %v491, %v489
        %v508 = vpack.c.b16 %v492, %v490
        %v509 = vpack.c.b16 %v495, %v493
        %v510 = vpack.c.b16 %v496, %v494
        %v511 = vpack.c.b16 %v499, %v497
        %v512 = vpack.c.b16 %v500, %v498
        %vm525 = vcmask 785408
        %v527 = vsel %vm525, %v461, 0
        %v530 = vsel %vm525, %v464, 0
        %532 = vmatprep.subr.bf16.mxu0 %v502
        %533 = vmatpush1.bf16.msra.mxu0 %v501
        %534 = vmatprep.subr.bf16.mxu0 %v504
        %535 = vmatpush1.bf16.msra.mxu0 %v503
        %536 = vmatprep.subr.bf16.mxu0 %v506
        %537 = vmatpush1.bf16.msra.mxu0 %v505
        %538 = vmatprep.subr.bf16.mxu0 %v508
        %539 = vmatpush1.bf16.msra.mxu0 %v507
        %540 = vmatprep.subr.bf16.mxu0 %v510
        %541 = vmatpush1.bf16.msra.mxu0 %v509
        %542 = vmatprep.subr.bf16.mxu0 %v512
        %543 = vmatpush1.bf16.msra.mxu0 %v511
        %544 = vmatprep.subr.bf16.mxu0 0
        %545 = vmatpush1.bf16.msra.mxu0 0
        %546 = vmatprep.subr.bf16.mxu0 0
        %547 = vmatpush1.bf16.msra.mxu0 0
        %548 = vmatprep.subr.bf16.mxu0 0
        %549 = vmatpush1.bf16.msra.mxu0 0
        %550 = vmatprep.subr.bf16.mxu0 0
        %551 = vmatpush1.bf16.msra.mxu0 0
        %552 = vmatprep.subr.bf16.mxu0 0
        %553 = vmatpush1.bf16.msra.mxu0 0
        %554 = vmatprep.subr.bf16.mxu0 0
        %555 = vmatpush1.bf16.msra.mxu0 0
        %556 = vmatprep.subr.bf16.mxu0 0
        %557 = vmatpush1.bf16.msra.mxu0 0
        %558 = vmatprep.subr.bf16.mxu0 0
        %559 = vmatpush1.bf16.msra.mxu0 0
        %560 = vmatprep.subr.bf16.mxu0 0
        %561 = vmatpush1.bf16.msra.mxu0 0
        %562 = vmatprep.subr.bf16.mxu0 0
        %563 = vmatpush1.bf16.msra.mxu0 0
        %564 = vmatprep.mubr.bf16.mxu0 0
        %565 = vmatmul.mubr.bf16.gmra.mrb[0].mxu0 %v527
        %v566 = vpop.f32.mrb[0].mxu0
        %v567 = vadd.f32 0.0, %v566
        %v568 = vpop.f32.mrb[0].mxu0
        %v569 = vadd.f32 0.0, %v568
        %v570 = vpop.f32.mrb[0].mxu0
        %v571 = vadd.f32 0.0, %v570
        %v572 = vpop.f32.mrb[0].mxu0
        %v573 = vadd.f32 0.0, %v572
        %574 = vmatprep.mubr.bf16.mxu0 0
        %575 = vmatmul.mubr.bf16.gmra.mrb[0].mxu0 %v530
        %v576 = vpop.f32.mrb[0].mxu0
        %v577 = vadd.f32 0.0, %v576
        %v578 = vpop.f32.mrb[0].mxu0
        %v579 = vadd.f32 0.0, %v578
        %v580 = vpop.f32.mrb[0].mxu0
        %v581 = vadd.f32 0.0, %v580
        %v582 = vpop.f32.mrb[0].mxu0
        %v583 = vadd.f32 0.0, %v582
        %584 = vdwg.mxu0
        %v597 = vunpack.c.l.b16 %v424
        %v598 = vunpack.c.h.b16 %v424
        %v599 = vunpack.c.l.b16 %v425
        %v600 = vunpack.c.h.b16 %v425
        %v601 = vunpack.c.l.b16 %v426
        %v602 = vunpack.c.h.b16 %v426
        %v603 = vunpack.c.l.b16 %v427
        %v604 = vunpack.c.h.b16 %v427
        %v605 = vunpack.c.l.b16 %v428
        %v606 = vunpack.c.h.b16 %v428
        %v607 = vunpack.c.l.b16 %v429
        %v608 = vunpack.c.h.b16 %v429
        %v609 = vunpack.c.l.b16 %v430
        %v610 = vunpack.c.h.b16 %v430
        %v611 = vunpack.c.l.b16 %v431
        %v612 = vunpack.c.h.b16 %v431
        %v613 = vunpack.c.l.b16 %v432
        %v614 = vunpack.c.h.b16 %v432
        %v615 = vunpack.c.l.b16 %v433
        %v616 = vunpack.c.h.b16 %v433
        %v617 = vunpack.c.l.b16 %v434
        %v618 = vunpack.c.h.b16 %v434
        %v619 = vunpack.c.l.b16 %v435
        %v620 = vunpack.c.h.b16 %v435
        %v621 = vpack.c.b16 %v599, %v597
        %v622 = vpack.c.b16 %v600, %v598
        %v623 = vpack.c.b16 %v603, %v601
        %v624 = vpack.c.b16 %v604, %v602
        %v625 = vpack.c.b16 %v607, %v605
        %v626 = vpack.c.b16 %v608, %v606
        %v627 = vpack.c.b16 %v611, %v609
        %v628 = vpack.c.b16 %v612, %v610
        %v629 = vpack.c.b16 %v615, %v613
        %v630 = vpack.c.b16 %v616, %v614
        %v631 = vpack.c.b16 %v619, %v617
        %v632 = vpack.c.b16 %v620, %v618
        %v645 = vsel %vm525, %v422, 0
        %v647 = vsel %vm525, %v423, 0
        %649 = vmatprep.subr.bf16.mxu0 %v622
        %650 = vmatpush1.bf16.msra.mxu0 %v621
        %651 = vmatprep.subr.bf16.mxu0 %v624
        %652 = vmatpush1.bf16.msra.mxu0 %v623
        %653 = vmatprep.subr.bf16.mxu0 %v626
        %654 = vmatpush1.bf16.msra.mxu0 %v625
        %655 = vmatprep.subr.bf16.mxu0 %v628
        %656 = vmatpush1.bf16.msra.mxu0 %v627
        %657 = vmatprep.subr.bf16.mxu0 %v630
        %658 = vmatpush1.bf16.msra.mxu0 %v629
        %659 = vmatprep.subr.bf16.mxu0 %v632
        %660 = vmatpush1.bf16.msra.mxu0 %v631
        %661 = vmatprep.subr.bf16.mxu0 0
        %662 = vmatpush1.bf16.msra.mxu0 0
        %663 = vmatprep.subr.bf16.mxu0 0
        %664 = vmatpush1.bf16.msra.mxu0 0
        %665 = vmatprep.subr.bf16.mxu0 0
        %666 = vmatpush1.bf16.msra.mxu0 0
        %667 = vmatprep.subr.bf16.mxu0 0
        %668 = vmatpush1.bf16.msra.mxu0 0
        %669 = vmatprep.subr.bf16.mxu0 0
        %670 = vmatpush1.bf16.msra.mxu0 0
        %671 = vmatprep.subr.bf16.mxu0 0
        %672 = vmatpush1.bf16.msra.mxu0 0
        %673 = vmatprep.subr.bf16.mxu0 0
        %674 = vmatpush1.bf16.msra.mxu0 0
        %675 = vmatprep.subr.bf16.mxu0 0
        %676 = vmatpush1.bf16.msra.mxu0 0
        %677 = vmatprep.subr.bf16.mxu0 0
        %678 = vmatpush1.bf16.msra.mxu0 0
        %679 = vmatprep.subr.bf16.mxu0 0
        %680 = vmatpush1.bf16.msra.mxu0 0
        %681 = vmatprep.mubr.bf16.mxu0 0
        %682 = vmatmul.mubr.bf16.gmra.mrb[0].mxu0 %v645
        %v683 = vpop.f32.mrb[0].mxu0
        %v684 = vadd.f32 %v567, %v683
        %v685 = vpop.f32.mrb[0].mxu0
        %v686 = vadd.f32 %v569, %v685
        %v687 = vpop.f32.mrb[0].mxu0
        %v688 = vadd.f32 %v571, %v687
        %v689 = vpop.f32.mrb[0].mxu0
        %v690 = vadd.f32 %v573, %v689
        %691 = vmatprep.mubr.bf16.mxu0 0
        %692 = vmatmul.mubr.bf16.gmra.mrb[0].mxu0 %v647
        %v693 = vpop.f32.mrb[0].mxu0
        %v694 = vadd.f32 %v577, %v693
        %v695 = vpop.f32.mrb[0].mxu0
        %v696 = vadd.f32 %v579, %v695
        %v697 = vpop.f32.mrb[0].mxu0
        %v698 = vadd.f32 %v581, %v697
        %v699 = vpop.f32.mrb[0].mxu0
        %v700 = vadd.f32 %v583, %v699
        %701 = vdwg.mxu0
        %s702 = scalar_lea.vmem %s1, 192
        %v703 = vld [vmem:[%s702] sm:$0xff]
        %v704 = vld [vmem:[%s702 + $0x8] sm:$0xff]
        %v705 = vld [vmem:[%s702 + $0x10] sm:$0xff]
        %v706 = vld [vmem:[%s702 + $0x18] sm:$0xff]
        %v707 = vld [vmem:[%s702 + $0x20] sm:$0xff]
        %v708 = vld [vmem:[%s702 + $0x28] sm:$0xff]
        %v709 = vld [vmem:[%s702 + $0x30] sm:$0xff]
        %v710 = vld [vmem:[%s702 + $0x38] sm:$0xff]
        %v711 = vld [vmem:[%s702 + $0x40] sm:$0xff]
        %v712 = vld [vmem:[%s702 + $0x48] sm:$0xff]
        %v713 = vld [vmem:[%s702 + $0x50] sm:$0xff]
        %v714 = vld [vmem:[%s702 + $0x58] sm:$0xff]
        %vm717 = vcmask 1046528
        %v718 = vrot.slane %v422, 1
        %v719 = vrot.slane %v423, 1
        %v720 = vsel %vm717, %v718, %v719
        %v733 = vunpack.c.l.b16 %v703
        %v734 = vunpack.c.h.b16 %v703
        %v735 = vunpack.c.l.b16 %v704
        %v736 = vunpack.c.h.b16 %v704
        %v737 = vunpack.c.l.b16 %v705
        %v738 = vunpack.c.h.b16 %v705
        %v739 = vunpack.c.l.b16 %v706
        %v740 = vunpack.c.h.b16 %v706
        %v741 = vunpack.c.l.b16 %v707
        %v742 = vunpack.c.h.b16 %v707
        %v743 = vunpack.c.l.b16 %v708
        %v744 = vunpack.c.h.b16 %v708
        %v745 = vunpack.c.l.b16 %v709
        %v746 = vunpack.c.h.b16 %v709
        %v747 = vunpack.c.l.b16 %v710
        %v748 = vunpack.c.h.b16 %v710
        %v749 = vunpack.c.l.b16 %v711
        %v750 = vunpack.c.h.b16 %v711
        %v751 = vunpack.c.l.b16 %v712
        %v752 = vunpack.c.h.b16 %v712
        %v753 = vunpack.c.l.b16 %v713
        %v754 = vunpack.c.h.b16 %v713
        %v755 = vunpack.c.l.b16 %v714
        %v756 = vunpack.c.h.b16 %v714
        %v757 = vpack.c.b16 %v735, %v733
        %v758 = vpack.c.b16 %v736, %v734
        %v759 = vpack.c.b16 %v739, %v737
        %v760 = vpack.c.b16 %v740, %v738
        %v761 = vpack.c.b16 %v743, %v741
        %v762 = vpack.c.b16 %v744, %v742
        %v763 = vpack.c.b16 %v747, %v745
        %v764 = vpack.c.b16 %v748, %v746
        %v765 = vpack.c.b16 %v751, %v749
        %v766 = vpack.c.b16 %v752, %v750
        %v767 = vpack.c.b16 %v755, %v753
        %v768 = vpack.c.b16 %v756, %v754
        %v782 = vsel %vm525, %v720, 0
        %v785 = vsel %vm525, %v719, 0
        %787 = vmatprep.subr.bf16.mxu0 %v758
        %788 = vmatpush1.bf16.msra.mxu0 %v757
        %789 = vmatprep.subr.bf16.mxu0 %v760
        %790 = vmatpush1.bf16.msra.mxu0 %v759
        %791 = vmatprep.subr.bf16.mxu0 %v762
        %792 = vmatpush1.bf16.msra.mxu0 %v761
        %793 = vmatprep.subr.bf16.mxu0 %v764
        %794 = vmatpush1.bf16.msra.mxu0 %v763
        %795 = vmatprep.subr.bf16.mxu0 %v766
        %796 = vmatpush1.bf16.msra.mxu0 %v765
        %797 = vmatprep.subr.bf16.mxu0 %v768
        %798 = vmatpush1.bf16.msra.mxu0 %v767
        %799 = vmatprep.subr.bf16.mxu0 0
        %800 = vmatpush1.bf16.msra.mxu0 0
        %801 = vmatprep.subr.bf16.mxu0 0
        %802 = vmatpush1.bf16.msra.mxu0 0
        %803 = vmatprep.subr.bf16.mxu0 0
        %804 = vmatpush1.bf16.msra.mxu0 0
        %805 = vmatprep.subr.bf16.mxu0 0
        %806 = vmatpush1.bf16.msra.mxu0 0
        %807 = vmatprep.subr.bf16.mxu0 0
        %808 = vmatpush1.bf16.msra.mxu0 0
        %809 = vmatprep.subr.bf16.mxu0 0
        %810 = vmatpush1.bf16.msra.mxu0 0
        %811 = vmatprep.subr.bf16.mxu0 0
        %812 = vmatpush1.bf16.msra.mxu0 0
        %813 = vmatprep.subr.bf16.mxu0 0
        %814 = vmatpush1.bf16.msra.mxu0 0
        %815 = vmatprep.subr.bf16.mxu0 0
        %816 = vmatpush1.bf16.msra.mxu0 0
        %817 = vmatprep.subr.bf16.mxu0 0
        %818 = vmatpush1.bf16.msra.mxu0 0
        %819 = vmatprep.mubr.bf16.mxu0 0
        %820 = vmatmul.mubr.bf16.gmra.mrb[0].mxu0 %v782
        %v821 = vpop.f32.mrb[0].mxu0
        %v822 = vadd.f32 0.0, %v821
        %v823 = vpop.f32.mrb[0].mxu0
        %v824 = vadd.f32 0.0, %v823
        %v825 = vpop.f32.mrb[0].mxu0
        %v826 = vadd.f32 0.0, %v825
        %v827 = vpop.f32.mrb[0].mxu0
        %v828 = vadd.f32 0.0, %v827
        %829 = vmatprep.mubr.bf16.mxu0 0
        %830 = vmatmul.mubr.bf16.gmra.mrb[0].mxu0 %v785
        %v831 = vpop.f32.mrb[0].mxu0
        %v832 = vadd.f32 0.0, %v831
        %v833 = vpop.f32.mrb[0].mxu0
        %v834 = vadd.f32 0.0, %v833
        %v835 = vpop.f32.mrb[0].mxu0
        %v836 = vadd.f32 0.0, %v835
        %v837 = vpop.f32.mrb[0].mxu0
        %v838 = vadd.f32 0.0, %v837
        %839 = vdwg.mxu0
        %v840 = vadd.f32 %v684, %v822
        %v841 = vadd.f32 %v686, %v824
        %v842 = vadd.f32 %v688, %v826
        %v843 = vadd.f32 %v690, %v828
        %v844 = vadd.f32 %v694, %v832
        %v845 = vadd.f32 %v696, %v834
        %v846 = vadd.f32 %v698, %v836
        %v847 = vadd.f32 %v700, %v838
        %s848 = scalar_lea.vmem %s1, 288
        %v849 = vld [vmem:[%s848] sm:$0xff]
        %v850 = vld [vmem:[%s848 + $0x8] sm:$0xff]
        %v851 = vld [vmem:[%s848 + $0x10] sm:$0xff]
        %v852 = vld [vmem:[%s848 + $0x18] sm:$0xff]
        %v853 = vld [vmem:[%s848 + $0x20] sm:$0xff]
        %v854 = vld [vmem:[%s848 + $0x28] sm:$0xff]
        %v855 = vld [vmem:[%s848 + $0x30] sm:$0xff]
        %v856 = vld [vmem:[%s848 + $0x38] sm:$0xff]
        %v857 = vld [vmem:[%s848 + $0x40] sm:$0xff]
        %v858 = vld [vmem:[%s848 + $0x48] sm:$0xff]
        %v859 = vld [vmem:[%s848 + $0x50] sm:$0xff]
        %v860 = vld [vmem:[%s848 + $0x58] sm:$0xff]
        %vm861 = vsmask.f32 6400
        %v862 = vrot.slane %v451, 1
        %v863 = vrot.slane %v453, 2
        %v864 = vor.u32 %v862, %v863
        %v865 = vrot.slane %v462, 1
        %v866 = vrot.slane %v458, 2
        %v867 = vor.u32 %v865, %v866
        %v868 = vsel %vm861, %v864, %v867
        %v881 = vunpack.c.l.b16 %v849
        %v882 = vunpack.c.h.b16 %v849
        %v883 = vunpack.c.l.b16 %v850
        %v884 = vunpack.c.h.b16 %v850
        %v885 = vunpack.c.l.b16 %v851
        %v886 = vunpack.c.h.b16 %v851
        %v887 = vunpack.c.l.b16 %v852
        %v888 = vunpack.c.h.b16 %v852
        %v889 = vunpack.c.l.b16 %v853
        %v890 = vunpack.c.h.b16 %v853
        %v891 = vunpack.c.l.b16 %v854
        %v892 = vunpack.c.h.b16 %v854
        %v893 = vunpack.c.l.b16 %v855
        %v894 = vunpack.c.h.b16 %v855
        %v895 = vunpack.c.l.b16 %v856
        %v896 = vunpack.c.h.b16 %v856
        %v897 = vunpack.c.l.b16 %v857
        %v898 = vunpack.c.h.b16 %v857
        %v899 = vunpack.c.l.b16 %v858
        %v900 = vunpack.c.h.b16 %v858
        %v901 = vunpack.c.l.b16 %v859
        %v902 = vunpack.c.h.b16 %v859
        %v903 = vunpack.c.l.b16 %v860
        %v904 = vunpack.c.h.b16 %v860
        %v905 = vpack.c.b16 %v883, %v881
        %v906 = vpack.c.b16 %v884, %v882
        %v907 = vpack.c.b16 %v887, %v885
        %v908 = vpack.c.b16 %v888, %v886
        %v909 = vpack.c.b16 %v891, %v889
        %v910 = vpack.c.b16 %v892, %v890
        %v911 = vpack.c.b16 %v895, %v893
        %v912 = vpack.c.b16 %v896, %v894
        %v913 = vpack.c.b16 %v899, %v897
        %v914 = vpack.c.b16 %v900, %v898
        %v915 = vpack.c.b16 %v903, %v901
        %v916 = vpack.c.b16 %v904, %v902
        %v930 = vsel %vm525, %v868, 0
        %v933 = vsel %vm525, %v867, 0
        %935 = vmatprep.subr.bf16.mxu0 %v906
        %936 = vmatpush1.bf16.msra.mxu0 %v905
        %937 = vmatprep.subr.bf16.mxu0 %v908
        %938 = vmatpush1.bf16.msra.mxu0 %v907
        %939 = vmatprep.subr.bf16.mxu0 %v910
        %940 = vmatpush1.bf16.msra.mxu0 %v909
        %941 = vmatprep.subr.bf16.mxu0 %v912
        %942 = vmatpush1.bf16.msra.mxu0 %v911
        %943 = vmatprep.subr.bf16.mxu0 %v914
        %944 = vmatpush1.bf16.msra.mxu0 %v913
        %945 = vmatprep.subr.bf16.mxu0 %v916
        %946 = vmatpush1.bf16.msra.mxu0 %v915
        %947 = vmatprep.subr.bf16.mxu0 0
        %948 = vmatpush1.bf16.msra.mxu0 0
        %949 = vmatprep.subr.bf16.mxu0 0
        %950 = vmatpush1.bf16.msra.mxu0 0
        %951 = vmatprep.subr.bf16.mxu0 0
        %952 = vmatpush1.bf16.msra.mxu0 0
        %953 = vmatprep.subr.bf16.mxu0 0
        %954 = vmatpush1.bf16.msra.mxu0 0
        %955 = vmatprep.subr.bf16.mxu0 0
        %956 = vmatpush1.bf16.msra.mxu0 0
        %957 = vmatprep.subr.bf16.mxu0 0
        %958 = vmatpush1.bf16.msra.mxu0 0
        %959 = vmatprep.subr.bf16.mxu0 0
        %960 = vmatpush1.bf16.msra.mxu0 0
        %961 = vmatprep.subr.bf16.mxu0 0
        %962 = vmatpush1.bf16.msra.mxu0 0
        %963 = vmatprep.subr.bf16.mxu0 0
        %964 = vmatpush1.bf16.msra.mxu0 0
        %965 = vmatprep.subr.bf16.mxu0 0
        %966 = vmatpush1.bf16.msra.mxu0 0
        %967 = vmatprep.mubr.bf16.mxu0 0
        %968 = vmatmul.mubr.bf16.gmra.mrb[0].mxu0 %v930
        %v969 = vpop.f32.mrb[0].mxu0
        %v970 = vadd.f32 0.0, %v969
        %v971 = vpop.f32.mrb[0].mxu0
        %v972 = vadd.f32 0.0, %v971
        %v973 = vpop.f32.mrb[0].mxu0
        %v974 = vadd.f32 0.0, %v973
        %v975 = vpop.f32.mrb[0].mxu0
        %v976 = vadd.f32 0.0, %v975
        %977 = vmatprep.mubr.bf16.mxu0 0
        %978 = vmatmul.mubr.bf16.gmra.mrb[0].mxu0 %v933
        %v979 = vpop.f32.mrb[0].mxu0
        %v980 = vadd.f32 0.0, %v979
        %v981 = vpop.f32.mrb[0].mxu0
        %v982 = vadd.f32 0.0, %v981
        %v983 = vpop.f32.mrb[0].mxu0
        %v984 = vadd.f32 0.0, %v983
        %v985 = vpop.f32.mrb[0].mxu0
        %v986 = vadd.f32 0.0, %v985
        %987 = vdwg.mxu0
        %v988 = vadd.f32 %v840, %v970
        %v989 = vadd.f32 %v841, %v972
        %v990 = vadd.f32 %v842, %v974
        %v991 = vadd.f32 %v843, %v976
        %v992 = vadd.f32 %v844, %v980
        %v993 = vadd.f32 %v845, %v982
        %v994 = vadd.f32 %v846, %v984
        %v995 = vadd.f32 %v847, %v986
        %s996 = scalar_lea.vmem %s1, 384
        %v997 = vld [vmem:[%s996] sm:$0xff]
        %v998 = vld [vmem:[%s996 + $0x8] sm:$0xff]
        %v999 = vld [vmem:[%s996 + $0x10] sm:$0xff]
        %v1000 = vld [vmem:[%s996 + $0x18] sm:$0xff]
        %v1001 = vld [vmem:[%s996 + $0x20] sm:$0xff]
        %v1002 = vld [vmem:[%s996 + $0x28] sm:$0xff]
        %v1003 = vld [vmem:[%s996 + $0x30] sm:$0xff]
        %v1004 = vld [vmem:[%s996 + $0x38] sm:$0xff]
        %v1005 = vld [vmem:[%s996 + $0x40] sm:$0xff]
        %v1006 = vld [vmem:[%s996 + $0x48] sm:$0xff]
        %v1007 = vld [vmem:[%s996 + $0x50] sm:$0xff]
        %v1008 = vld [vmem:[%s996 + $0x58] sm:$0xff]
        %vm1009 = vcmask 1045504
        %v1010 = vrot.slane %v422, 2
        %v1011 = vrot.slane %v423, 2
        %v1012 = vsel %vm1009, %v1010, %v1011
        %v1025 = vunpack.c.l.b16 %v997
        %v1026 = vunpack.c.h.b16 %v997
        %v1027 = vunpack.c.l.b16 %v998
        %v1028 = vunpack.c.h.b16 %v998
        %v1029 = vunpack.c.l.b16 %v999
        %v1030 = vunpack.c.h.b16 %v999
        %v1031 = vunpack.c.l.b16 %v1000
        %v1032 = vunpack.c.h.b16 %v1000
        %v1033 = vunpack.c.l.b16 %v1001
        %v1034 = vunpack.c.h.b16 %v1001
        %v1035 = vunpack.c.l.b16 %v1002
        %v1036 = vunpack.c.h.b16 %v1002
        %v1037 = vunpack.c.l.b16 %v1003
        %v1038 = vunpack.c.h.b16 %v1003
        %v1039 = vunpack.c.l.b16 %v1004
        %v1040 = vunpack.c.h.b16 %v1004
        %v1041 = vunpack.c.l.b16 %v1005
        %v1042 = vunpack.c.h.b16 %v1005
        %v1043 = vunpack.c.l.b16 %v1006
        %v1044 = vunpack.c.h.b16 %v1006
        %v1045 = vunpack.c.l.b16 %v1007
        %v1046 = vunpack.c.h.b16 %v1007
        %v1047 = vunpack.c.l.b16 %v1008
        %v1048 = vunpack.c.h.b16 %v1008
        %v1049 = vpack.c.b16 %v1027, %v1025
        %v1050 = vpack.c.b16 %v1028, %v1026
        %v1051 = vpack.c.b16 %v1031, %v1029
        %v1052 = vpack.c.b16 %v1032, %v1030
        %v1053 = vpack.c.b16 %v1035, %v1033
        %v1054 = vpack.c.b16 %v1036, %v1034
        %v1055 = vpack.c.b16 %v1039, %v1037
        %v1056 = vpack.c.b16 %v1040, %v1038
        %v1057 = vpack.c.b16 %v1043, %v1041
        %v1058 = vpack.c.b16 %v1044, %v1042
        %v1059 = vpack.c.b16 %v1047, %v1045
        %v1060 = vpack.c.b16 %v1048, %v1046
        %v1074 = vsel %vm525, %v1012, 0
        %v1077 = vsel %vm525, %v1011, 0
        %1079 = vmatprep.subr.bf16.mxu0 %v1050
        %1080 = vmatpush1.bf16.msra.mxu0 %v1049
        %1081 = vmatprep.subr.bf16.mxu0 %v1052
        %1082 = vmatpush1.bf16.msra.mxu0 %v1051
        %1083 = vmatprep.subr.bf16.mxu0 %v1054
        %1084 = vmatpush1.bf16.msra.mxu0 %v1053
        %1085 = vmatprep.subr.bf16.mxu0 %v1056
        %1086 = vmatpush1.bf16.msra.mxu0 %v1055
        %1087 = vmatprep.subr.bf16.mxu0 %v1058
        %1088 = vmatpush1.bf16.msra.mxu0 %v1057
        %1089 = vmatprep.subr.bf16.mxu0 %v1060
        %1090 = vmatpush1.bf16.msra.mxu0 %v1059
        %1091 = vmatprep.subr.bf16.mxu0 0
        %1092 = vmatpush1.bf16.msra.mxu0 0
        %1093 = vmatprep.subr.bf16.mxu0 0
        %1094 = vmatpush1.bf16.msra.mxu0 0
        %1095 = vmatprep.subr.bf16.mxu0 0
        %1096 = vmatpush1.bf16.msra.mxu0 0
        %1097 = vmatprep.subr.bf16.mxu0 0
        %1098 = vmatpush1.bf16.msra.mxu0 0
        %1099 = vmatprep.subr.bf16.mxu0 0
        %1100 = vmatpush1.bf16.msra.mxu0 0
        %1101 = vmatprep.subr.bf16.mxu0 0
        %1102 = vmatpush1.bf16.msra.mxu0 0
        %1103 = vmatprep.subr.bf16.mxu0 0
        %1104 = vmatpush1.bf16.msra.mxu0 0
        %1105 = vmatprep.subr.bf16.mxu0 0
        %1106 = vmatpush1.bf16.msra.mxu0 0
        %1107 = vmatprep.subr.bf16.mxu0 0
        %1108 = vmatpush1.bf16.msra.mxu0 0
        %1109 = vmatprep.subr.bf16.mxu0 0
        %1110 = vmatpush1.bf16.msra.mxu0 0
        %1111 = vmatprep.mubr.bf16.mxu0 0
        %1112 = vmatmul.mubr.bf16.gmra.mrb[0].mxu0 %v1074
        %v1113 = vpop.f32.mrb[0].mxu0
        %v1114 = vadd.f32 0.0, %v1113
        %v1115 = vpop.f32.mrb[0].mxu0
        %v1116 = vadd.f32 0.0, %v1115
        %v1117 = vpop.f32.mrb[0].mxu0
        %v1118 = vadd.f32 0.0, %v1117
        %v1119 = vpop.f32.mrb[0].mxu0
        %v1120 = vadd.f32 0.0, %v1119
        %1121 = vmatprep.mubr.bf16.mxu0 0
        %1122 = vmatmul.mubr.bf16.gmra.mrb[0].mxu0 %v1077
        %v1123 = vpop.f32.mrb[0].mxu0
        %v1124 = vadd.f32 0.0, %v1123
        %v1125 = vpop.f32.mrb[0].mxu0
        %v1126 = vadd.f32 0.0, %v1125
        %v1127 = vpop.f32.mrb[0].mxu0
        %v1128 = vadd.f32 0.0, %v1127
        %v1129 = vpop.f32.mrb[0].mxu0
        %v1130 = vadd.f32 0.0, %v1129
        %1131 = vdwg.mxu0
        %v1132 = vadd.f32 %v988, %v1114
        %v1133 = vadd.f32 %v989, %v1116
        %v1134 = vadd.f32 %v990, %v1118
        %v1135 = vadd.f32 %v991, %v1120
        %v1136 = vadd.f32 %v992, %v1124
        %v1137 = vadd.f32 %v993, %v1126
        %v1138 = vadd.f32 %v994, %v1128
        %v1139 = vadd.f32 %v995, %v1130
        %v1140 = vld [vmem:[%s2] sm:$0x3]
        %v1142 = vlaneseq
        %v1143 = vshrl.u32 %v1142, 7
        %v1144 = vsub.s32 0, %v1143
        %v1145 = vrot.slane %v1140, %v1144
        %v1146 = vlaneseq
        %v1147 = vshrl.u32 %v1146, 7
        %v1148 = vsub.s32 1, %v1147
        %v1149 = vrot.slane %v1140, %v1148
        %v1152 = vadd.f32 %v1132, %v1145
        %v1153 = vadd.f32 %v1133, %v1149
        %v1154 = vadd.f32 %v1134, %v1145
        %v1155 = vadd.f32 %v1135, %v1149
        %v1156 = vadd.f32 %v1136, %v1145
        %v1157 = vadd.f32 %v1137, %v1149
        %v1158 = vadd.f32 %v1138, %v1145
        %v1159 = vadd.f32 %v1139, %v1149
        %v1160 = vmax.f32 %v1152, 0.0
        %v1161 = vmax.f32 %v1153, 0.0
        %v1162 = vmax.f32 %v1154, 0.0
        %v1163 = vmax.f32 %v1155, 0.0
        %v1164 = vmax.f32 %v1156, 0.0
        %v1165 = vmax.f32 %v1157, 0.0
        %v1166 = vmax.f32 %v1158, 0.0
        %v1167 = vmax.f32 %v1159, 0.0
        %v1168 = vpack.c.bf16 %v1162, %v1160
        %v1169 = vpack.c.bf16 %v1163, %v1161
        %v1170 = vpack.c.bf16 %v1164, %v1164
        %v1171 = vpack.c.bf16 %v1165, %v1165
        %v1172 = vld [vmem:[%s3] sm:$0xff]
        %v1173 = vld [vmem:[%s3 + $0x8] sm:$0xff]
        %v1174 = vld [vmem:[%s3 + $0x10] sm:$0xff]
        %v1175 = vld [vmem:[%s3 + $0x18] sm:$0xff]
        %v1176 = vld [vmem:[%s3 + $0x20] sm:$0xff]
        %v1177 = vld [vmem:[%s3 + $0x28] sm:$0xff]
        %v1178 = vld [vmem:[%s3 + $0x30] sm:$0xff]
        %v1179 = vld [vmem:[%s3 + $0x38] sm:$0xff]
        %v1180 = vld [vmem:[%s3 + $0x40] sm:$0xff]
        %v1181 = vld [vmem:[%s3 + $0x48] sm:$0xff]
        %v1182 = vld [vmem:[%s3 + $0x50] sm:$0xff]
        %v1183 = vld [vmem:[%s3 + $0x58] sm:$0xff]
        %v1184 = vld [vmem:[%s3 + $0x60] sm:$0xff]
        %v1185 = vld [vmem:[%s3 + $0x68] sm:$0xff]
        %v1186 = vld [vmem:[%s3 + $0x70] sm:$0xff]
        %v1187 = vld [vmem:[%s3 + $0x78] sm:$0xff]
        %v1188 = vld [vmem:[%s3 + $0x80] sm:$0xff]
        %v1189 = vld [vmem:[%s3 + $0x88] sm:$0xff]
        %v1190 = vld [vmem:[%s3 + $0x90] sm:$0xff]
        %v1191 = vld [vmem:[%s3 + $0x98] sm:$0xff]
        %v1192 = vld [vmem:[%s3 + $0xa0] sm:$0xff]
        %s1193 = scalar_lea.vmem %s3, 168
        %v1194 = vld [vmem:[%s1193] sm:$0xff]
        %v1195 = vld [vmem:[%s1193 + $0x8] sm:$0xff]
        %v1196 = vld [vmem:[%s1193 + $0x10] sm:$0xff]
        %v1197 = vld [vmem:[%s1193 + $0x18] sm:$0xff]
        %v1198 = vld [vmem:[%s1193 + $0x20] sm:$0xff]
        %v1199 = vld [vmem:[%s1193 + $0x28] sm:$0xff]
        %v1200 = vld [vmem:[%s1193 + $0x30] sm:$0xff]
        %v1201 = vld [vmem:[%s1193 + $0x38] sm:$0xff]
        %v1202 = vld [vmem:[%s1193 + $0x40] sm:$0xff]
        %v1203 = vld [vmem:[%s1193 + $0x48] sm:$0xff]
        %v1204 = vld [vmem:[%s1193 + $0x50] sm:$0xff]
        %v1205 = vld [vmem:[%s1193 + $0x58] sm:$0xff]
        %v1206 = vld [vmem:[%s1193 + $0x60] sm:$0xff]
        %v1207 = vld [vmem:[%s1193 + $0x68] sm:$0xff]
        %v1208 = vld [vmem:[%s1193 + $0x70] sm:$0xff]
        %v1209 = vld [vmem:[%s1193 + $0x78] sm:$0xff]
        %v1210 = vld [vmem:[%s1193 + $0x80] sm:$0xff]
        %v1211 = vld [vmem:[%s1193 + $0x88] sm:$0xff]
        %v1212 = vld [vmem:[%s1193 + $0x90] sm:$0xff]
        %v1213 = vld [vmem:[%s1193 + $0x98] sm:$0xff]
        %v1214 = vld [vmem:[%s1193 + $0xa0] sm:$0xff]
        %v1216 = vshrl.u32 %v1168, 16
        %v1218 = vshll.u32 %v1168, 16
        %v1220 = vrot.slane %v1218, 1
        %v1221 = vor.u32 %v1216, %v1220
        %v1223 = vshll.u32 %v1170, 16
        %v1225 = vrot.slane %v1223, 1
        %v1226 = vsel %vm449, %v1221, %v1225
        %v1228 = vshrl.u32 %v1169, 16
        %v1230 = vshll.u32 %v1169, 16
        %v1232 = vrot.slane %v1230, 1
        %v1233 = vor.u32 %v1228, %v1232
        %v1235 = vshll.u32 %v1171, 16
        %v1237 = vrot.slane %v1235, 1
        %v1238 = vsel %vm449, %v1233, %v1237
        %v1239 = vshrl.u32 %v1170, 16
        %v1241 = vor.u32 %v1239, %v1225
        %v1242 = vshrl.u32 %v1171, 16
        %v1244 = vor.u32 %v1242, %v1237
        %v1268 = vunpack.c.l.b16 %v1194
        %v1269 = vunpack.c.h.b16 %v1194
        %v1270 = vunpack.c.l.b16 %v1195
        %v1271 = vunpack.c.h.b16 %v1195
        %v1272 = vunpack.c.l.b16 %v1196
        %v1273 = vunpack.c.h.b16 %v1196
        %v1274 = vunpack.c.l.b16 %v1197
        %v1275 = vunpack.c.h.b16 %v1197
        %v1276 = vunpack.c.l.b16 %v1198
        %v1277 = vunpack.c.h.b16 %v1198
        %v1278 = vunpack.c.l.b16 %v1199
        %v1279 = vunpack.c.h.b16 %v1199
        %v1280 = vunpack.c.l.b16 %v1200
        %v1281 = vunpack.c.h.b16 %v1200
        %v1282 = vunpack.c.l.b16 %v1201
        %v1283 = vunpack.c.h.b16 %v1201
        %v1284 = vunpack.c.l.b16 %v1202
        %v1285 = vunpack.c.h.b16 %v1202
        %v1286 = vunpack.c.l.b16 %v1203
        %v1287 = vunpack.c.h.b16 %v1203
        %v1288 = vunpack.c.l.b16 %v1204
        %v1289 = vunpack.c.h.b16 %v1204
        %v1290 = vunpack.c.l.b16 %v1205
        %v1291 = vunpack.c.h.b16 %v1205
        %v1292 = vunpack.c.l.b16 %v1206
        %v1293 = vunpack.c.h.b16 %v1206
        %v1294 = vunpack.c.l.b16 %v1207
        %v1295 = vunpack.c.h.b16 %v1207
        %v1296 = vunpack.c.l.b16 %v1208
        %v1297 = vunpack.c.h.b16 %v1208
        %v1298 = vunpack.c.l.b16 %v1209
        %v1299 = vunpack.c.h.b16 %v1209
        %v1300 = vunpack.c.l.b16 %v1210
        %v1301 = vunpack.c.h.b16 %v1210
        %v1302 = vunpack.c.l.b16 %v1211
        %v1303 = vunpack.c.h.b16 %v1211
        %v1304 = vunpack.c.l.b16 %v1212
        %v1305 = vunpack.c.h.b16 %v1212
        %v1306 = vunpack.c.l.b16 %v1213
        %v1307 = vunpack.c.h.b16 %v1213
        %v1308 = vunpack.c.l.b16 %v1214
        %v1309 = vunpack.c.h.b16 %v1214
        %v1310 = vpack.c.b16 %v1270, %v1268
        %v1311 = vpack.c.b16 %v1271, %v1269
        %v1312 = vpack.c.b16 %v1274, %v1272
        %v1313 = vpack.c.b16 %v1275, %v1273
        %v1314 = vpack.c.b16 %v1278, %v1276
        %v1315 = vpack.c.b16 %v1279, %v1277
        %v1316 = vpack.c.b16 %v1282, %v1280
        %v1317 = vpack.c.b16 %v1283, %v1281
        %v1318 = vpack.c.b16 %v1286, %v1284
        %v1319 = vpack.c.b16 %v1287, %v1285
        %v1320 = vpack.c.b16 %v1290, %v1288
        %v1321 = vpack.c.b16 %v1291, %v1289
        %v1322 = vpack.c.b16 %v1294, %v1292
        %v1323 = vpack.c.b16 %v1295, %v1293
        %v1324 = vpack.c.b16 %v1298, %v1296
        %v1325 = vpack.c.b16 %v1299, %v1297
        %v1326 = vpack.c.b16 %v1302, %v1300
        %v1327 = vpack.c.b16 %v1303, %v1301
        %v1328 = vpack.c.b16 %v1306, %v1304
        %v1329 = vpack.c.b16 %v1307, %v1305
        %v1330 = vpack.c.b16 %v1308, %v1308
        %v1331 = vpack.c.b16 %v1309, %v1309
        %vm1352 = vcmask 326656
        %v1354 = vsel %vm1352, %v1238, 0
        %v1357 = vsel %vm1352, %v1244, 0
        %vm1359 = vcmask 1043456
        %v1361 = vsel %vm1359, %v1330, 0
        %v1364 = vsel %vm1359, %v1331, 0
        %1366 = vmatprep.subr.bf16.mxu0 %v1311
        %1367 = vmatpush1.bf16.msra.mxu0 %v1310
        %1368 = vmatprep.subr.bf16.mxu0 %v1313
        %1369 = vmatpush1.bf16.msra.mxu0 %v1312
        %1370 = vmatprep.subr.bf16.mxu0 %v1315
        %1371 = vmatpush1.bf16.msra.mxu0 %v1314
        %1372 = vmatprep.subr.bf16.mxu0 %v1317
        %1373 = vmatpush1.bf16.msra.mxu0 %v1316
        %1374 = vmatprep.subr.bf16.mxu0 %v1319
        %1375 = vmatpush1.bf16.msra.mxu0 %v1318
        %1376 = vmatprep.subr.bf16.mxu0 %v1321
        %1377 = vmatpush1.bf16.msra.mxu0 %v1320
        %1378 = vmatprep.subr.bf16.mxu0 %v1323
        %1379 = vmatpush1.bf16.msra.mxu0 %v1322
        %1380 = vmatprep.subr.bf16.mxu0 %v1325
        %1381 = vmatpush1.bf16.msra.mxu0 %v1324
        %1382 = vmatprep.subr.bf16.mxu0 %v1327
        %1383 = vmatpush1.bf16.msra.mxu0 %v1326
        %1384 = vmatprep.subr.bf16.mxu0 %v1329
        %1385 = vmatpush1.bf16.msra.mxu0 %v1328
        %1386 = vmatprep.subr.bf16.mxu0 %v1364
        %1387 = vmatpush1.bf16.msra.mxu0 %v1361
        %1388 = vmatprep.subr.bf16.mxu0 0
        %1389 = vmatpush1.bf16.msra.mxu0 0
        %1390 = vmatprep.subr.bf16.mxu0 0
        %1391 = vmatpush1.bf16.msra.mxu0 0
        %1392 = vmatprep.subr.bf16.mxu0 0
        %1393 = vmatpush1.bf16.msra.mxu0 0
        %1394 = vmatprep.subr.bf16.mxu0 0
        %1395 = vmatpush1.bf16.msra.mxu0 0
        %1396 = vmatprep.subr.bf16.mxu0 0
        %1397 = vmatpush1.bf16.msra.mxu0 0
        %1398 = vmatprep.mubr.bf16.mxu0 %v1354
        %1399 = vmatmul.mubr.bf16.gmra.mrb[0].mxu0 %v1226
        %v1400 = vpop.f32.mrb[0].mxu0
        %v1401 = vadd.f32 0.0, %v1400
        %v1402 = vpop.f32.mrb[0].mxu0
        %v1403 = vadd.f32 0.0, %v1402
        %v1404 = vpop.f32.mrb[0].mxu0
        %v1405 = vadd.f32 0.0, %v1404
        %v1406 = vpop.f32.mrb[0].mxu0
        %v1407 = vadd.f32 0.0, %v1406
        %1408 = vmatprep.mubr.bf16.mxu0 %v1357
        %1409 = vmatmul.mubr.bf16.gmra.mrb[0].mxu0 %v1241
        %v1410 = vpop.f32.mrb[0].mxu0
        %v1411 = vadd.f32 0.0, %v1410
        %v1412 = vpop.f32.mrb[0].mxu0
        %v1413 = vadd.f32 0.0, %v1412
        %v1414 = vpop.f32.mrb[0].mxu0
        %v1415 = vpop.f32.mrb[0].mxu0
        %1416 = vdwg.mxu0
        %v1438 = vunpack.c.l.b16 %v1172
        %v1439 = vunpack.c.h.b16 %v1172
        %v1440 = vunpack.c.l.b16 %v1173
        %v1441 = vunpack.c.h.b16 %v1173
        %v1442 = vunpack.c.l.b16 %v1174
        %v1443 = vunpack.c.h.b16 %v1174
        %v1444 = vunpack.c.l.b16 %v1175
        %v1445 = vunpack.c.h.b16 %v1175
        %v1446 = vunpack.c.l.b16 %v1176
        %v1447 = vunpack.c.h.b16 %v1176
        %v1448 = vunpack.c.l.b16 %v1177
        %v1449 = vunpack.c.h.b16 %v1177
        %v1450 = vunpack.c.l.b16 %v1178
        %v1451 = vunpack.c.h.b16 %v1178
        %v1452 = vunpack.c.l.b16 %v1179
        %v1453 = vunpack.c.h.b16 %v1179
        %v1454 = vunpack.c.l.b16 %v1180
        %v1455 = vunpack.c.h.b16 %v1180
        %v1456 = vunpack.c.l.b16 %v1181
        %v1457 = vunpack.c.h.b16 %v1181
        %v1458 = vunpack.c.l.b16 %v1182
        %v1459 = vunpack.c.h.b16 %v1182
        %v1460 = vunpack.c.l.b16 %v1183
        %v1461 = vunpack.c.h.b16 %v1183
        %v1462 = vunpack.c.l.b16 %v1184
        %v1463 = vunpack.c.h.b16 %v1184
        %v1464 = vunpack.c.l.b16 %v1185
        %v1465 = vunpack.c.h.b16 %v1185
        %v1466 = vunpack.c.l.b16 %v1186
        %v1467 = vunpack.c.h.b16 %v1186
        %v1468 = vunpack.c.l.b16 %v1187
        %v1469 = vunpack.c.h.b16 %v1187
        %v1470 = vunpack.c.l.b16 %v1188
        %v1471 = vunpack.c.h.b16 %v1188
        %v1472 = vunpack.c.l.b16 %v1189
        %v1473 = vunpack.c.h.b16 %v1189
        %v1474 = vunpack.c.l.b16 %v1190
        %v1475 = vunpack.c.h.b16 %v1190
        %v1476 = vunpack.c.l.b16 %v1191
        %v1477 = vunpack.c.h.b16 %v1191
        %v1478 = vunpack.c.l.b16 %v1192
        %v1479 = vunpack.c.h.b16 %v1192
        %v1480 = vpack.c.b16 %v1440, %v1438
        %v1481 = vpack.c.b16 %v1441, %v1439
        %v1482 = vpack.c.b16 %v1444, %v1442
        %v1483 = vpack.c.b16 %v1445, %v1443
        %v1484 = vpack.c.b16 %v1448, %v1446
        %v1485 = vpack.c.b16 %v1449, %v1447
        %v1486 = vpack.c.b16 %v1452, %v1450
        %v1487 = vpack.c.b16 %v1453, %v1451
        %v1488 = vpack.c.b16 %v1456, %v1454
        %v1489 = vpack.c.b16 %v1457, %v1455
        %v1490 = vpack.c.b16 %v1460, %v1458
        %v1491 = vpack.c.b16 %v1461, %v1459
        %v1492 = vpack.c.b16 %v1464, %v1462
        %v1493 = vpack.c.b16 %v1465, %v1463
        %v1494 = vpack.c.b16 %v1468, %v1466
        %v1495 = vpack.c.b16 %v1469, %v1467
        %v1496 = vpack.c.b16 %v1472, %v1470
        %v1497 = vpack.c.b16 %v1473, %v1471
        %v1498 = vpack.c.b16 %v1476, %v1474
        %v1499 = vpack.c.b16 %v1477, %v1475
        %v1500 = vpack.c.b16 %v1478, %v1478
        %v1501 = vpack.c.b16 %v1479, %v1479
        %v1522 = vsel %vm1352, %v1169, 0
        %v1524 = vsel %vm1352, %v1171, 0
        %v1527 = vsel %vm1359, %v1500, 0
        %v1530 = vsel %vm1359, %v1501, 0
        %1532 = vmatprep.subr.bf16.mxu0 %v1481
        %1533 = vmatpush1.bf16.msra.mxu0 %v1480
        %1534 = vmatprep.subr.bf16.mxu0 %v1483
        %1535 = vmatpush1.bf16.msra.mxu0 %v1482
        %1536 = vmatprep.subr.bf16.mxu0 %v1485
        %1537 = vmatpush1.bf16.msra.mxu0 %v1484
        %1538 = vmatprep.subr.bf16.mxu0 %v1487
        %1539 = vmatpush1.bf16.msra.mxu0 %v1486
        %1540 = vmatprep.subr.bf16.mxu0 %v1489
        %1541 = vmatpush1.bf16.msra.mxu0 %v1488
        %1542 = vmatprep.subr.bf16.mxu0 %v1491
        %1543 = vmatpush1.bf16.msra.mxu0 %v1490
        %1544 = vmatprep.subr.bf16.mxu0 %v1493
        %1545 = vmatpush1.bf16.msra.mxu0 %v1492
        %1546 = vmatprep.subr.bf16.mxu0 %v1495
        %1547 = vmatpush1.bf16.msra.mxu0 %v1494
        %1548 = vmatprep.subr.bf16.mxu0 %v1497
        %1549 = vmatpush1.bf16.msra.mxu0 %v1496
        %1550 = vmatprep.subr.bf16.mxu0 %v1499
        %1551 = vmatpush1.bf16.msra.mxu0 %v1498
        %1552 = vmatprep.subr.bf16.mxu0 %v1530
        %1553 = vmatpush1.bf16.msra.mxu0 %v1527
        %1554 = vmatprep.subr.bf16.mxu0 0
        %1555 = vmatpush1.bf16.msra.mxu0 0
        %1556 = vmatprep.subr.bf16.mxu0 0
        %1557 = vmatpush1.bf16.msra.mxu0 0
        %1558 = vmatprep.subr.bf16.mxu0 0
        %1559 = vmatpush1.bf16.msra.mxu0 0
        %1560 = vmatprep.subr.bf16.mxu0 0
        %1561 = vmatpush1.bf16.msra.mxu0 0
        %1562 = vmatprep.subr.bf16.mxu0 0
        %1563 = vmatpush1.bf16.msra.mxu0 0
        %1564 = vmatprep.mubr.bf16.mxu0 %v1522
        %1565 = vmatmul.mubr.bf16.gmra.mrb[0].mxu0 %v1168
        %v1566 = vpop.f32.mrb[0].mxu0
        %v1567 = vadd.f32 %v1401, %v1566
        %v1568 = vpop.f32.mrb[0].mxu0
        %v1569 = vadd.f32 %v1403, %v1568
        %v1570 = vpop.f32.mrb[0].mxu0
        %v1571 = vadd.f32 %v1405, %v1570
        %v1572 = vpop.f32.mrb[0].mxu0
        %v1573 = vadd.f32 %v1407, %v1572
        %1574 = vmatprep.mubr.bf16.mxu0 %v1524
        %1575 = vmatmul.mubr.bf16.gmra.mrb[0].mxu0 %v1170
        %v1576 = vpop.f32.mrb[0].mxu0
        %v1577 = vadd.f32 %v1411, %v1576
        %v1578 = vpop.f32.mrb[0].mxu0
        %v1579 = vadd.f32 %v1413, %v1578
        %v1580 = vpop.f32.mrb[0].mxu0
        %v1581 = vpop.f32.mrb[0].mxu0
        %1582 = vdwg.mxu0
        %s1583 = scalar_lea.vmem %s3, 336
        %v1584 = vld [vmem:[%s1583] sm:$0xff]
        %v1585 = vld [vmem:[%s1583 + $0x8] sm:$0xff]
        %v1586 = vld [vmem:[%s1583 + $0x10] sm:$0xff]
        %v1587 = vld [vmem:[%s1583 + $0x18] sm:$0xff]
        %v1588 = vld [vmem:[%s1583 + $0x20] sm:$0xff]
        %v1589 = vld [vmem:[%s1583 + $0x28] sm:$0xff]
        %v1590 = vld [vmem:[%s1583 + $0x30] sm:$0xff]
        %v1591 = vld [vmem:[%s1583 + $0x38] sm:$0xff]
        %v1592 = vld [vmem:[%s1583 + $0x40] sm:$0xff]
        %v1593 = vld [vmem:[%s1583 + $0x48] sm:$0xff]
        %v1594 = vld [vmem:[%s1583 + $0x50] sm:$0xff]
        %v1595 = vld [vmem:[%s1583 + $0x58] sm:$0xff]
        %v1596 = vld [vmem:[%s1583 + $0x60] sm:$0xff]
        %v1597 = vld [vmem:[%s1583 + $0x68] sm:$0xff]
        %v1598 = vld [vmem:[%s1583 + $0x70] sm:$0xff]
        %v1599 = vld [vmem:[%s1583 + $0x78] sm:$0xff]
        %v1600 = vld [vmem:[%s1583 + $0x80] sm:$0xff]
        %v1601 = vld [vmem:[%s1583 + $0x88] sm:$0xff]
        %v1602 = vld [vmem:[%s1583 + $0x90] sm:$0xff]
        %v1603 = vld [vmem:[%s1583 + $0x98] sm:$0xff]
        %v1604 = vld [vmem:[%s1583 + $0xa0] sm:$0xff]
        %v1609 = vrot.slane %v1168, 1
        %v1610 = vrot.slane %v1170, 1
        %v1611 = vsel %vm717, %v1609, %v1610
        %v1612 = vrot.slane %v1169, 1
        %v1613 = vrot.slane %v1171, 1
        %v1614 = vsel %vm717, %v1612, %v1613
        %v1638 = vunpack.c.l.b16 %v1584
        %v1639 = vunpack.c.h.b16 %v1584
        %v1640 = vunpack.c.l.b16 %v1585
        %v1641 = vunpack.c.h.b16 %v1585
        %v1642 = vunpack.c.l.b16 %v1586
        %v1643 = vunpack.c.h.b16 %v1586
        %v1644 = vunpack.c.l.b16 %v1587
        %v1645 = vunpack.c.h.b16 %v1587
        %v1646 = vunpack.c.l.b16 %v1588
        %v1647 = vunpack.c.h.b16 %v1588
        %v1648 = vunpack.c.l.b16 %v1589
        %v1649 = vunpack.c.h.b16 %v1589
        %v1650 = vunpack.c.l.b16 %v1590
        %v1651 = vunpack.c.h.b16 %v1590
        %v1652 = vunpack.c.l.b16 %v1591
        %v1653 = vunpack.c.h.b16 %v1591
        %v1654 = vunpack.c.l.b16 %v1592
        %v1655 = vunpack.c.h.b16 %v1592
        %v1656 = vunpack.c.l.b16 %v1593
        %v1657 = vunpack.c.h.b16 %v1593
        %v1658 = vunpack.c.l.b16 %v1594
        %v1659 = vunpack.c.h.b16 %v1594
        %v1660 = vunpack.c.l.b16 %v1595
        %v1661 = vunpack.c.h.b16 %v1595
        %v1662 = vunpack.c.l.b16 %v1596
        %v1663 = vunpack.c.h.b16 %v1596
        %v1664 = vunpack.c.l.b16 %v1597
        %v1665 = vunpack.c.h.b16 %v1597
        %v1666 = vunpack.c.l.b16 %v1598
        %v1667 = vunpack.c.h.b16 %v1598
        %v1668 = vunpack.c.l.b16 %v1599
        %v1669 = vunpack.c.h.b16 %v1599
        %v1670 = vunpack.c.l.b16 %v1600
        %v1671 = vunpack.c.h.b16 %v1600
        %v1672 = vunpack.c.l.b16 %v1601
        %v1673 = vunpack.c.h.b16 %v1601
        %v1674 = vunpack.c.l.b16 %v1602
        %v1675 = vunpack.c.h.b16 %v1602
        %v1676 = vunpack.c.l.b16 %v1603
        %v1677 = vunpack.c.h.b16 %v1603
        %v1678 = vunpack.c.l.b16 %v1604
        %v1679 = vunpack.c.h.b16 %v1604
        %v1680 = vpack.c.b16 %v1640, %v1638
        %v1681 = vpack.c.b16 %v1641, %v1639
        %v1682 = vpack.c.b16 %v1644, %v1642
        %v1683 = vpack.c.b16 %v1645, %v1643
        %v1684 = vpack.c.b16 %v1648, %v1646
        %v1685 = vpack.c.b16 %v1649, %v1647
        %v1686 = vpack.c.b16 %v1652, %v1650
        %v1687 = vpack.c.b16 %v1653, %v1651
        %v1688 = vpack.c.b16 %v1656, %v1654
        %v1689 = vpack.c.b16 %v1657, %v1655
        %v1690 = vpack.c.b16 %v1660, %v1658
        %v1691 = vpack.c.b16 %v1661, %v1659
        %v1692 = vpack.c.b16 %v1664, %v1662
        %v1693 = vpack.c.b16 %v1665, %v1663
        %v1694 = vpack.c.b16 %v1668, %v1666
        %v1695 = vpack.c.b16 %v1669, %v1667
        %v1696 = vpack.c.b16 %v1672, %v1670
        %v1697 = vpack.c.b16 %v1673, %v1671
        %v1698 = vpack.c.b16 %v1676, %v1674
        %v1699 = vpack.c.b16 %v1677, %v1675
        %v1700 = vpack.c.b16 %v1678, %v1678
        %v1701 = vpack.c.b16 %v1679, %v1679
        %v1723 = vsel %vm1352, %v1614, 0
        %v1726 = vsel %vm1352, %v1613, 0
        %v1729 = vsel %vm1359, %v1700, 0
        %v1732 = vsel %vm1359, %v1701, 0
        %1734 = vmatprep.subr.bf16.mxu0 %v1681
        %1735 = vmatpush1.bf16.msra.mxu0 %v1680
        %1736 = vmatprep.subr.bf16.mxu0 %v1683
        %1737 = vmatpush1.bf16.msra.mxu0 %v1682
        %1738 = vmatprep.subr.bf16.mxu0 %v1685
        %1739 = vmatpush1.bf16.msra.mxu0 %v1684
        %1740 = vmatprep.subr.bf16.mxu0 %v1687
        %1741 = vmatpush1.bf16.msra.mxu0 %v1686
        %1742 = vmatprep.subr.bf16.mxu0 %v1689
        %1743 = vmatpush1.bf16.msra.mxu0 %v1688
        %1744 = vmatprep.subr.bf16.mxu0 %v1691
        %1745 = vmatpush1.bf16.msra.mxu0 %v1690
        %1746 = vmatprep.subr.bf16.mxu0 %v1693
        %1747 = vmatpush1.bf16.msra.mxu0 %v1692
        %1748 = vmatprep.subr.bf16.mxu0 %v1695
        %1749 = vmatpush1.bf16.msra.mxu0 %v1694
        %1750 = vmatprep.subr.bf16.mxu0 %v1697
        %1751 = vmatpush1.bf16.msra.mxu0 %v1696
        %1752 = vmatprep.subr.bf16.mxu0 %v1699
        %1753 = vmatpush1.bf16.msra.mxu0 %v1698
        %1754 = vmatprep.subr.bf16.mxu0 %v1732
        %1755 = vmatpush1.bf16.msra.mxu0 %v1729
        %1756 = vmatprep.subr.bf16.mxu0 0
        %1757 = vmatpush1.bf16.msra.mxu0 0
        %1758 = vmatprep.subr.bf16.mxu0 0
        %1759 = vmatpush1.bf16.msra.mxu0 0
        %1760 = vmatprep.subr.bf16.mxu0 0
        %1761 = vmatpush1.bf16.msra.mxu0 0
        %1762 = vmatprep.subr.bf16.mxu0 0
        %1763 = vmatpush1.bf16.msra.mxu0 0
        %1764 = vmatprep.subr.bf16.mxu0 0
        %1765 = vmatpush1.bf16.msra.mxu0 0
        %1766 = vmatprep.mubr.bf16.mxu0 %v1723
        %1767 = vmatmul.mubr.bf16.gmra.mrb[0].mxu0 %v1611
        %v1768 = vpop.f32.mrb[0].mxu0
        %v1769 = vadd.f32 0.0, %v1768
        %v1770 = vpop.f32.mrb[0].mxu0
        %v1771 = vadd.f32 0.0, %v1770
        %v1772 = vpop.f32.mrb[0].mxu0
        %v1773 = vadd.f32 0.0, %v1772
        %v1774 = vpop.f32.mrb[0].mxu0
        %v1775 = vadd.f32 0.0, %v1774
        %1776 = vmatprep.mubr.bf16.mxu0 %v1726
        %1777 = vmatmul.mubr.bf16.gmra.mrb[0].mxu0 %v1610
        %v1778 = vpop.f32.mrb[0].mxu0
        %v1779 = vadd.f32 0.0, %v1778
        %v1780 = vpop.f32.mrb[0].mxu0
        %v1781 = vadd.f32 0.0, %v1780
        %v1782 = vpop.f32.mrb[0].mxu0
        %v1783 = vpop.f32.mrb[0].mxu0
        %1784 = vdwg.mxu0
        %v1785 = vadd.f32 %v1567, %v1769
        %v1786 = vadd.f32 %v1569, %v1771
        %v1787 = vadd.f32 %v1571, %v1773
        %v1788 = vadd.f32 %v1573, %v1775
        %v1789 = vadd.f32 %v1577, %v1779
        %v1790 = vadd.f32 %v1579, %v1781
        %s1791 = scalar_lea.vmem %s3, 504
        %v1792 = vld [vmem:[%s1791] sm:$0xff]
        %v1793 = vld [vmem:[%s1791 + $0x8] sm:$0xff]
        %v1794 = vld [vmem:[%s1791 + $0x10] sm:$0xff]
        %v1795 = vld [vmem:[%s1791 + $0x18] sm:$0xff]
        %v1796 = vld [vmem:[%s1791 + $0x20] sm:$0xff]
        %v1797 = vld [vmem:[%s1791 + $0x28] sm:$0xff]
        %v1798 = vld [vmem:[%s1791 + $0x30] sm:$0xff]
        %v1799 = vld [vmem:[%s1791 + $0x38] sm:$0xff]
        %v1800 = vld [vmem:[%s1791 + $0x40] sm:$0xff]
        %v1801 = vld [vmem:[%s1791 + $0x48] sm:$0xff]
        %v1802 = vld [vmem:[%s1791 + $0x50] sm:$0xff]
        %v1803 = vld [vmem:[%s1791 + $0x58] sm:$0xff]
        %v1804 = vld [vmem:[%s1791 + $0x60] sm:$0xff]
        %v1805 = vld [vmem:[%s1791 + $0x68] sm:$0xff]
        %v1806 = vld [vmem:[%s1791 + $0x70] sm:$0xff]
        %v1807 = vld [vmem:[%s1791 + $0x78] sm:$0xff]
        %v1808 = vld [vmem:[%s1791 + $0x80] sm:$0xff]
        %v1809 = vld [vmem:[%s1791 + $0x88] sm:$0xff]
        %v1810 = vld [vmem:[%s1791 + $0x90] sm:$0xff]
        %v1811 = vld [vmem:[%s1791 + $0x98] sm:$0xff]
        %v1812 = vld [vmem:[%s1791 + $0xa0] sm:$0xff]
        %v1813 = vrot.slane %v1216, 1
        %v1814 = vrot.slane %v1218, 2
        %v1815 = vor.u32 %v1813, %v1814
        %v1816 = vrot.slane %v1239, 1
        %v1817 = vrot.slane %v1223, 2
        %v1818 = vor.u32 %v1816, %v1817
        %v1819 = vsel %vm861, %v1815, %v1818
        %v1820 = vrot.slane %v1228, 1
        %v1821 = vrot.slane %v1230, 2
        %v1822 = vor.u32 %v1820, %v1821
        %v1823 = vrot.slane %v1242, 1
        %v1824 = vrot.slane %v1235, 2
        %v1825 = vor.u32 %v1823, %v1824
        %v1826 = vsel %vm861, %v1822, %v1825
        %v1850 = vunpack.c.l.b16 %v1792
        %v1851 = vunpack.c.h.b16 %v1792
        %v1852 = vunpack.c.l.b16 %v1793
        %v1853 = vunpack.c.h.b16 %v1793
        %v1854 = vunpack.c.l.b16 %v1794
        %v1855 = vunpack.c.h.b16 %v1794
        %v1856 = vunpack.c.l.b16 %v1795
        %v1857 = vunpack.c.h.b16 %v1795
        %v1858 = vunpack.c.l.b16 %v1796
        %v1859 = vunpack.c.h.b16 %v1796
        %v1860 = vunpack.c.l.b16 %v1797
        %v1861 = vunpack.c.h.b16 %v1797
        %v1862 = vunpack.c.l.b16 %v1798
        %v1863 = vunpack.c.h.b16 %v1798
        %v1864 = vunpack.c.l.b16 %v1799
        %v1865 = vunpack.c.h.b16 %v1799
        %v1866 = vunpack.c.l.b16 %v1800
        %v1867 = vunpack.c.h.b16 %v1800
        %v1868 = vunpack.c.l.b16 %v1801
        %v1869 = vunpack.c.h.b16 %v1801
        %v1870 = vunpack.c.l.b16 %v1802
        %v1871 = vunpack.c.h.b16 %v1802
        %v1872 = vunpack.c.l.b16 %v1803
        %v1873 = vunpack.c.h.b16 %v1803
        %v1874 = vunpack.c.l.b16 %v1804
        %v1875 = vunpack.c.h.b16 %v1804
        %v1876 = vunpack.c.l.b16 %v1805
        %v1877 = vunpack.c.h.b16 %v1805
        %v1878 = vunpack.c.l.b16 %v1806
        %v1879 = vunpack.c.h.b16 %v1806
        %v1880 = vunpack.c.l.b16 %v1807
        %v1881 = vunpack.c.h.b16 %v1807
        %v1882 = vunpack.c.l.b16 %v1808
        %v1883 = vunpack.c.h.b16 %v1808
        %v1884 = vunpack.c.l.b16 %v1809
        %v1885 = vunpack.c.h.b16 %v1809
        %v1886 = vunpack.c.l.b16 %v1810
        %v1887 = vunpack.c.h.b16 %v1810
        %v1888 = vunpack.c.l.b16 %v1811
        %v1889 = vunpack.c.h.b16 %v1811
        %v1890 = vunpack.c.l.b16 %v1812
        %v1891 = vunpack.c.h.b16 %v1812
        %v1892 = vpack.c.b16 %v1852, %v1850
        %v1893 = vpack.c.b16 %v1853, %v1851
        %v1894 = vpack.c.b16 %v1856, %v1854
        %v1895 = vpack.c.b16 %v1857, %v1855
        %v1896 = vpack.c.b16 %v1860, %v1858
        %v1897 = vpack.c.b16 %v1861, %v1859
        %v1898 = vpack.c.b16 %v1864, %v1862
        %v1899 = vpack.c.b16 %v1865, %v1863
        %v1900 = vpack.c.b16 %v1868, %v1866
        %v1901 = vpack.c.b16 %v1869, %v1867
        %v1902 = vpack.c.b16 %v1872, %v1870
        %v1903 = vpack.c.b16 %v1873, %v1871
        %v1904 = vpack.c.b16 %v1876, %v1874
        %v1905 = vpack.c.b16 %v1877, %v1875
        %v1906 = vpack.c.b16 %v1880, %v1878
        %v1907 = vpack.c.b16 %v1881, %v1879
        %v1908 = vpack.c.b16 %v1884, %v1882
        %v1909 = vpack.c.b16 %v1885, %v1883
        %v1910 = vpack.c.b16 %v1888, %v1886
        %v1911 = vpack.c.b16 %v1889, %v1887
        %v1912 = vpack.c.b16 %v1890, %v1890
        %v1913 = vpack.c.b16 %v1891, %v1891
        %v1935 = vsel %vm1352, %v1826, 0
        %v1938 = vsel %vm1352, %v1825, 0
        %v1941 = vsel %vm1359, %v1912, 0
        %v1944 = vsel %vm1359, %v1913, 0
        %1946 = vmatprep.subr.bf16.mxu0 %v1893
        %1947 = vmatpush1.bf16.msra.mxu0 %v1892
        %1948 = vmatprep.subr.bf16.mxu0 %v1895
        %1949 = vmatpush1.bf16.msra.mxu0 %v1894
        %1950 = vmatprep.subr.bf16.mxu0 %v1897
        %1951 = vmatpush1.bf16.msra.mxu0 %v1896
        %1952 = vmatprep.subr.bf16.mxu0 %v1899
        %1953 = vmatpush1.bf16.msra.mxu0 %v1898
        %1954 = vmatprep.subr.bf16.mxu0 %v1901
        %1955 = vmatpush1.bf16.msra.mxu0 %v1900
        %1956 = vmatprep.subr.bf16.mxu0 %v1903
        %1957 = vmatpush1.bf16.msra.mxu0 %v1902
        %1958 = vmatprep.subr.bf16.mxu0 %v1905
        %1959 = vmatpush1.bf16.msra.mxu0 %v1904
        %1960 = vmatprep.subr.bf16.mxu0 %v1907
        %1961 = vmatpush1.bf16.msra.mxu0 %v1906
        %1962 = vmatprep.subr.bf16.mxu0 %v1909
        %1963 = vmatpush1.bf16.msra.mxu0 %v1908
        %1964 = vmatprep.subr.bf16.mxu0 %v1911
        %1965 = vmatpush1.bf16.msra.mxu0 %v1910
        %1966 = vmatprep.subr.bf16.mxu0 %v1944
        %1967 = vmatpush1.bf16.msra.mxu0 %v1941
        %1968 = vmatprep.subr.bf16.mxu0 0
        %1969 = vmatpush1.bf16.msra.mxu0 0
        %1970 = vmatprep.subr.bf16.mxu0 0
        %1971 = vmatpush1.bf16.msra.mxu0 0
        %1972 = vmatprep.subr.bf16.mxu0 0
        %1973 = vmatpush1.bf16.msra.mxu0 0
        %1974 = vmatprep.subr.bf16.mxu0 0
        %1975 = vmatpush1.bf16.msra.mxu0 0
        %1976 = vmatprep.subr.bf16.mxu0 0
        %1977 = vmatpush1.bf16.msra.mxu0 0
        %1978 = vmatprep.mubr.bf16.mxu0 %v1935
        %1979 = vmatmul.mubr.bf16.gmra.mrb[0].mxu0 %v1819
        %v1980 = vpop.f32.mrb[0].mxu0
        %v1981 = vadd.f32 0.0, %v1980
        %v1982 = vpop.f32.mrb[0].mxu0
        %v1983 = vadd.f32 0.0, %v1982
        %v1984 = vpop.f32.mrb[0].mxu0
        %v1985 = vadd.f32 0.0, %v1984
        %v1986 = vpop.f32.mrb[0].mxu0
        %v1987 = vadd.f32 0.0, %v1986
        %1988 = vmatprep.mubr.bf16.mxu0 %v1938
        %1989 = vmatmul.mubr.bf16.gmra.mrb[0].mxu0 %v1818
        %v1990 = vpop.f32.mrb[0].mxu0
        %v1991 = vadd.f32 0.0, %v1990
        %v1992 = vpop.f32.mrb[0].mxu0
        %v1993 = vadd.f32 0.0, %v1992
        %v1994 = vpop.f32.mrb[0].mxu0
        %v1995 = vpop.f32.mrb[0].mxu0
        %1996 = vdwg.mxu0
        %v1997 = vadd.f32 %v1785, %v1981
        %v1998 = vadd.f32 %v1786, %v1983
        %v1999 = vadd.f32 %v1787, %v1985
        %v2000 = vadd.f32 %v1788, %v1987
        %v2001 = vadd.f32 %v1789, %v1991
        %v2002 = vadd.f32 %v1790, %v1993
        %s2003 = scalar_lea.vmem %s3, 672
        %v2004 = vld [vmem:[%s2003] sm:$0xff]
        %v2005 = vld [vmem:[%s2003 + $0x8] sm:$0xff]
        %v2006 = vld [vmem:[%s2003 + $0x10] sm:$0xff]
        %v2007 = vld [vmem:[%s2003 + $0x18] sm:$0xff]
        %v2008 = vld [vmem:[%s2003 + $0x20] sm:$0xff]
        %v2009 = vld [vmem:[%s2003 + $0x28] sm:$0xff]
        %v2010 = vld [vmem:[%s2003 + $0x30] sm:$0xff]
        %v2011 = vld [vmem:[%s2003 + $0x38] sm:$0xff]
        %v2012 = vld [vmem:[%s2003 + $0x40] sm:$0xff]
        %v2013 = vld [vmem:[%s2003 + $0x48] sm:$0xff]
        %v2014 = vld [vmem:[%s2003 + $0x50] sm:$0xff]
        %v2015 = vld [vmem:[%s2003 + $0x58] sm:$0xff]
        %v2016 = vld [vmem:[%s2003 + $0x60] sm:$0xff]
        %v2017 = vld [vmem:[%s2003 + $0x68] sm:$0xff]
        %v2018 = vld [vmem:[%s2003 + $0x70] sm:$0xff]
        %v2019 = vld [vmem:[%s2003 + $0x78] sm:$0xff]
        %v2020 = vld [vmem:[%s2003 + $0x80] sm:$0xff]
        %v2021 = vld [vmem:[%s2003 + $0x88] sm:$0xff]
        %v2022 = vld [vmem:[%s2003 + $0x90] sm:$0xff]
        %v2023 = vld [vmem:[%s2003 + $0x98] sm:$0xff]
        %v2024 = vld [vmem:[%s2003 + $0xa0] sm:$0xff]
        %v2025 = vrot.slane %v1168, 2
        %v2026 = vrot.slane %v1170, 2
        %v2027 = vsel %vm1009, %v2025, %v2026
        %v2028 = vrot.slane %v1169, 2
        %v2029 = vrot.slane %v1171, 2
        %v2030 = vsel %vm1009, %v2028, %v2029
        %v2054 = vunpack.c.l.b16 %v2004
        %v2055 = vunpack.c.h.b16 %v2004
        %v2056 = vunpack.c.l.b16 %v2005
        %v2057 = vunpack.c.h.b16 %v2005
        %v2058 = vunpack.c.l.b16 %v2006
        %v2059 = vunpack.c.h.b16 %v2006
        %v2060 = vunpack.c.l.b16 %v2007
        %v2061 = vunpack.c.h.b16 %v2007
        %v2062 = vunpack.c.l.b16 %v2008
        %v2063 = vunpack.c.h.b16 %v2008
        %v2064 = vunpack.c.l.b16 %v2009
        %v2065 = vunpack.c.h.b16 %v2009
        %v2066 = vunpack.c.l.b16 %v2010
        %v2067 = vunpack.c.h.b16 %v2010
        %v2068 = vunpack.c.l.b16 %v2011
        %v2069 = vunpack.c.h.b16 %v2011
        %v2070 = vunpack.c.l.b16 %v2012
        %v2071 = vunpack.c.h.b16 %v2012
        %v2072 = vunpack.c.l.b16 %v2013
        %v2073 = vunpack.c.h.b16 %v2013
        %v2074 = vunpack.c.l.b16 %v2014
        %v2075 = vunpack.c.h.b16 %v2014
        %v2076 = vunpack.c.l.b16 %v2015
        %v2077 = vunpack.c.h.b16 %v2015
        %v2078 = vunpack.c.l.b16 %v2016
        %v2079 = vunpack.c.h.b16 %v2016
        %v2080 = vunpack.c.l.b16 %v2017
        %v2081 = vunpack.c.h.b16 %v2017
        %v2082 = vunpack.c.l.b16 %v2018
        %v2083 = vunpack.c.h.b16 %v2018
        %v2084 = vunpack.c.l.b16 %v2019
        %v2085 = vunpack.c.h.b16 %v2019
        %v2086 = vunpack.c.l.b16 %v2020
        %v2087 = vunpack.c.h.b16 %v2020
        %v2088 = vunpack.c.l.b16 %v2021
        %v2089 = vunpack.c.h.b16 %v2021
        %v2090 = vunpack.c.l.b16 %v2022
        %v2091 = vunpack.c.h.b16 %v2022
        %v2092 = vunpack.c.l.b16 %v2023
        %v2093 = vunpack.c.h.b16 %v2023
        %v2094 = vunpack.c.l.b16 %v2024
        %v2095 = vunpack.c.h.b16 %v2024
        %v2096 = vpack.c.b16 %v2056, %v2054
        %v2097 = vpack.c.b16 %v2057, %v2055
        %v2098 = vpack.c.b16 %v2060, %v2058
        %v2099 = vpack.c.b16 %v2061, %v2059
        %v2100 = vpack.c.b16 %v2064, %v2062
        %v2101 = vpack.c.b16 %v2065, %v2063
        %v2102 = vpack.c.b16 %v2068, %v2066
        %v2103 = vpack.c.b16 %v2069, %v2067
        %v2104 = vpack.c.b16 %v2072, %v2070
        %v2105 = vpack.c.b16 %v2073, %v2071
        %v2106 = vpack.c.b16 %v2076, %v2074
        %v2107 = vpack.c.b16 %v2077, %v2075
        %v2108 = vpack.c.b16 %v2080, %v2078
        %v2109 = vpack.c.b16 %v2081, %v2079
        %v2110 = vpack.c.b16 %v2084, %v2082
        %v2111 = vpack.c.b16 %v2085, %v2083
        %v2112 = vpack.c.b16 %v2088, %v2086
        %v2113 = vpack.c.b16 %v2089, %v2087
        %v2114 = vpack.c.b16 %v2092, %v2090
        %v2115 = vpack.c.b16 %v2093, %v2091
        %v2116 = vpack.c.b16 %v2094, %v2094
        %v2117 = vpack.c.b16 %v2095, %v2095
        %v2139 = vsel %vm1352, %v2030, 0
        %v2142 = vsel %vm1352, %v2029, 0
        %v2145 = vsel %vm1359, %v2116, 0
        %v2148 = vsel %vm1359, %v2117, 0
        %2150 = vmatprep.subr.bf16.mxu0 %v2097
        %2151 = vmatpush1.bf16.msra.mxu0 %v2096
        %2152 = vmatprep.subr.bf16.mxu0 %v2099
        %2153 = vmatpush1.bf16.msra.mxu0 %v2098
        %2154 = vmatprep.subr.bf16.mxu0 %v2101
        %2155 = vmatpush1.bf16.msra.mxu0 %v2100
        %2156 = vmatprep.subr.bf16.mxu0 %v2103
        %2157 = vmatpush1.bf16.msra.mxu0 %v2102
        %2158 = vmatprep.subr.bf16.mxu0 %v2105
        %2159 = vmatpush1.bf16.msra.mxu0 %v2104
        %2160 = vmatprep.subr.bf16.mxu0 %v2107
        %2161 = vmatpush1.bf16.msra.mxu0 %v2106
        %2162 = vmatprep.subr.bf16.mxu0 %v2109
        %2163 = vmatpush1.bf16.msra.mxu0 %v2108
        %2164 = vmatprep.subr.bf16.mxu0 %v2111
        %2165 = vmatpush1.bf16.msra.mxu0 %v2110
        %2166 = vmatprep.subr.bf16.mxu0 %v2113
        %2167 = vmatpush1.bf16.msra.mxu0 %v2112
        %2168 = vmatprep.subr.bf16.mxu0 %v2115
        %2169 = vmatpush1.bf16.msra.mxu0 %v2114
        %2170 = vmatprep.subr.bf16.mxu0 %v2148
        %2171 = vmatpush1.bf16.msra.mxu0 %v2145
        %2172 = vmatprep.subr.bf16.mxu0 0
        %2173 = vmatpush1.bf16.msra.mxu0 0
        %2174 = vmatprep.subr.bf16.mxu0 0
        %2175 = vmatpush1.bf16.msra.mxu0 0
        %2176 = vmatprep.subr.bf16.mxu0 0
        %2177 = vmatpush1.bf16.msra.mxu0 0
        %2178 = vmatprep.subr.bf16.mxu0 0
        %2179 = vmatpush1.bf16.msra.mxu0 0
        %2180 = vmatprep.subr.bf16.mxu0 0
        %2181 = vmatpush1.bf16.msra.mxu0 0
        %2182 = vmatprep.mubr.bf16.mxu0 %v2139
        %2183 = vmatmul.mubr.bf16.gmra.mrb[0].mxu0 %v2027
        %v2184 = vpop.f32.mrb[0].mxu0
        %v2185 = vadd.f32 0.0, %v2184
        %v2186 = vpop.f32.mrb[0].mxu0
        %v2187 = vadd.f32 0.0, %v2186
        %v2188 = vpop.f32.mrb[0].mxu0
        %v2189 = vadd.f32 0.0, %v2188
        %v2190 = vpop.f32.mrb[0].mxu0
        %v2191 = vadd.f32 0.0, %v2190
        %2192 = vmatprep.mubr.bf16.mxu0 %v2142
        %2193 = vmatmul.mubr.bf16.gmra.mrb[0].mxu0 %v2026
        %v2194 = vpop.f32.mrb[0].mxu0
        %v2195 = vadd.f32 0.0, %v2194
        %v2196 = vpop.f32.mrb[0].mxu0
        %v2197 = vadd.f32 0.0, %v2196
        %v2198 = vpop.f32.mrb[0].mxu0
        %v2199 = vpop.f32.mrb[0].mxu0
        %2200 = vdwg.mxu0
        %v2201 = vadd.f32 %v1997, %v2185
        %v2202 = vadd.f32 %v1998, %v2187
        %v2203 = vadd.f32 %v1999, %v2189
        %v2204 = vadd.f32 %v2000, %v2191
        %v2205 = vadd.f32 %v2001, %v2195
        %v2206 = vadd.f32 %v2002, %v2197
        %s2207 = scalar_lea.vmem %s3, 840
        %v2208 = vld [vmem:[%s2207] sm:$0xff]
        %v2209 = vld [vmem:[%s2207 + $0x8] sm:$0xff]
        %v2210 = vld [vmem:[%s2207 + $0x10] sm:$0xff]
        %v2211 = vld [vmem:[%s2207 + $0x18] sm:$0xff]
        %v2212 = vld [vmem:[%s2207 + $0x20] sm:$0xff]
        %v2213 = vld [vmem:[%s2207 + $0x28] sm:$0xff]
        %v2214 = vld [vmem:[%s2207 + $0x30] sm:$0xff]
        %v2215 = vld [vmem:[%s2207 + $0x38] sm:$0xff]
        %v2216 = vld [vmem:[%s2207 + $0x40] sm:$0xff]
        %v2217 = vld [vmem:[%s2207 + $0x48] sm:$0xff]
        %v2218 = vld [vmem:[%s2207 + $0x50] sm:$0xff]
        %v2219 = vld [vmem:[%s2207 + $0x58] sm:$0xff]
        %v2220 = vld [vmem:[%s2207 + $0x60] sm:$0xff]
        %v2221 = vld [vmem:[%s2207 + $0x68] sm:$0xff]
        %v2222 = vld [vmem:[%s2207 + $0x70] sm:$0xff]
        %v2223 = vld [vmem:[%s2207 + $0x78] sm:$0xff]
        %v2224 = vld [vmem:[%s2207 + $0x80] sm:$0xff]
        %v2225 = vld [vmem:[%s2207 + $0x88] sm:$0xff]
        %v2226 = vld [vmem:[%s2207 + $0x90] sm:$0xff]
        %v2227 = vld [vmem:[%s2207 + $0x98] sm:$0xff]
        %v2228 = vld [vmem:[%s2207 + $0xa0] sm:$0xff]
        %vm2229 = vsmask.f32 5376
        %v2230 = vrot.slane %v1216, 2
        %v2231 = vrot.slane %v1218, 3
        %v2232 = vor.u32 %v2230, %v2231
        %v2233 = vrot.slane %v1239, 2
        %v2234 = vrot.slane %v1223, 3
        %v2235 = vor.u32 %v2233, %v2234
        %v2236 = vsel %vm2229, %v2232, %v2235
        %v2237 = vrot.slane %v1228, 2
        %v2238 = vrot.slane %v1230, 3
        %v2239 = vor.u32 %v2237, %v2238
        %v2240 = vrot.slane %v1242, 2
        %v2241 = vrot.slane %v1235, 3
        %v2242 = vor.u32 %v2240, %v2241
        %v2243 = vsel %vm2229, %v2239, %v2242
        %v2267 = vunpack.c.l.b16 %v2208
        %v2268 = vunpack.c.h.b16 %v2208
        %v2269 = vunpack.c.l.b16 %v2209
        %v2270 = vunpack.c.h.b16 %v2209
        %v2271 = vunpack.c.l.b16 %v2210
        %v2272 = vunpack.c.h.b16 %v2210
        %v2273 = vunpack.c.l.b16 %v2211
        %v2274 = vunpack.c.h.b16 %v2211
        %v2275 = vunpack.c.l.b16 %v2212
        %v2276 = vunpack.c.h.b16 %v2212
        %v2277 = vunpack.c.l.b16 %v2213
        %v2278 = vunpack.c.h.b16 %v2213
        %v2279 = vunpack.c.l.b16 %v2214
        %v2280 = vunpack.c.h.b16 %v2214
        %v2281 = vunpack.c.l.b16 %v2215
        %v2282 = vunpack.c.h.b16 %v2215
        %v2283 = vunpack.c.l.b16 %v2216
        %v2284 = vunpack.c.h.b16 %v2216
        %v2285 = vunpack.c.l.b16 %v2217
        %v2286 = vunpack.c.h.b16 %v2217
        %v2287 = vunpack.c.l.b16 %v2218
        %v2288 = vunpack.c.h.b16 %v2218
        %v2289 = vunpack.c.l.b16 %v2219
        %v2290 = vunpack.c.h.b16 %v2219
        %v2291 = vunpack.c.l.b16 %v2220
        %v2292 = vunpack.c.h.b16 %v2220
        %v2293 = vunpack.c.l.b16 %v2221
        %v2294 = vunpack.c.h.b16 %v2221
        %v2295 = vunpack.c.l.b16 %v2222
        %v2296 = vunpack.c.h.b16 %v2222
        %v2297 = vunpack.c.l.b16 %v2223
        %v2298 = vunpack.c.h.b16 %v2223
        %v2299 = vunpack.c.l.b16 %v2224
        %v2300 = vunpack.c.h.b16 %v2224
        %v2301 = vunpack.c.l.b16 %v2225
        %v2302 = vunpack.c.h.b16 %v2225
        %v2303 = vunpack.c.l.b16 %v2226
        %v2304 = vunpack.c.h.b16 %v2226
        %v2305 = vunpack.c.l.b16 %v2227
        %v2306 = vunpack.c.h.b16 %v2227
        %v2307 = vunpack.c.l.b16 %v2228
        %v2308 = vunpack.c.h.b16 %v2228
        %v2309 = vpack.c.b16 %v2269, %v2267
        %v2310 = vpack.c.b16 %v2270, %v2268
        %v2311 = vpack.c.b16 %v2273, %v2271
        %v2312 = vpack.c.b16 %v2274, %v2272
        %v2313 = vpack.c.b16 %v2277, %v2275
        %v2314 = vpack.c.b16 %v2278, %v2276
        %v2315 = vpack.c.b16 %v2281, %v2279
        %v2316 = vpack.c.b16 %v2282, %v2280
        %v2317 = vpack.c.b16 %v2285, %v2283
        %v2318 = vpack.c.b16 %v2286, %v2284
        %v2319 = vpack.c.b16 %v2289, %v2287
        %v2320 = vpack.c.b16 %v2290, %v2288
        %v2321 = vpack.c.b16 %v2293, %v2291
        %v2322 = vpack.c.b16 %v2294, %v2292
        %v2323 = vpack.c.b16 %v2297, %v2295
        %v2324 = vpack.c.b16 %v2298, %v2296
        %v2325 = vpack.c.b16 %v2301, %v2299
        %v2326 = vpack.c.b16 %v2302, %v2300
        %v2327 = vpack.c.b16 %v2305, %v2303
        %v2328 = vpack.c.b16 %v2306, %v2304
        %v2329 = vpack.c.b16 %v2307, %v2307
        %v2330 = vpack.c.b16 %v2308, %v2308
        %v2352 = vsel %vm1352, %v2243, 0
        %v2355 = vsel %vm1352, %v2242, 0
        %v2358 = vsel %vm1359, %v2329, 0
        %v2361 = vsel %vm1359, %v2330, 0
        %2363 = vmatprep.subr.bf16.mxu0 %v2310
        %2364 = vmatpush1.bf16.msra.mxu0 %v2309
        %2365 = vmatprep.subr.bf16.mxu0 %v2312
        %2366 = vmatpush1.bf16.msra.mxu0 %v2311
        %2367 = vmatprep.subr.bf16.mxu0 %v2314
        %2368 = vmatpush1.bf16.msra.mxu0 %v2313
        %2369 = vmatprep.subr.bf16.mxu0 %v2316
        %2370 = vmatpush1.bf16.msra.mxu0 %v2315
        %2371 = vmatprep.subr.bf16.mxu0 %v2318
        %2372 = vmatpush1.bf16.msra.mxu0 %v2317
        %2373 = vmatprep.subr.bf16.mxu0 %v2320
        %2374 = vmatpush1.bf16.msra.mxu0 %v2319
        %2375 = vmatprep.subr.bf16.mxu0 %v2322
        %2376 = vmatpush1.bf16.msra.mxu0 %v2321
        %2377 = vmatprep.subr.bf16.mxu0 %v2324
        %2378 = vmatpush1.bf16.msra.mxu0 %v2323
        %2379 = vmatprep.subr.bf16.mxu0 %v2326
        %2380 = vmatpush1.bf16.msra.mxu0 %v2325
        %2381 = vmatprep.subr.bf16.mxu0 %v2328
        %2382 = vmatpush1.bf16.msra.mxu0 %v2327
        %2383 = vmatprep.subr.bf16.mxu0 %v2361
        %2384 = vmatpush1.bf16.msra.mxu0 %v2358
        %2385 = vmatprep.subr.bf16.mxu0 0
        %2386 = vmatpush1.bf16.msra.mxu0 0
        %2387 = vmatprep.subr.bf16.mxu0 0
        %2388 = vmatpush1.bf16.msra.mxu0 0
        %2389 = vmatprep.subr.bf16.mxu0 0
        %2390 = vmatpush1.bf16.msra.mxu0 0
        %2391 = vmatprep.subr.bf16.mxu0 0
        %2392 = vmatpush1.bf16.msra.mxu0 0
        %2393 = vmatprep.subr.bf16.mxu0 0
        %2394 = vmatpush1.bf16.msra.mxu0 0
        %2395 = vmatprep.mubr.bf16.mxu0 %v2352
        %2396 = vmatmul.mubr.bf16.gmra.mrb[0].mxu0 %v2236
        %v2397 = vpop.f32.mrb[0].mxu0
        %v2398 = vadd.f32 0.0, %v2397
        %v2399 = vpop.f32.mrb[0].mxu0
        %v2400 = vadd.f32 0.0, %v2399
        %v2401 = vpop.f32.mrb[0].mxu0
        %v2402 = vadd.f32 0.0, %v2401
        %v2403 = vpop.f32.mrb[0].mxu0
        %v2404 = vadd.f32 0.0, %v2403
        %2405 = vmatprep.mubr.bf16.mxu0 %v2355
        %2406 = vmatmul.mubr.bf16.gmra.mrb[0].mxu0 %v2235
        %v2407 = vpop.f32.mrb[0].mxu0
        %v2408 = vadd.f32 0.0, %v2407
        %v2409 = vpop.f32.mrb[0].mxu0
        %v2410 = vadd.f32 0.0, %v2409
        %v2411 = vpop.f32.mrb[0].mxu0
        %v2412 = vpop.f32.mrb[0].mxu0
        %2413 = vdwg.mxu0
        %v2414 = vadd.f32 %v2201, %v2398
        %v2415 = vadd.f32 %v2202, %v2400
        %v2416 = vadd.f32 %v2203, %v2402
        %v2417 = vadd.f32 %v2204, %v2404
        %v2418 = vadd.f32 %v2205, %v2408
        %v2419 = vadd.f32 %v2206, %v2410
        %v2420 = vpack.c.bf16 %v1166, %v1164
        %v2421 = vpack.c.bf16 %v1167, %v1165
        %s2422 = scalar_lea.vmem %s3, 1008
        %v2423 = vld [vmem:[%s2422] sm:$0xff]
        %v2424 = vld [vmem:[%s2422 + $0x8] sm:$0xff]
        %v2425 = vld [vmem:[%s2422 + $0x10] sm:$0xff]
        %v2426 = vld [vmem:[%s2422 + $0x18] sm:$0xff]
        %v2427 = vld [vmem:[%s2422 + $0x20] sm:$0xff]
        %v2428 = vld [vmem:[%s2422 + $0x28] sm:$0xff]
        %v2429 = vld [vmem:[%s2422 + $0x30] sm:$0xff]
        %v2430 = vld [vmem:[%s2422 + $0x38] sm:$0xff]
        %v2431 = vld [vmem:[%s2422 + $0x40] sm:$0xff]
        %v2432 = vld [vmem:[%s2422 + $0x48] sm:$0xff]
        %v2433 = vld [vmem:[%s2422 + $0x50] sm:$0xff]
        %v2434 = vld [vmem:[%s2422 + $0x58] sm:$0xff]
        %v2435 = vld [vmem:[%s2422 + $0x60] sm:$0xff]
        %v2436 = vld [vmem:[%s2422 + $0x68] sm:$0xff]
        %v2437 = vld [vmem:[%s2422 + $0x70] sm:$0xff]
        %v2438 = vld [vmem:[%s2422 + $0x78] sm:$0xff]
        %v2439 = vld [vmem:[%s2422 + $0x80] sm:$0xff]
        %v2440 = vld [vmem:[%s2422 + $0x88] sm:$0xff]
        %v2441 = vld [vmem:[%s2422 + $0x90] sm:$0xff]
        %v2442 = vld [vmem:[%s2422 + $0x98] sm:$0xff]
        %v2443 = vld [vmem:[%s2422 + $0xa0] sm:$0xff]
        %vm2446 = vcmask 1044480
        %v2447 = vrot.slane %v1168, 3
        %v2448 = vrot.slane %v2420, 3
        %v2449 = vsel %vm2446, %v2447, %v2448
        %v2450 = vrot.slane %v1169, 3
        %v2451 = vrot.slane %v2421, 3
        %v2452 = vsel %vm2446, %v2450, %v2451
        %v2476 = vunpack.c.l.b16 %v2423
        %v2477 = vunpack.c.h.b16 %v2423
        %v2478 = vunpack.c.l.b16 %v2424
        %v2479 = vunpack.c.h.b16 %v2424
        %v2480 = vunpack.c.l.b16 %v2425
        %v2481 = vunpack.c.h.b16 %v2425
        %v2482 = vunpack.c.l.b16 %v2426
        %v2483 = vunpack.c.h.b16 %v2426
        %v2484 = vunpack.c.l.b16 %v2427
        %v2485 = vunpack.c.h.b16 %v2427
        %v2486 = vunpack.c.l.b16 %v2428
        %v2487 = vunpack.c.h.b16 %v2428
        %v2488 = vunpack.c.l.b16 %v2429
        %v2489 = vunpack.c.h.b16 %v2429
        %v2490 = vunpack.c.l.b16 %v2430
        %v2491 = vunpack.c.h.b16 %v2430
        %v2492 = vunpack.c.l.b16 %v2431
        %v2493 = vunpack.c.h.b16 %v2431
        %v2494 = vunpack.c.l.b16 %v2432
        %v2495 = vunpack.c.h.b16 %v2432
        %v2496 = vunpack.c.l.b16 %v2433
        %v2497 = vunpack.c.h.b16 %v2433
        %v2498 = vunpack.c.l.b16 %v2434
        %v2499 = vunpack.c.h.b16 %v2434
        %v2500 = vunpack.c.l.b16 %v2435
        %v2501 = vunpack.c.h.b16 %v2435
        %v2502 = vunpack.c.l.b16 %v2436
        %v2503 = vunpack.c.h.b16 %v2436
        %v2504 = vunpack.c.l.b16 %v2437
        %v2505 = vunpack.c.h.b16 %v2437
        %v2506 = vunpack.c.l.b16 %v2438
        %v2507 = vunpack.c.h.b16 %v2438
        %v2508 = vunpack.c.l.b16 %v2439
        %v2509 = vunpack.c.h.b16 %v2439
        %v2510 = vunpack.c.l.b16 %v2440
        %v2511 = vunpack.c.h.b16 %v2440
        %v2512 = vunpack.c.l.b16 %v2441
        %v2513 = vunpack.c.h.b16 %v2441
        %v2514 = vunpack.c.l.b16 %v2442
        %v2515 = vunpack.c.h.b16 %v2442
        %v2516 = vunpack.c.l.b16 %v2443
        %v2517 = vunpack.c.h.b16 %v2443
        %v2518 = vpack.c.b16 %v2478, %v2476
        %v2519 = vpack.c.b16 %v2479, %v2477
        %v2520 = vpack.c.b16 %v2482, %v2480
        %v2521 = vpack.c.b16 %v2483, %v2481
        %v2522 = vpack.c.b16 %v2486, %v2484
        %v2523 = vpack.c.b16 %v2487, %v2485
        %v2524 = vpack.c.b16 %v2490, %v2488
        %v2525 = vpack.c.b16 %v2491, %v2489
        %v2526 = vpack.c.b16 %v2494, %v2492
        %v2527 = vpack.c.b16 %v2495, %v2493
        %v2528 = vpack.c.b16 %v2498, %v2496
        %v2529 = vpack.c.b16 %v2499, %v2497
        %v2530 = vpack.c.b16 %v2502, %v2500
        %v2531 = vpack.c.b16 %v2503, %v2501
        %v2532 = vpack.c.b16 %v2506, %v2504
        %v2533 = vpack.c.b16 %v2507, %v2505
        %v2534 = vpack.c.b16 %v2510, %v2508
        %v2535 = vpack.c.b16 %v2511, %v2509
        %v2536 = vpack.c.b16 %v2514, %v2512
        %v2537 = vpack.c.b16 %v2515, %v2513
        %v2538 = vpack.c.b16 %v2516, %v2516
        %v2539 = vpack.c.b16 %v2517, %v2517
        %v2561 = vsel %vm1352, %v2452, 0
        %v2564 = vsel %vm1352, %v2451, 0
        %v2567 = vsel %vm1359, %v2538, 0
        %v2570 = vsel %vm1359, %v2539, 0
        %2572 = vmatprep.subr.bf16.mxu0 %v2519
        %2573 = vmatpush1.bf16.msra.mxu0 %v2518
        %2574 = vmatprep.subr.bf16.mxu0 %v2521
        %2575 = vmatpush1.bf16.msra.mxu0 %v2520
        %2576 = vmatprep.subr.bf16.mxu0 %v2523
        %2577 = vmatpush1.bf16.msra.mxu0 %v2522
        %2578 = vmatprep.subr.bf16.mxu0 %v2525
        %2579 = vmatpush1.bf16.msra.mxu0 %v2524
        %2580 = vmatprep.subr.bf16.mxu0 %v2527
        %2581 = vmatpush1.bf16.msra.mxu0 %v2526
        %2582 = vmatprep.subr.bf16.mxu0 %v2529
        %2583 = vmatpush1.bf16.msra.mxu0 %v2528
        %2584 = vmatprep.subr.bf16.mxu0 %v2531
        %2585 = vmatpush1.bf16.msra.mxu0 %v2530
        %2586 = vmatprep.subr.bf16.mxu0 %v2533
        %2587 = vmatpush1.bf16.msra.mxu0 %v2532
        %2588 = vmatprep.subr.bf16.mxu0 %v2535
        %2589 = vmatpush1.bf16.msra.mxu0 %v2534
        %2590 = vmatprep.subr.bf16.mxu0 %v2537
        %2591 = vmatpush1.bf16.msra.mxu0 %v2536
        %2592 = vmatprep.subr.bf16.mxu0 %v2570
        %2593 = vmatpush1.bf16.msra.mxu0 %v2567
        %2594 = vmatprep.subr.bf16.mxu0 0
        %2595 = vmatpush1.bf16.msra.mxu0 0
        %2596 = vmatprep.subr.bf16.mxu0 0
        %2597 = vmatpush1.bf16.msra.mxu0 0
        %2598 = vmatprep.subr.bf16.mxu0 0
        %2599 = vmatpush1.bf16.msra.mxu0 0
        %2600 = vmatprep.subr.bf16.mxu0 0
        %2601 = vmatpush1.bf16.msra.mxu0 0
        %2602 = vmatprep.subr.bf16.mxu0 0
        %2603 = vmatpush1.bf16.msra.mxu0 0
        %2604 = vmatprep.mubr.bf16.mxu0 %v2561
        %2605 = vmatmul.mubr.bf16.gmra.mrb[0].mxu0 %v2449
        %v2606 = vpop.f32.mrb[0].mxu0
        %v2607 = vadd.f32 0.0, %v2606
        %v2608 = vpop.f32.mrb[0].mxu0
        %v2609 = vadd.f32 0.0, %v2608
        %v2610 = vpop.f32.mrb[0].mxu0
        %v2611 = vadd.f32 0.0, %v2610
        %v2612 = vpop.f32.mrb[0].mxu0
        %v2613 = vadd.f32 0.0, %v2612
        %2614 = vmatprep.mubr.bf16.mxu0 %v2564
        %2615 = vmatmul.mubr.bf16.gmra.mrb[0].mxu0 %v2448
        %v2616 = vpop.f32.mrb[0].mxu0
        %v2617 = vadd.f32 0.0, %v2616
        %v2618 = vpop.f32.mrb[0].mxu0
        %v2619 = vadd.f32 0.0, %v2618
        %v2620 = vpop.f32.mrb[0].mxu0
        %v2621 = vpop.f32.mrb[0].mxu0
        %2622 = vdwg.mxu0
        %v2623 = vadd.f32 %v2414, %v2607
        %v2624 = vadd.f32 %v2415, %v2609
        %v2625 = vadd.f32 %v2416, %v2611
        %v2626 = vadd.f32 %v2417, %v2613
        %v2627 = vadd.f32 %v2418, %v2617
        %v2628 = vadd.f32 %v2419, %v2619
        %s2629 = scalar_lea.vmem %s3, 1176
        %v2630 = vld [vmem:[%s2629] sm:$0xff]
        %v2631 = vld [vmem:[%s2629 + $0x8] sm:$0xff]
        %v2632 = vld [vmem:[%s2629 + $0x10] sm:$0xff]
        %v2633 = vld [vmem:[%s2629 + $0x18] sm:$0xff]
        %v2634 = vld [vmem:[%s2629 + $0x20] sm:$0xff]
        %v2635 = vld [vmem:[%s2629 + $0x28] sm:$0xff]
        %v2636 = vld [vmem:[%s2629 + $0x30] sm:$0xff]
        %v2637 = vld [vmem:[%s2629 + $0x38] sm:$0xff]
        %v2638 = vld [vmem:[%s2629 + $0x40] sm:$0xff]
        %v2639 = vld [vmem:[%s2629 + $0x48] sm:$0xff]
        %v2640 = vld [vmem:[%s2629 + $0x50] sm:$0xff]
        %v2641 = vld [vmem:[%s2629 + $0x58] sm:$0xff]
        %v2642 = vld [vmem:[%s2629 + $0x60] sm:$0xff]
        %v2643 = vld [vmem:[%s2629 + $0x68] sm:$0xff]
        %v2644 = vld [vmem:[%s2629 + $0x70] sm:$0xff]
        %v2645 = vld [vmem:[%s2629 + $0x78] sm:$0xff]
        %v2646 = vld [vmem:[%s2629 + $0x80] sm:$0xff]
        %v2647 = vld [vmem:[%s2629 + $0x88] sm:$0xff]
        %v2648 = vld [vmem:[%s2629 + $0x90] sm:$0xff]
        %v2649 = vld [vmem:[%s2629 + $0x98] sm:$0xff]
        %v2650 = vld [vmem:[%s2629 + $0xa0] sm:$0xff]
        %vm2651 = vsmask.f32 4352
        %v2652 = vrot.slane %v1216, 3
        %v2653 = vrot.slane %v1218, 4
        %v2654 = vor.u32 %v2652, %v2653
        %v2656 = vshrl.u32 %v2420, 16
        %v2658 = vrot.slane %v2656, 3
        %v2659 = vshll.u32 %v2420, 16
        %v2661 = vrot.slane %v2659, 4
        %v2662 = vor.u32 %v2658, %v2661
        %v2663 = vsel %vm2651, %v2654, %v2662
        %v2664 = vrot.slane %v1228, 3
        %v2665 = vrot.slane %v1230, 4
        %v2666 = vor.u32 %v2664, %v2665
        %v2668 = vshrl.u32 %v2421, 16
        %v2670 = vrot.slane %v2668, 3
        %v2671 = vshll.u32 %v2421, 16
        %v2673 = vrot.slane %v2671, 4
        %v2674 = vor.u32 %v2670, %v2673
        %v2675 = vsel %vm2651, %v2666, %v2674
        %v2699 = vunpack.c.l.b16 %v2630
        %v2700 = vunpack.c.h.b16 %v2630
        %v2701 = vunpack.c.l.b16 %v2631
        %v2702 = vunpack.c.h.b16 %v2631
        %v2703 = vunpack.c.l.b16 %v2632
        %v2704 = vunpack.c.h.b16 %v2632
        %v2705 = vunpack.c.l.b16 %v2633
        %v2706 = vunpack.c.h.b16 %v2633
        %v2707 = vunpack.c.l.b16 %v2634
        %v2708 = vunpack.c.h.b16 %v2634
        %v2709 = vunpack.c.l.b16 %v2635
        %v2710 = vunpack.c.h.b16 %v2635
        %v2711 = vunpack.c.l.b16 %v2636
        %v2712 = vunpack.c.h.b16 %v2636
        %v2713 = vunpack.c.l.b16 %v2637
        %v2714 = vunpack.c.h.b16 %v2637
        %v2715 = vunpack.c.l.b16 %v2638
        %v2716 = vunpack.c.h.b16 %v2638
        %v2717 = vunpack.c.l.b16 %v2639
        %v2718 = vunpack.c.h.b16 %v2639
        %v2719 = vunpack.c.l.b16 %v2640
        %v2720 = vunpack.c.h.b16 %v2640
        %v2721 = vunpack.c.l.b16 %v2641
        %v2722 = vunpack.c.h.b16 %v2641
        %v2723 = vunpack.c.l.b16 %v2642
        %v2724 = vunpack.c.h.b16 %v2642
        %v2725 = vunpack.c.l.b16 %v2643
        %v2726 = vunpack.c.h.b16 %v2643
        %v2727 = vunpack.c.l.b16 %v2644
        %v2728 = vunpack.c.h.b16 %v2644
        %v2729 = vunpack.c.l.b16 %v2645
        %v2730 = vunpack.c.h.b16 %v2645
        %v2731 = vunpack.c.l.b16 %v2646
        %v2732 = vunpack.c.h.b16 %v2646
        %v2733 = vunpack.c.l.b16 %v2647
        %v2734 = vunpack.c.h.b16 %v2647
        %v2735 = vunpack.c.l.b16 %v2648
        %v2736 = vunpack.c.h.b16 %v2648
        %v2737 = vunpack.c.l.b16 %v2649
        %v2738 = vunpack.c.h.b16 %v2649
        %v2739 = vunpack.c.l.b16 %v2650
        %v2740 = vunpack.c.h.b16 %v2650
        %v2741 = vpack.c.b16 %v2701, %v2699
        %v2742 = vpack.c.b16 %v2702, %v2700
        %v2743 = vpack.c.b16 %v2705, %v2703
        %v2744 = vpack.c.b16 %v2706, %v2704
        %v2745 = vpack.c.b16 %v2709, %v2707
        %v2746 = vpack.c.b16 %v2710, %v2708
        %v2747 = vpack.c.b16 %v2713, %v2711
        %v2748 = vpack.c.b16 %v2714, %v2712
        %v2749 = vpack.c.b16 %v2717, %v2715
        %v2750 = vpack.c.b16 %v2718, %v2716
        %v2751 = vpack.c.b16 %v2721, %v2719
        %v2752 = vpack.c.b16 %v2722, %v2720
        %v2753 = vpack.c.b16 %v2725, %v2723
        %v2754 = vpack.c.b16 %v2726, %v2724
        %v2755 = vpack.c.b16 %v2729, %v2727
        %v2756 = vpack.c.b16 %v2730, %v2728
        %v2757 = vpack.c.b16 %v2733, %v2731
        %v2758 = vpack.c.b16 %v2734, %v2732
        %v2759 = vpack.c.b16 %v2737, %v2735
        %v2760 = vpack.c.b16 %v2738, %v2736
        %v2761 = vpack.c.b16 %v2739, %v2739
        %v2762 = vpack.c.b16 %v2740, %v2740
        %v2784 = vsel %vm1352, %v2675, 0
        %v2787 = vsel %vm1352, %v2674, 0
        %v2790 = vsel %vm1359, %v2761, 0
        %v2793 = vsel %vm1359, %v2762, 0
        %2795 = vmatprep.subr.bf16.mxu0 %v2742
        %2796 = vmatpush1.bf16.msra.mxu0 %v2741
        %2797 = vmatprep.subr.bf16.mxu0 %v2744
        %2798 = vmatpush1.bf16.msra.mxu0 %v2743
        %2799 = vmatprep.subr.bf16.mxu0 %v2746
        %2800 = vmatpush1.bf16.msra.mxu0 %v2745
        %2801 = vmatprep.subr.bf16.mxu0 %v2748
        %2802 = vmatpush1.bf16.msra.mxu0 %v2747
        %2803 = vmatprep.subr.bf16.mxu0 %v2750
        %2804 = vmatpush1.bf16.msra.mxu0 %v2749
        %2805 = vmatprep.subr.bf16.mxu0 %v2752
        %2806 = vmatpush1.bf16.msra.mxu0 %v2751
        %2807 = vmatprep.subr.bf16.mxu0 %v2754
        %2808 = vmatpush1.bf16.msra.mxu0 %v2753
        %2809 = vmatprep.subr.bf16.mxu0 %v2756
        %2810 = vmatpush1.bf16.msra.mxu0 %v2755
        %2811 = vmatprep.subr.bf16.mxu0 %v2758
        %2812 = vmatpush1.bf16.msra.mxu0 %v2757
        %2813 = vmatprep.subr.bf16.mxu0 %v2760
        %2814 = vmatpush1.bf16.msra.mxu0 %v2759
        %2815 = vmatprep.subr.bf16.mxu0 %v2793
        %2816 = vmatpush1.bf16.msra.mxu0 %v2790
        %2817 = vmatprep.subr.bf16.mxu0 0
        %2818 = vmatpush1.bf16.msra.mxu0 0
        %2819 = vmatprep.subr.bf16.mxu0 0
        %2820 = vmatpush1.bf16.msra.mxu0 0
        %2821 = vmatprep.subr.bf16.mxu0 0
        %2822 = vmatpush1.bf16.msra.mxu0 0
        %2823 = vmatprep.subr.bf16.mxu0 0
        %2824 = vmatpush1.bf16.msra.mxu0 0
        %2825 = vmatprep.subr.bf16.mxu0 0
        %2826 = vmatpush1.bf16.msra.mxu0 0
        %2827 = vmatprep.mubr.bf16.mxu0 %v2784
        %2828 = vmatmul.mubr.bf16.gmra.mrb[0].mxu0 %v2663
        %v2829 = vpop.f32.mrb[0].mxu0
        %v2830 = vadd.f32 0.0, %v2829
        %v2831 = vpop.f32.mrb[0].mxu0
        %v2832 = vadd.f32 0.0, %v2831
        %v2833 = vpop.f32.mrb[0].mxu0
        %v2834 = vadd.f32 0.0, %v2833
        %v2835 = vpop.f32.mrb[0].mxu0
        %v2836 = vadd.f32 0.0, %v2835
        %2837 = vmatprep.mubr.bf16.mxu0 %v2787
        %2838 = vmatmul.mubr.bf16.gmra.mrb[0].mxu0 %v2662
        %v2839 = vpop.f32.mrb[0].mxu0
        %v2840 = vadd.f32 0.0, %v2839
        %v2841 = vpop.f32.mrb[0].mxu0
        %v2842 = vadd.f32 0.0, %v2841
        %v2843 = vpop.f32.mrb[0].mxu0
        %v2844 = vpop.f32.mrb[0].mxu0
        %2845 = vdwg.mxu0
        %v2846 = vadd.f32 %v2623, %v2830
        %v2847 = vadd.f32 %v2624, %v2832
        %v2848 = vadd.f32 %v2625, %v2834
        %v2849 = vadd.f32 %v2626, %v2836
        %v2850 = vadd.f32 %v2627, %v2840
        %v2851 = vadd.f32 %v2628, %v2842
        %v2852 = vpack.c.bf16 %v1164, %v1162
        %v2853 = vpack.c.bf16 %v1165, %v1163
        %v2854 = vpack.c.bf16 %v1166, %v1166
        %v2855 = vpack.c.bf16 %v1167, %v1167
        %s2856 = scalar_lea.vmem %s3, 1344
        %v2857 = vld [vmem:[%s2856] sm:$0xff]
        %v2858 = vld [vmem:[%s2856 + $0x8] sm:$0xff]
        %v2859 = vld [vmem:[%s2856 + $0x10] sm:$0xff]
        %v2860 = vld [vmem:[%s2856 + $0x18] sm:$0xff]
        %v2861 = vld [vmem:[%s2856 + $0x20] sm:$0xff]
        %v2862 = vld [vmem:[%s2856 + $0x28] sm:$0xff]
        %v2863 = vld [vmem:[%s2856 + $0x30] sm:$0xff]
        %v2864 = vld [vmem:[%s2856 + $0x38] sm:$0xff]
        %v2865 = vld [vmem:[%s2856 + $0x40] sm:$0xff]
        %v2866 = vld [vmem:[%s2856 + $0x48] sm:$0xff]
        %v2867 = vld [vmem:[%s2856 + $0x50] sm:$0xff]
        %v2868 = vld [vmem:[%s2856 + $0x58] sm:$0xff]
        %v2869 = vld [vmem:[%s2856 + $0x60] sm:$0xff]
        %v2870 = vld [vmem:[%s2856 + $0x68] sm:$0xff]
        %v2871 = vld [vmem:[%s2856 + $0x70] sm:$0xff]
        %v2872 = vld [vmem:[%s2856 + $0x78] sm:$0xff]
        %v2873 = vld [vmem:[%s2856 + $0x80] sm:$0xff]
        %v2874 = vld [vmem:[%s2856 + $0x88] sm:$0xff]
        %v2875 = vld [vmem:[%s2856 + $0x90] sm:$0xff]
        %v2876 = vld [vmem:[%s2856 + $0x98] sm:$0xff]
        %v2877 = vld [vmem:[%s2856 + $0xa0] sm:$0xff]
        %v2899 = vunpack.c.l.b16 %v2857
        %v2900 = vunpack.c.h.b16 %v2857
        %v2901 = vunpack.c.l.b16 %v2858
        %v2902 = vunpack.c.h.b16 %v2858
        %v2903 = vunpack.c.l.b16 %v2859
        %v2904 = vunpack.c.h.b16 %v2859
        %v2905 = vunpack.c.l.b16 %v2860
        %v2906 = vunpack.c.h.b16 %v2860
        %v2907 = vunpack.c.l.b16 %v2861
        %v2908 = vunpack.c.h.b16 %v2861
        %v2909 = vunpack.c.l.b16 %v2862
        %v2910 = vunpack.c.h.b16 %v2862
        %v2911 = vunpack.c.l.b16 %v2863
        %v2912 = vunpack.c.h.b16 %v2863
        %v2913 = vunpack.c.l.b16 %v2864
        %v2914 = vunpack.c.h.b16 %v2864
        %v2915 = vunpack.c.l.b16 %v2865
        %v2916 = vunpack.c.h.b16 %v2865
        %v2917 = vunpack.c.l.b16 %v2866
        %v2918 = vunpack.c.h.b16 %v2866
        %v2919 = vunpack.c.l.b16 %v2867
        %v2920 = vunpack.c.h.b16 %v2867
        %v2921 = vunpack.c.l.b16 %v2868
        %v2922 = vunpack.c.h.b16 %v2868
        %v2923 = vunpack.c.l.b16 %v2869
        %v2924 = vunpack.c.h.b16 %v2869
        %v2925 = vunpack.c.l.b16 %v2870
        %v2926 = vunpack.c.h.b16 %v2870
        %v2927 = vunpack.c.l.b16 %v2871
        %v2928 = vunpack.c.h.b16 %v2871
        %v2929 = vunpack.c.l.b16 %v2872
        %v2930 = vunpack.c.h.b16 %v2872
        %v2931 = vunpack.c.l.b16 %v2873
        %v2932 = vunpack.c.h.b16 %v2873
        %v2933 = vunpack.c.l.b16 %v2874
        %v2934 = vunpack.c.h.b16 %v2874
        %v2935 = vunpack.c.l.b16 %v2875
        %v2936 = vunpack.c.h.b16 %v2875
        %v2937 = vunpack.c.l.b16 %v2876
        %v2938 = vunpack.c.h.b16 %v2876
        %v2939 = vunpack.c.l.b16 %v2877
        %v2940 = vunpack.c.h.b16 %v2877
        %v2941 = vpack.c.b16 %v2901, %v2899
        %v2942 = vpack.c.b16 %v2902, %v2900
        %v2943 = vpack.c.b16 %v2905, %v2903
        %v2944 = vpack.c.b16 %v2906, %v2904
        %v2945 = vpack.c.b16 %v2909, %v2907
        %v2946 = vpack.c.b16 %v2910, %v2908
        %v2947 = vpack.c.b16 %v2913, %v2911
        %v2948 = vpack.c.b16 %v2914, %v2912
        %v2949 = vpack.c.b16 %v2917, %v2915
        %v2950 = vpack.c.b16 %v2918, %v2916
        %v2951 = vpack.c.b16 %v2921, %v2919
        %v2952 = vpack.c.b16 %v2922, %v2920
        %v2953 = vpack.c.b16 %v2925, %v2923
        %v2954 = vpack.c.b16 %v2926, %v2924
        %v2955 = vpack.c.b16 %v2929, %v2927
        %v2956 = vpack.c.b16 %v2930, %v2928
        %v2957 = vpack.c.b16 %v2933, %v2931
        %v2958 = vpack.c.b16 %v2934, %v2932
        %v2959 = vpack.c.b16 %v2937, %v2935
        %v2960 = vpack.c.b16 %v2938, %v2936
        %v2961 = vpack.c.b16 %v2939, %v2939
        %v2962 = vpack.c.b16 %v2940, %v2940
        %v2984 = vsel %vm1352, %v2853, 0
        %v2987 = vsel %vm1352, %v2855, 0
        %v2990 = vsel %vm1359, %v2961, 0
        %v2993 = vsel %vm1359, %v2962, 0
        %2995 = vmatprep.subr.bf16.mxu0 %v2942
        %2996 = vmatpush1.bf16.msra.mxu0 %v2941
        %2997 = vmatprep.subr.bf16.mxu0 %v2944
        %2998 = vmatpush1.bf16.msra.mxu0 %v2943
        %2999 = vmatprep.subr.bf16.mxu0 %v2946
        %3000 = vmatpush1.bf16.msra.mxu0 %v2945
        %3001 = vmatprep.subr.bf16.mxu0 %v2948
        %3002 = vmatpush1.bf16.msra.mxu0 %v2947
        %3003 = vmatprep.subr.bf16.mxu0 %v2950
        %3004 = vmatpush1.bf16.msra.mxu0 %v2949
        %3005 = vmatprep.subr.bf16.mxu0 %v2952
        %3006 = vmatpush1.bf16.msra.mxu0 %v2951
        %3007 = vmatprep.subr.bf16.mxu0 %v2954
        %3008 = vmatpush1.bf16.msra.mxu0 %v2953
        %3009 = vmatprep.subr.bf16.mxu0 %v2956
        %3010 = vmatpush1.bf16.msra.mxu0 %v2955
        %3011 = vmatprep.subr.bf16.mxu0 %v2958
        %3012 = vmatpush1.bf16.msra.mxu0 %v2957
        %3013 = vmatprep.subr.bf16.mxu0 %v2960
        %3014 = vmatpush1.bf16.msra.mxu0 %v2959
        %3015 = vmatprep.subr.bf16.mxu0 %v2993
        %3016 = vmatpush1.bf16.msra.mxu0 %v2990
        %3017 = vmatprep.subr.bf16.mxu0 0
        %3018 = vmatpush1.bf16.msra.mxu0 0
        %3019 = vmatprep.subr.bf16.mxu0 0
        %3020 = vmatpush1.bf16.msra.mxu0 0
        %3021 = vmatprep.subr.bf16.mxu0 0
        %3022 = vmatpush1.bf16.msra.mxu0 0
        %3023 = vmatprep.subr.bf16.mxu0 0
        %3024 = vmatpush1.bf16.msra.mxu0 0
        %3025 = vmatprep.subr.bf16.mxu0 0
        %3026 = vmatpush1.bf16.msra.mxu0 0
        %3027 = vmatprep.mubr.bf16.mxu0 %v2984
        %3028 = vmatmul.mubr.bf16.gmra.mrb[0].mxu0 %v2852
        %v3029 = vpop.f32.mrb[0].mxu0
        %v3030 = vadd.f32 0.0, %v3029
        %v3031 = vpop.f32.mrb[0].mxu0
        %v3032 = vadd.f32 0.0, %v3031
        %v3033 = vpop.f32.mrb[0].mxu0
        %v3034 = vadd.f32 0.0, %v3033
        %v3035 = vpop.f32.mrb[0].mxu0
        %v3036 = vadd.f32 0.0, %v3035
        %3037 = vmatprep.mubr.bf16.mxu0 %v2987
        %3038 = vmatmul.mubr.bf16.gmra.mrb[0].mxu0 %v2854
        %v3039 = vpop.f32.mrb[0].mxu0
        %v3040 = vadd.f32 0.0, %v3039
        %v3041 = vpop.f32.mrb[0].mxu0
        %v3042 = vadd.f32 0.0, %v3041
        %v3043 = vpop.f32.mrb[0].mxu0
        %v3044 = vpop.f32.mrb[0].mxu0
        %3045 = vdwg.mxu0
        %v3046 = vadd.f32 %v2846, %v3030
        %v3047 = vadd.f32 %v2847, %v3032
        %v3048 = vadd.f32 %v2848, %v3034
        %v3049 = vadd.f32 %v2849, %v3036
        %v3050 = vadd.f32 %v2850, %v3040
        %v3051 = vadd.f32 %v2851, %v3042
        %s3052 = scalar_lea.vmem %s3, 1512
        %v3053 = vld [vmem:[%s3052] sm:$0xff]
        %v3054 = vld [vmem:[%s3052 + $0x8] sm:$0xff]
        %v3055 = vld [vmem:[%s3052 + $0x10] sm:$0xff]
        %v3056 = vld [vmem:[%s3052 + $0x18] sm:$0xff]
        %v3057 = vld [vmem:[%s3052 + $0x20] sm:$0xff]
        %v3058 = vld [vmem:[%s3052 + $0x28] sm:$0xff]
        %v3059 = vld [vmem:[%s3052 + $0x30] sm:$0xff]
        %v3060 = vld [vmem:[%s3052 + $0x38] sm:$0xff]
        %v3061 = vld [vmem:[%s3052 + $0x40] sm:$0xff]
        %v3062 = vld [vmem:[%s3052 + $0x48] sm:$0xff]
        %v3063 = vld [vmem:[%s3052 + $0x50] sm:$0xff]
        %v3064 = vld [vmem:[%s3052 + $0x58] sm:$0xff]
        %v3065 = vld [vmem:[%s3052 + $0x60] sm:$0xff]
        %v3066 = vld [vmem:[%s3052 + $0x68] sm:$0xff]
        %v3067 = vld [vmem:[%s3052 + $0x70] sm:$0xff]
        %v3068 = vld [vmem:[%s3052 + $0x78] sm:$0xff]
        %v3069 = vld [vmem:[%s3052 + $0x80] sm:$0xff]
        %v3070 = vld [vmem:[%s3052 + $0x88] sm:$0xff]
        %v3071 = vld [vmem:[%s3052 + $0x90] sm:$0xff]
        %v3072 = vld [vmem:[%s3052 + $0x98] sm:$0xff]
        %v3073 = vld [vmem:[%s3052 + $0xa0] sm:$0xff]
        %v3075 = vshrl.u32 %v2852, 16
        %v3077 = vshll.u32 %v2852, 16
        %v3079 = vrot.slane %v3077, 1
        %v3080 = vor.u32 %v3075, %v3079
        %v3082 = vshll.u32 %v2854, 16
        %v3084 = vrot.slane %v3082, 1
        %v3085 = vsel %vm449, %v3080, %v3084
        %v3086 = vshrl.u32 %v2853, 16
        %v3088 = vshll.u32 %v2853, 16
        %v3090 = vrot.slane %v3088, 1
        %v3091 = vor.u32 %v3086, %v3090
        %v3092 = vshll.u32 %v2855, 16
        %v3094 = vrot.slane %v3092, 1
        %v3095 = vsel %vm449, %v3091, %v3094
        %v3096 = vshrl.u32 %v2854, 16
        %v3098 = vor.u32 %v3096, %v3084
        %v3099 = vshrl.u32 %v2855, 16
        %v3101 = vor.u32 %v3099, %v3094
        %v3125 = vunpack.c.l.b16 %v3053
        %v3126 = vunpack.c.h.b16 %v3053
        %v3127 = vunpack.c.l.b16 %v3054
        %v3128 = vunpack.c.h.b16 %v3054
        %v3129 = vunpack.c.l.b16 %v3055
        %v3130 = vunpack.c.h.b16 %v3055
        %v3131 = vunpack.c.l.b16 %v3056
        %v3132 = vunpack.c.h.b16 %v3056
        %v3133 = vunpack.c.l.b16 %v3057
        %v3134 = vunpack.c.h.b16 %v3057
        %v3135 = vunpack.c.l.b16 %v3058
        %v3136 = vunpack.c.h.b16 %v3058
        %v3137 = vunpack.c.l.b16 %v3059
        %v3138 = vunpack.c.h.b16 %v3059
        %v3139 = vunpack.c.l.b16 %v3060
        %v3140 = vunpack.c.h.b16 %v3060
        %v3141 = vunpack.c.l.b16 %v3061
        %v3142 = vunpack.c.h.b16 %v3061
        %v3143 = vunpack.c.l.b16 %v3062
        %v3144 = vunpack.c.h.b16 %v3062
        %v3145 = vunpack.c.l.b16 %v3063
        %v3146 = vunpack.c.h.b16 %v3063
        %v3147 = vunpack.c.l.b16 %v3064
        %v3148 = vunpack.c.h.b16 %v3064
        %v3149 = vunpack.c.l.b16 %v3065
        %v3150 = vunpack.c.h.b16 %v3065
        %v3151 = vunpack.c.l.b16 %v3066
        %v3152 = vunpack.c.h.b16 %v3066
        %v3153 = vunpack.c.l.b16 %v3067
        %v3154 = vunpack.c.h.b16 %v3067
        %v3155 = vunpack.c.l.b16 %v3068
        %v3156 = vunpack.c.h.b16 %v3068
        %v3157 = vunpack.c.l.b16 %v3069
        %v3158 = vunpack.c.h.b16 %v3069
        %v3159 = vunpack.c.l.b16 %v3070
        %v3160 = vunpack.c.h.b16 %v3070
        %v3161 = vunpack.c.l.b16 %v3071
        %v3162 = vunpack.c.h.b16 %v3071
        %v3163 = vunpack.c.l.b16 %v3072
        %v3164 = vunpack.c.h.b16 %v3072
        %v3165 = vunpack.c.l.b16 %v3073
        %v3166 = vunpack.c.h.b16 %v3073
        %v3167 = vpack.c.b16 %v3127, %v3125
        %v3168 = vpack.c.b16 %v3128, %v3126
        %v3169 = vpack.c.b16 %v3131, %v3129
        %v3170 = vpack.c.b16 %v3132, %v3130
        %v3171 = vpack.c.b16 %v3135, %v3133
        %v3172 = vpack.c.b16 %v3136, %v3134
        %v3173 = vpack.c.b16 %v3139, %v3137
        %v3174 = vpack.c.b16 %v3140, %v3138
        %v3175 = vpack.c.b16 %v3143, %v3141
        %v3176 = vpack.c.b16 %v3144, %v3142
        %v3177 = vpack.c.b16 %v3147, %v3145
        %v3178 = vpack.c.b16 %v3148, %v3146
        %v3179 = vpack.c.b16 %v3151, %v3149
        %v3180 = vpack.c.b16 %v3152, %v3150
        %v3181 = vpack.c.b16 %v3155, %v3153
        %v3182 = vpack.c.b16 %v3156, %v3154
        %v3183 = vpack.c.b16 %v3159, %v3157
        %v3184 = vpack.c.b16 %v3160, %v3158
        %v3185 = vpack.c.b16 %v3163, %v3161
        %v3186 = vpack.c.b16 %v3164, %v3162
        %v3187 = vpack.c.b16 %v3165, %v3165
        %v3188 = vpack.c.b16 %v3166, %v3166
        %v3210 = vsel %vm1352, %v3095, 0
        %v3213 = vsel %vm1352, %v3101, 0
        %v3216 = vsel %vm1359, %v3187, 0
        %v3219 = vsel %vm1359, %v3188, 0
        %3221 = vmatprep.subr.bf16.mxu0 %v3168
        %3222 = vmatpush1.bf16.msra.mxu0 %v3167
        %3223 = vmatprep.subr.bf16.mxu0 %v3170
        %3224 = vmatpush1.bf16.msra.mxu0 %v3169
        %3225 = vmatprep.subr.bf16.mxu0 %v3172
        %3226 = vmatpush1.bf16.msra.mxu0 %v3171
        %3227 = vmatprep.subr.bf16.mxu0 %v3174
        %3228 = vmatpush1.bf16.msra.mxu0 %v3173
        %3229 = vmatprep.subr.bf16.mxu0 %v3176
        %3230 = vmatpush1.bf16.msra.mxu0 %v3175
        %3231 = vmatprep.subr.bf16.mxu0 %v3178
        %3232 = vmatpush1.bf16.msra.mxu0 %v3177
        %3233 = vmatprep.subr.bf16.mxu0 %v3180
        %3234 = vmatpush1.bf16.msra.mxu0 %v3179
        %3235 = vmatprep.subr.bf16.mxu0 %v3182
        %3236 = vmatpush1.bf16.msra.mxu0 %v3181
        %3237 = vmatprep.subr.bf16.mxu0 %v3184
        %3238 = vmatpush1.bf16.msra.mxu0 %v3183
        %3239 = vmatprep.subr.bf16.mxu0 %v3186
        %3240 = vmatpush1.bf16.msra.mxu0 %v3185
        %3241 = vmatprep.subr.bf16.mxu0 %v3219
        %3242 = vmatpush1.bf16.msra.mxu0 %v3216
        %3243 = vmatprep.subr.bf16.mxu0 0
        %3244 = vmatpush1.bf16.msra.mxu0 0
        %3245 = vmatprep.subr.bf16.mxu0 0
        %3246 = vmatpush1.bf16.msra.mxu0 0
        %3247 = vmatprep.subr.bf16.mxu0 0
        %3248 = vmatpush1.bf16.msra.mxu0 0
        %3249 = vmatprep.subr.bf16.mxu0 0
        %3250 = vmatpush1.bf16.msra.mxu0 0
        %3251 = vmatprep.subr.bf16.mxu0 0
        %3252 = vmatpush1.bf16.msra.mxu0 0
        %3253 = vmatprep.mubr.bf16.mxu0 %v3210
        %3254 = vmatmul.mubr.bf16.gmra.mrb[0].mxu0 %v3085
        %v3255 = vpop.f32.mrb[0].mxu0
        %v3256 = vadd.f32 0.0, %v3255
        %v3257 = vpop.f32.mrb[0].mxu0
        %v3258 = vadd.f32 0.0, %v3257
        %v3259 = vpop.f32.mrb[0].mxu0
        %v3260 = vadd.f32 0.0, %v3259
        %v3261 = vpop.f32.mrb[0].mxu0
        %v3262 = vadd.f32 0.0, %v3261
        %3263 = vmatprep.mubr.bf16.mxu0 %v3213
        %3264 = vmatmul.mubr.bf16.gmra.mrb[0].mxu0 %v3098
        %v3265 = vpop.f32.mrb[0].mxu0
        %v3266 = vadd.f32 0.0, %v3265
        %v3267 = vpop.f32.mrb[0].mxu0
        %v3268 = vadd.f32 0.0, %v3267
        %v3269 = vpop.f32.mrb[0].mxu0
        %v3270 = vpop.f32.mrb[0].mxu0
        %3271 = vdwg.mxu0
        %v3272 = vadd.f32 %v3046, %v3256
        %v3273 = vadd.f32 %v3047, %v3258
        %v3274 = vadd.f32 %v3048, %v3260
        %v3275 = vadd.f32 %v3049, %v3262
        %v3276 = vadd.f32 %v3050, %v3266
        %v3277 = vadd.f32 %v3051, %v3268
        %v3278 = vld [vmem:[%s4] sm:$0x3]
        %v3280 = vlaneseq
        %v3281 = vshrl.u32 %v3280, 7
        %v3282 = vsub.s32 0, %v3281
        %v3283 = vrot.slane %v3278, %v3282
        %v3284 = vlaneseq
        %v3285 = vshrl.u32 %v3284, 7
        %v3286 = vsub.s32 1, %v3285
        %v3287 = vrot.slane %v3278, %v3286
        %v3290 = vadd.f32 %v3272, %v3283
        %v3291 = vadd.f32 %v3273, %v3287
        %v3292 = vadd.f32 %v3274, %v3283
        %v3293 = vadd.f32 %v3275, %v3287
        %v3294 = vadd.f32 %v3276, %v3283
        %v3295 = vadd.f32 %v3277, %v3287
        %v3296 = vmax.f32 %v3290, 0.0
        %v3297 = vmax.f32 %v3291, 0.0
        %v3298 = vmax.f32 %v3292, 0.0
        %v3299 = vmax.f32 %v3293, 0.0
        %v3300 = vmax.f32 %v3294, 0.0
        %v3301 = vmax.f32 %v3295, 0.0
        %v3302 = vpack.c.bf16 %v3298, %v3296
        %v3303 = vpack.c.bf16 %v3299, %v3297
        %v3304 = vpack.c.bf16 %v3300, %v3300
        %v3305 = vpack.c.bf16 %v3301, %v3301
        %v3306 = vld [vmem:[%s5] sm:$0x1]
        %vm3307 = vcmask 154624
        %v3309 = vsel %vm3307, %v3306, 0
        %vm3311 = vcmask 1040384
        %vm3312 = vcmask 1041408
        %v3313 = vsel %vm3311, 4294967295, 65535
        %v3314 = vsel %vm3312, %v3313, 0
        %v3316 = vand.u32 %v3304, %v3314
        %v3319 = vand.u32 %v3305, %v3314
        %3321 = vmatprep.subr.bf16.mxu0 %v3303
        %3322 = vmatpush1.bf16.msra.mxu0 %v3302
        %3323 = vmatprep.subr.bf16.mxu0 %v3319
        %3324 = vmatpush1.bf16.msra.mxu0 %v3316
        %3325 = vmatprep.subr.bf16.mxu0 0
        %3326 = vmatpush1.bf16.msra.mxu0 0
        %3327 = vmatprep.subr.bf16.mxu0 0
        %3328 = vmatpush1.bf16.msra.mxu0 0
        %3329 = vmatprep.subr.bf16.mxu0 0
        %3330 = vmatpush1.bf16.msra.mxu0 0
        %3331 = vmatprep.subr.bf16.mxu0 0
        %3332 = vmatpush1.bf16.msra.mxu0 0
        %3333 = vmatprep.subr.bf16.mxu0 0
        %3334 = vmatpush1.bf16.msra.mxu0 0
        %3335 = vmatprep.subr.bf16.mxu0 0
        %3336 = vmatpush1.bf16.msra.mxu0 0
        %3337 = vmatprep.subr.bf16.mxu0 0
        %3338 = vmatpush1.bf16.msra.mxu0 0
        %3339 = vmatprep.subr.bf16.mxu0 0
        %3340 = vmatpush1.bf16.msra.mxu0 0
        %3341 = vmatprep.subr.bf16.mxu0 0
        %3342 = vmatpush1.bf16.msra.mxu0 0
        %3343 = vmatprep.subr.bf16.mxu0 0
        %3344 = vmatpush1.bf16.msra.mxu0 0
        %3345 = vmatprep.subr.bf16.mxu0 0
        %3346 = vmatpush1.bf16.msra.mxu0 0
        %3347 = vmatprep.subr.bf16.mxu0 0
        %3348 = vmatpush1.bf16.msra.mxu0 0
        %3349 = vmatprep.subr.bf16.mxu0 0
        %3350 = vmatpush1.bf16.msra.mxu0 0
        %3351 = vmatprep.subr.bf16.mxu0 0
        %3352 = vmatpush1.bf16.msra.mxu0 0
        %3353 = vmatprep.mubr.bf16.mxu0 0
        %3354 = vmatmul.mubr.bf16.gmra.mrb[0].mxu0 %v3309
        %v3355 = vpop.f32.mrb[0].mxu0
        %v3356 = vadd.f32 0.0, %v3355
        %v3357 = vpop.f32.mrb[0].mxu0
        %v3358 = vadd.f32 0.0, %v3357
        %v3359 = vpop.f32.mrb[0].mxu0
        %v3360 = vpop.f32.mrb[0].mxu0
        %3361 = vdwg.mxu0
        %v3362 = vpack.c.bf16 %v3356, %v3356
        %v3363 = vpack.c.bf16 %v3358, %v3358
        %v3364 = vld [vmem:[%s6] sm:$0xf]
        %v3365 = vld [vmem:[%s6 + $0x4] sm:$0xf]
        %v3366 = vld [vmem:[%s6 + $0x8] sm:$0xf]
        %v3367 = vld [vmem:[%s6 + $0xc] sm:$0xf]
        %v3368 = vld [vmem:[%s6 + $0x10] sm:$0xf]
        %v3369 = vld [vmem:[%s6 + $0x14] sm:$0xf]
        %v3370 = vld [vmem:[%s6 + $0x18] sm:$0xf]
        %v3371 = vld [vmem:[%s6 + $0x1c] sm:$0xf]
        %v3372 = vld [vmem:[%s6 + $0x20] sm:$0xf]
        %v3373 = vld [vmem:[%s6 + $0x24] sm:$0xf]
        %v3374 = vld [vmem:[%s6 + $0x28] sm:$0xf]
        %v3375 = vld [vmem:[%s6 + $0x2c] sm:$0xf]
        %v3376 = vld [vmem:[%s6 + $0x30] sm:$0xf]
        %v3377 = vld [vmem:[%s6 + $0x34] sm:$0xf]
        %v3378 = vld [vmem:[%s6 + $0x38] sm:$0xf]
        %v3379 = vld [vmem:[%s6 + $0x3c] sm:$0xf]
        %v3380 = vld [vmem:[%s6 + $0x40] sm:$0xf]
        %v3381 = vld [vmem:[%s6 + $0x44] sm:$0xf]
        %v3382 = vld [vmem:[%s6 + $0x48] sm:$0xf]
        %v3383 = vld [vmem:[%s6 + $0x4c] sm:$0xf]
        %s3384 = scalar_lea.vmem %s5, 1
        %v3385 = vld [vmem:[%s3384] sm:$0x1]
        %v3387 = vsel %vm3307, %v3385, 0
        %3389 = vmatprep.subr.bf16.mxu0 %v3303
        %3390 = vmatpush1.bf16.msra.mxu0 %v3302
        %3391 = vmatprep.subr.bf16.mxu0 %v3319
        %3392 = vmatpush1.bf16.msra.mxu0 %v3316
        %3393 = vmatprep.subr.bf16.mxu0 0
        %3394 = vmatpush1.bf16.msra.mxu0 0
        %3395 = vmatprep.subr.bf16.mxu0 0
        %3396 = vmatpush1.bf16.msra.mxu0 0
        %3397 = vmatprep.subr.bf16.mxu0 0
        %3398 = vmatpush1.bf16.msra.mxu0 0
        %3399 = vmatprep.subr.bf16.mxu0 0
        %3400 = vmatpush1.bf16.msra.mxu0 0
        %3401 = vmatprep.subr.bf16.mxu0 0
        %3402 = vmatpush1.bf16.msra.mxu0 0
        %3403 = vmatprep.subr.bf16.mxu0 0
        %3404 = vmatpush1.bf16.msra.mxu0 0
        %3405 = vmatprep.subr.bf16.mxu0 0
        %3406 = vmatpush1.bf16.msra.mxu0 0
        %3407 = vmatprep.subr.bf16.mxu0 0
        %3408 = vmatpush1.bf16.msra.mxu0 0
        %3409 = vmatprep.subr.bf16.mxu0 0
        %3410 = vmatpush1.bf16.msra.mxu0 0
        %3411 = vmatprep.subr.bf16.mxu0 0
        %3412 = vmatpush1.bf16.msra.mxu0 0
        %3413 = vmatprep.subr.bf16.mxu0 0
        %3414 = vmatpush1.bf16.msra.mxu0 0
        %3415 = vmatprep.subr.bf16.mxu0 0
        %3416 = vmatpush1.bf16.msra.mxu0 0
        %3417 = vmatprep.subr.bf16.mxu0 0
        %3418 = vmatpush1.bf16.msra.mxu0 0
        %3419 = vmatprep.subr.bf16.mxu0 0
        %3420 = vmatpush1.bf16.msra.mxu0 0
        %3421 = vmatprep.mubr.bf16.mxu0 0
        %3422 = vmatmul.mubr.bf16.gmra.mrb[0].mxu0 %v3387
        %v3423 = vpop.f32.mrb[0].mxu0
        %v3424 = vadd.f32 0.0, %v3423
        %v3425 = vpop.f32.mrb[0].mxu0
        %v3426 = vadd.f32 0.0, %v3425
        %v3427 = vpop.f32.mrb[0].mxu0
        %v3428 = vpop.f32.mrb[0].mxu0
        %3429 = vdwg.mxu0
        %v3430 = vpack.c.bf16 %v3424, %v3424
        %v3431 = vpack.c.bf16 %v3426, %v3426
        %s3432 = scalar_lea.vmem %s6, 80
        %v3433 = vld [vmem:[%s3432] sm:$0xf]
        %v3434 = vld [vmem:[%s3432 + $0x4] sm:$0xf]
        %v3435 = vld [vmem:[%s3432 + $0x8] sm:$0xf]
        %v3436 = vld [vmem:[%s3432 + $0xc] sm:$0xf]
        %v3437 = vld [vmem:[%s3432 + $0x10] sm:$0xf]
        %v3438 = vld [vmem:[%s3432 + $0x14] sm:$0xf]
        %v3439 = vld [vmem:[%s3432 + $0x18] sm:$0xf]
        %v3440 = vld [vmem:[%s3432 + $0x1c] sm:$0xf]
        %v3441 = vld [vmem:[%s3432 + $0x20] sm:$0xf]
        %v3442 = vld [vmem:[%s3432 + $0x24] sm:$0xf]
        %v3443 = vld [vmem:[%s3432 + $0x28] sm:$0xf]
        %v3444 = vld [vmem:[%s3432 + $0x2c] sm:$0xf]
        %v3445 = vld [vmem:[%s3432 + $0x30] sm:$0xf]
        %v3446 = vld [vmem:[%s3432 + $0x34] sm:$0xf]
        %v3447 = vld [vmem:[%s3432 + $0x38] sm:$0xf]
        %v3448 = vld [vmem:[%s3432 + $0x3c] sm:$0xf]
        %v3449 = vld [vmem:[%s3432 + $0x40] sm:$0xf]
        %v3450 = vld [vmem:[%s3432 + $0x44] sm:$0xf]
        %v3451 = vld [vmem:[%s3432 + $0x48] sm:$0xf]
        %v3452 = vld [vmem:[%s3432 + $0x4c] sm:$0xf]
        %v3473 = vunpack.c.l.b16 %v3433
        %v3474 = vunpack.c.l.b16 %v3434
        %v3475 = vunpack.c.l.b16 %v3435
        %v3476 = vunpack.c.l.b16 %v3436
        %v3477 = vunpack.c.l.b16 %v3437
        %v3478 = vunpack.c.l.b16 %v3438
        %v3479 = vunpack.c.l.b16 %v3439
        %v3480 = vunpack.c.l.b16 %v3440
        %v3481 = vunpack.c.l.b16 %v3441
        %v3482 = vunpack.c.l.b16 %v3442
        %v3483 = vunpack.c.l.b16 %v3443
        %v3484 = vunpack.c.l.b16 %v3444
        %v3485 = vunpack.c.l.b16 %v3445
        %v3486 = vunpack.c.l.b16 %v3446
        %v3487 = vunpack.c.l.b16 %v3447
        %v3488 = vunpack.c.l.b16 %v3448
        %v3489 = vunpack.c.l.b16 %v3449
        %v3490 = vunpack.c.l.b16 %v3450
        %v3491 = vunpack.c.l.b16 %v3451
        %v3492 = vunpack.c.l.b16 %v3452
        %v3493 = vpack.c.b16 %v3474, %v3473
        %v3494 = vpack.c.b16 %v3476, %v3475
        %v3495 = vpack.c.b16 %v3478, %v3477
        %v3496 = vpack.c.b16 %v3480, %v3479
        %v3497 = vpack.c.b16 %v3482, %v3481
        %v3498 = vpack.c.b16 %v3484, %v3483
        %v3499 = vpack.c.b16 %v3486, %v3485
        %v3500 = vpack.c.b16 %v3488, %v3487
        %v3501 = vpack.c.b16 %v3490, %v3489
        %v3502 = vpack.c.b16 %v3492, %v3491
        %vm3513 = vcmask 261120
        %v3515 = vsel %vm3513, %v3431, 0
        %3517 = vmatprep.subr.bf16.mxu0 0
        %3518 = vmatpush1.bf16.msra.mxu0 %v3493
        %3519 = vmatprep.subr.bf16.mxu0 0
        %3520 = vmatpush1.bf16.msra.mxu0 %v3494
        %3521 = vmatprep.subr.bf16.mxu0 0
        %3522 = vmatpush1.bf16.msra.mxu0 %v3495
        %3523 = vmatprep.subr.bf16.mxu0 0
        %3524 = vmatpush1.bf16.msra.mxu0 %v3496
        %3525 = vmatprep.subr.bf16.mxu0 0
        %3526 = vmatpush1.bf16.msra.mxu0 %v3497
        %3527 = vmatprep.subr.bf16.mxu0 0
        %3528 = vmatpush1.bf16.msra.mxu0 %v3498
        %3529 = vmatprep.subr.bf16.mxu0 0
        %3530 = vmatpush1.bf16.msra.mxu0 %v3499
        %3531 = vmatprep.subr.bf16.mxu0 0
        %3532 = vmatpush1.bf16.msra.mxu0 %v3500
        %3533 = vmatprep.subr.bf16.mxu0 0
        %3534 = vmatpush1.bf16.msra.mxu0 %v3501
        %3535 = vmatprep.subr.bf16.mxu0 0
        %3536 = vmatpush1.bf16.msra.mxu0 %v3502
        %3537 = vmatprep.subr.bf16.mxu0 0
        %3538 = vmatpush1.bf16.msra.mxu0 0
        %3539 = vmatprep.subr.bf16.mxu0 0
        %3540 = vmatpush1.bf16.msra.mxu0 0
        %3541 = vmatprep.subr.bf16.mxu0 0
        %3542 = vmatpush1.bf16.msra.mxu0 0
        %3543 = vmatprep.subr.bf16.mxu0 0
        %3544 = vmatpush1.bf16.msra.mxu0 0
        %3545 = vmatprep.subr.bf16.mxu0 0
        %3546 = vmatpush1.bf16.msra.mxu0 0
        %3547 = vmatprep.subr.bf16.mxu0 0
        %3548 = vmatpush1.bf16.msra.mxu0 0
        %3549 = vmatprep.mubr.bf16.mxu0 %v3515
        %3550 = vmatmul.mubr.bf16.gmra.mrb[0].mxu0 %v3430
        %v3551 = vpop.f32.mrb[0].mxu0
        %v3552 = vadd.f32 0.0, %v3551
        %v3553 = vpop.f32.mrb[0].mxu0
        %v3554 = vpop.f32.mrb[0].mxu0
        %v3555 = vpop.f32.mrb[0].mxu0
        %3556 = vdwg.mxu0
        %v3577 = vunpack.c.l.b16 %v3364
        %v3578 = vunpack.c.l.b16 %v3365
        %v3579 = vunpack.c.l.b16 %v3366
        %v3580 = vunpack.c.l.b16 %v3367
        %v3581 = vunpack.c.l.b16 %v3368
        %v3582 = vunpack.c.l.b16 %v3369
        %v3583 = vunpack.c.l.b16 %v3370
        %v3584 = vunpack.c.l.b16 %v3371
        %v3585 = vunpack.c.l.b16 %v3372
        %v3586 = vunpack.c.l.b16 %v3373
        %v3587 = vunpack.c.l.b16 %v3374
        %v3588 = vunpack.c.l.b16 %v3375
        %v3589 = vunpack.c.l.b16 %v3376
        %v3590 = vunpack.c.l.b16 %v3377
        %v3591 = vunpack.c.l.b16 %v3378
        %v3592 = vunpack.c.l.b16 %v3379
        %v3593 = vunpack.c.l.b16 %v3380
        %v3594 = vunpack.c.l.b16 %v3381
        %v3595 = vunpack.c.l.b16 %v3382
        %v3596 = vunpack.c.l.b16 %v3383
        %v3597 = vpack.c.b16 %v3578, %v3577
        %v3598 = vpack.c.b16 %v3580, %v3579
        %v3599 = vpack.c.b16 %v3582, %v3581
        %v3600 = vpack.c.b16 %v3584, %v3583
        %v3601 = vpack.c.b16 %v3586, %v3585
        %v3602 = vpack.c.b16 %v3588, %v3587
        %v3603 = vpack.c.b16 %v3590, %v3589
        %v3604 = vpack.c.b16 %v3592, %v3591
        %v3605 = vpack.c.b16 %v3594, %v3593
        %v3606 = vpack.c.b16 %v3596, %v3595
        %v3618 = vsel %vm3513, %v3363, 0
        %3620 = vmatprep.subr.bf16.mxu0 0
        %3621 = vmatpush1.bf16.msra.mxu0 %v3597
        %3622 = vmatprep.subr.bf16.mxu0 0
        %3623 = vmatpush1.bf16.msra.mxu0 %v3598
        %3624 = vmatprep.subr.bf16.mxu0 0
        %3625 = vmatpush1.bf16.msra.mxu0 %v3599
        %3626 = vmatprep.subr.bf16.mxu0 0
        %3627 = vmatpush1.bf16.msra.mxu0 %v3600
        %3628 = vmatprep.subr.bf16.mxu0 0
        %3629 = vmatpush1.bf16.msra.mxu0 %v3601
        %3630 = vmatprep.subr.bf16.mxu0 0
        %3631 = vmatpush1.bf16.msra.mxu0 %v3602
        %3632 = vmatprep.subr.bf16.mxu0 0
        %3633 = vmatpush1.bf16.msra.mxu0 %v3603
        %3634 = vmatprep.subr.bf16.mxu0 0
        %3635 = vmatpush1.bf16.msra.mxu0 %v3604
        %3636 = vmatprep.subr.bf16.mxu0 0
        %3637 = vmatpush1.bf16.msra.mxu0 %v3605
        %3638 = vmatprep.subr.bf16.mxu0 0
        %3639 = vmatpush1.bf16.msra.mxu0 %v3606
        %3640 = vmatprep.subr.bf16.mxu0 0
        %3641 = vmatpush1.bf16.msra.mxu0 0
        %3642 = vmatprep.subr.bf16.mxu0 0
        %3643 = vmatpush1.bf16.msra.mxu0 0
        %3644 = vmatprep.subr.bf16.mxu0 0
        %3645 = vmatpush1.bf16.msra.mxu0 0
        %3646 = vmatprep.subr.bf16.mxu0 0
        %3647 = vmatpush1.bf16.msra.mxu0 0
        %3648 = vmatprep.subr.bf16.mxu0 0
        %3649 = vmatpush1.bf16.msra.mxu0 0
        %3650 = vmatprep.subr.bf16.mxu0 0
        %3651 = vmatpush1.bf16.msra.mxu0 0
        %3652 = vmatprep.mubr.bf16.mxu0 %v3618
        %3653 = vmatmul.mubr.bf16.gmra.mrb[0].mxu0 %v3362
        %v3654 = vpop.f32.mrb[0].mxu0
        %v3655 = vadd.f32 %v3552, %v3654
        %v3656 = vpop.f32.mrb[0].mxu0
        %v3657 = vpop.f32.mrb[0].mxu0
        %v3658 = vpop.f32.mrb[0].mxu0
        %3659 = vdwg.mxu0
        %s3660 = scalar_lea.vmem %s5, 2
        %v3661 = vld [vmem:[%s3660] sm:$0x1]
        %v3663 = vsel %vm3307, %v3661, 0
        %3665 = vmatprep.subr.bf16.mxu0 %v3303
        %3666 = vmatpush1.bf16.msra.mxu0 %v3302
        %3667 = vmatprep.subr.bf16.mxu0 %v3319
        %3668 = vmatpush1.bf16.msra.mxu0 %v3316
        %3669 = vmatprep.subr.bf16.mxu0 0
        %3670 = vmatpush1.bf16.msra.mxu0 0
        %3671 = vmatprep.subr.bf16.mxu0 0
        %3672 = vmatpush1.bf16.msra.mxu0 0
        %3673 = vmatprep.subr.bf16.mxu0 0
        %3674 = vmatpush1.bf16.msra.mxu0 0
        %3675 = vmatprep.subr.bf16.mxu0 0
        %3676 = vmatpush1.bf16.msra.mxu0 0
        %3677 = vmatprep.subr.bf16.mxu0 0
        %3678 = vmatpush1.bf16.msra.mxu0 0
        %3679 = vmatprep.subr.bf16.mxu0 0
        %3680 = vmatpush1.bf16.msra.mxu0 0
        %3681 = vmatprep.subr.bf16.mxu0 0
        %3682 = vmatpush1.bf16.msra.mxu0 0
        %3683 = vmatprep.subr.bf16.mxu0 0
        %3684 = vmatpush1.bf16.msra.mxu0 0
        %3685 = vmatprep.subr.bf16.mxu0 0
        %3686 = vmatpush1.bf16.msra.mxu0 0
        %3687 = vmatprep.subr.bf16.mxu0 0
        %3688 = vmatpush1.bf16.msra.mxu0 0
        %3689 = vmatprep.subr.bf16.mxu0 0
        %3690 = vmatpush1.bf16.msra.mxu0 0
        %3691 = vmatprep.subr.bf16.mxu0 0
        %3692 = vmatpush1.bf16.msra.mxu0 0
        %3693 = vmatprep.subr.bf16.mxu0 0
        %3694 = vmatpush1.bf16.msra.mxu0 0
        %3695 = vmatprep.subr.bf16.mxu0 0
        %3696 = vmatpush1.bf16.msra.mxu0 0
        %3697 = vmatprep.mubr.bf16.mxu0 0
        %3698 = vmatmul.mubr.bf16.gmra.mrb[0].mxu0 %v3663
        %v3699 = vpop.f32.mrb[0].mxu0
        %v3700 = vadd.f32 0.0, %v3699
        %v3701 = vpop.f32.mrb[0].mxu0
        %v3702 = vadd.f32 0.0, %v3701
        %v3703 = vpop.f32.mrb[0].mxu0
        %v3704 = vpop.f32.mrb[0].mxu0
        %3705 = vdwg.mxu0
        %v3706 = vpack.c.bf16 %v3700, %v3700
        %v3707 = vpack.c.bf16 %v3702, %v3702
        %s3708 = scalar_lea.vmem %s6, 160
        %v3709 = vld [vmem:[%s3708] sm:$0xf]
        %v3710 = vld [vmem:[%s3708 + $0x4] sm:$0xf]
        %v3711 = vld [vmem:[%s3708 + $0x8] sm:$0xf]
        %v3712 = vld [vmem:[%s3708 + $0xc] sm:$0xf]
        %v3713 = vld [vmem:[%s3708 + $0x10] sm:$0xf]
        %v3714 = vld [vmem:[%s3708 + $0x14] sm:$0xf]
        %v3715 = vld [vmem:[%s3708 + $0x18] sm:$0xf]
        %v3716 = vld [vmem:[%s3708 + $0x1c] sm:$0xf]
        %v3717 = vld [vmem:[%s3708 + $0x20] sm:$0xf]
        %v3718 = vld [vmem:[%s3708 + $0x24] sm:$0xf]
        %v3719 = vld [vmem:[%s3708 + $0x28] sm:$0xf]
        %v3720 = vld [vmem:[%s3708 + $0x2c] sm:$0xf]
        %v3721 = vld [vmem:[%s3708 + $0x30] sm:$0xf]
        %v3722 = vld [vmem:[%s3708 + $0x34] sm:$0xf]
        %v3723 = vld [vmem:[%s3708 + $0x38] sm:$0xf]
        %v3724 = vld [vmem:[%s3708 + $0x3c] sm:$0xf]
        %v3725 = vld [vmem:[%s3708 + $0x40] sm:$0xf]
        %v3726 = vld [vmem:[%s3708 + $0x44] sm:$0xf]
        %v3727 = vld [vmem:[%s3708 + $0x48] sm:$0xf]
        %v3728 = vld [vmem:[%s3708 + $0x4c] sm:$0xf]
        %v3749 = vunpack.c.l.b16 %v3709
        %v3750 = vunpack.c.l.b16 %v3710
        %v3751 = vunpack.c.l.b16 %v3711
        %v3752 = vunpack.c.l.b16 %v3712
        %v3753 = vunpack.c.l.b16 %v3713
        %v3754 = vunpack.c.l.b16 %v3714
        %v3755 = vunpack.c.l.b16 %v3715
        %v3756 = vunpack.c.l.b16 %v3716
        %v3757 = vunpack.c.l.b16 %v3717
        %v3758 = vunpack.c.l.b16 %v3718
        %v3759 = vunpack.c.l.b16 %v3719
        %v3760 = vunpack.c.l.b16 %v3720
        %v3761 = vunpack.c.l.b16 %v3721
        %v3762 = vunpack.c.l.b16 %v3722
        %v3763 = vunpack.c.l.b16 %v3723
        %v3764 = vunpack.c.l.b16 %v3724
        %v3765 = vunpack.c.l.b16 %v3725
        %v3766 = vunpack.c.l.b16 %v3726
        %v3767 = vunpack.c.l.b16 %v3727
        %v3768 = vunpack.c.l.b16 %v3728
        %v3769 = vpack.c.b16 %v3750, %v3749
        %v3770 = vpack.c.b16 %v3752, %v3751
        %v3771 = vpack.c.b16 %v3754, %v3753
        %v3772 = vpack.c.b16 %v3756, %v3755
        %v3773 = vpack.c.b16 %v3758, %v3757
        %v3774 = vpack.c.b16 %v3760, %v3759
        %v3775 = vpack.c.b16 %v3762, %v3761
        %v3776 = vpack.c.b16 %v3764, %v3763
        %v3777 = vpack.c.b16 %v3766, %v3765
        %v3778 = vpack.c.b16 %v3768, %v3767
        %v3790 = vsel %vm3513, %v3707, 0
        %3792 = vmatprep.subr.bf16.mxu0 0
        %3793 = vmatpush1.bf16.msra.mxu0 %v3769
        %3794 = vmatprep.subr.bf16.mxu0 0
        %3795 = vmatpush1.bf16.msra.mxu0 %v3770
        %3796 = vmatprep.subr.bf16.mxu0 0
        %3797 = vmatpush1.bf16.msra.mxu0 %v3771
        %3798 = vmatprep.subr.bf16.mxu0 0
        %3799 = vmatpush1.bf16.msra.mxu0 %v3772
        %3800 = vmatprep.subr.bf16.mxu0 0
        %3801 = vmatpush1.bf16.msra.mxu0 %v3773
        %3802 = vmatprep.subr.bf16.mxu0 0
        %3803 = vmatpush1.bf16.msra.mxu0 %v3774
        %3804 = vmatprep.subr.bf16.mxu0 0
        %3805 = vmatpush1.bf16.msra.mxu0 %v3775
        %3806 = vmatprep.subr.bf16.mxu0 0
        %3807 = vmatpush1.bf16.msra.mxu0 %v3776
        %3808 = vmatprep.subr.bf16.mxu0 0
        %3809 = vmatpush1.bf16.msra.mxu0 %v3777
        %3810 = vmatprep.subr.bf16.mxu0 0
        %3811 = vmatpush1.bf16.msra.mxu0 %v3778
        %3812 = vmatprep.subr.bf16.mxu0 0
        %3813 = vmatpush1.bf16.msra.mxu0 0
        %3814 = vmatprep.subr.bf16.mxu0 0
        %3815 = vmatpush1.bf16.msra.mxu0 0
        %3816 = vmatprep.subr.bf16.mxu0 0
        %3817 = vmatpush1.bf16.msra.mxu0 0
        %3818 = vmatprep.subr.bf16.mxu0 0
        %3819 = vmatpush1.bf16.msra.mxu0 0
        %3820 = vmatprep.subr.bf16.mxu0 0
        %3821 = vmatpush1.bf16.msra.mxu0 0
        %3822 = vmatprep.subr.bf16.mxu0 0
        %3823 = vmatpush1.bf16.msra.mxu0 0
        %3824 = vmatprep.mubr.bf16.mxu0 %v3790
        %3825 = vmatmul.mubr.bf16.gmra.mrb[0].mxu0 %v3706
        %v3826 = vpop.f32.mrb[0].mxu0
        %v3827 = vadd.f32 0.0, %v3826
        %v3828 = vpop.f32.mrb[0].mxu0
        %v3829 = vpop.f32.mrb[0].mxu0
        %v3830 = vpop.f32.mrb[0].mxu0
        %3831 = vdwg.mxu0
        %v3832 = vadd.f32 %v3655, %v3827
        %s3833 = scalar_lea.vmem %s5, 3
        %v3834 = vld [vmem:[%s3833] sm:$0x1]
        %v3836 = vsel %vm3307, %v3834, 0
        %3838 = vmatprep.subr.bf16.mxu0 %v3303
        %3839 = vmatpush1.bf16.msra.mxu0 %v3302
        %3840 = vmatprep.subr.bf16.mxu0 %v3319
        %3841 = vmatpush1.bf16.msra.mxu0 %v3316
        %3842 = vmatprep.subr.bf16.mxu0 0
        %3843 = vmatpush1.bf16.msra.mxu0 0
        %3844 = vmatprep.subr.bf16.mxu0 0
        %3845 = vmatpush1.bf16.msra.mxu0 0
        %3846 = vmatprep.subr.bf16.mxu0 0
        %3847 = vmatpush1.bf16.msra.mxu0 0
        %3848 = vmatprep.subr.bf16.mxu0 0
        %3849 = vmatpush1.bf16.msra.mxu0 0
        %3850 = vmatprep.subr.bf16.mxu0 0
        %3851 = vmatpush1.bf16.msra.mxu0 0
        %3852 = vmatprep.subr.bf16.mxu0 0
        %3853 = vmatpush1.bf16.msra.mxu0 0
        %3854 = vmatprep.subr.bf16.mxu0 0
        %3855 = vmatpush1.bf16.msra.mxu0 0
        %3856 = vmatprep.subr.bf16.mxu0 0
        %3857 = vmatpush1.bf16.msra.mxu0 0
        %3858 = vmatprep.subr.bf16.mxu0 0
        %3859 = vmatpush1.bf16.msra.mxu0 0
        %3860 = vmatprep.subr.bf16.mxu0 0
        %3861 = vmatpush1.bf16.msra.mxu0 0
        %3862 = vmatprep.subr.bf16.mxu0 0
        %3863 = vmatpush1.bf16.msra.mxu0 0
        %3864 = vmatprep.subr.bf16.mxu0 0
        %3865 = vmatpush1.bf16.msra.mxu0 0
        %3866 = vmatprep.subr.bf16.mxu0 0
        %3867 = vmatpush1.bf16.msra.mxu0 0
        %3868 = vmatprep.subr.bf16.mxu0 0
        %3869 = vmatpush1.bf16.msra.mxu0 0
        %3870 = vmatprep.mubr.bf16.mxu0 0
        %3871 = vmatmul.mubr.bf16.gmra.mrb[0].mxu0 %v3836
        %v3872 = vpop.f32.mrb[0].mxu0
        %v3873 = vadd.f32 0.0, %v3872
        %v3874 = vpop.f32.mrb[0].mxu0
        %v3875 = vadd.f32 0.0, %v3874
        %v3876 = vpop.f32.mrb[0].mxu0
        %v3877 = vpop.f32.mrb[0].mxu0
        %3878 = vdwg.mxu0
        %v3879 = vpack.c.bf16 %v3873, %v3873
        %v3880 = vpack.c.bf16 %v3875, %v3875
        %s3881 = scalar_lea.vmem %s6, 240
        %v3882 = vld [vmem:[%s3881] sm:$0xf]
        %v3883 = vld [vmem:[%s3881 + $0x4] sm:$0xf]
        %v3884 = vld [vmem:[%s3881 + $0x8] sm:$0xf]
        %v3885 = vld [vmem:[%s3881 + $0xc] sm:$0xf]
        %v3886 = vld [vmem:[%s3881 + $0x10] sm:$0xf]
        %v3887 = vld [vmem:[%s3881 + $0x14] sm:$0xf]
        %v3888 = vld [vmem:[%s3881 + $0x18] sm:$0xf]
        %v3889 = vld [vmem:[%s3881 + $0x1c] sm:$0xf]
        %v3890 = vld [vmem:[%s3881 + $0x20] sm:$0xf]
        %v3891 = vld [vmem:[%s3881 + $0x24] sm:$0xf]
        %v3892 = vld [vmem:[%s3881 + $0x28] sm:$0xf]
        %v3893 = vld [vmem:[%s3881 + $0x2c] sm:$0xf]
        %v3894 = vld [vmem:[%s3881 + $0x30] sm:$0xf]
        %v3895 = vld [vmem:[%s3881 + $0x34] sm:$0xf]
        %v3896 = vld [vmem:[%s3881 + $0x38] sm:$0xf]
        %v3897 = vld [vmem:[%s3881 + $0x3c] sm:$0xf]
        %v3898 = vld [vmem:[%s3881 + $0x40] sm:$0xf]
        %v3899 = vld [vmem:[%s3881 + $0x44] sm:$0xf]
        %v3900 = vld [vmem:[%s3881 + $0x48] sm:$0xf]
        %v3901 = vld [vmem:[%s3881 + $0x4c] sm:$0xf]
        %v3922 = vunpack.c.l.b16 %v3882
        %v3923 = vunpack.c.l.b16 %v3883
        %v3924 = vunpack.c.l.b16 %v3884
        %v3925 = vunpack.c.l.b16 %v3885
        %v3926 = vunpack.c.l.b16 %v3886
        %v3927 = vunpack.c.l.b16 %v3887
        %v3928 = vunpack.c.l.b16 %v3888
        %v3929 = vunpack.c.l.b16 %v3889
        %v3930 = vunpack.c.l.b16 %v3890
        %v3931 = vunpack.c.l.b16 %v3891
        %v3932 = vunpack.c.l.b16 %v3892
        %v3933 = vunpack.c.l.b16 %v3893
        %v3934 = vunpack.c.l.b16 %v3894
        %v3935 = vunpack.c.l.b16 %v3895
        %v3936 = vunpack.c.l.b16 %v3896
        %v3937 = vunpack.c.l.b16 %v3897
        %v3938 = vunpack.c.l.b16 %v3898
        %v3939 = vunpack.c.l.b16 %v3899
        %v3940 = vunpack.c.l.b16 %v3900
        %v3941 = vunpack.c.l.b16 %v3901
        %v3942 = vpack.c.b16 %v3923, %v3922
        %v3943 = vpack.c.b16 %v3925, %v3924
        %v3944 = vpack.c.b16 %v3927, %v3926
        %v3945 = vpack.c.b16 %v3929, %v3928
        %v3946 = vpack.c.b16 %v3931, %v3930
        %v3947 = vpack.c.b16 %v3933, %v3932
        %v3948 = vpack.c.b16 %v3935, %v3934
        %v3949 = vpack.c.b16 %v3937, %v3936
        %v3950 = vpack.c.b16 %v3939, %v3938
        %v3951 = vpack.c.b16 %v3941, %v3940
        %v3963 = vsel %vm3513, %v3880, 0
        %3965 = vmatprep.subr.bf16.mxu0 0
        %3966 = vmatpush1.bf16.msra.mxu0 %v3942
        %3967 = vmatprep.subr.bf16.mxu0 0
        %3968 = vmatpush1.bf16.msra.mxu0 %v3943
        %3969 = vmatprep.subr.bf16.mxu0 0
        %3970 = vmatpush1.bf16.msra.mxu0 %v3944
        %3971 = vmatprep.subr.bf16.mxu0 0
        %3972 = vmatpush1.bf16.msra.mxu0 %v3945
        %3973 = vmatprep.subr.bf16.mxu0 0
        %3974 = vmatpush1.bf16.msra.mxu0 %v3946
        %3975 = vmatprep.subr.bf16.mxu0 0
        %3976 = vmatpush1.bf16.msra.mxu0 %v3947
        %3977 = vmatprep.subr.bf16.mxu0 0
        %3978 = vmatpush1.bf16.msra.mxu0 %v3948
        %3979 = vmatprep.subr.bf16.mxu0 0
        %3980 = vmatpush1.bf16.msra.mxu0 %v3949
        %3981 = vmatprep.subr.bf16.mxu0 0
        %3982 = vmatpush1.bf16.msra.mxu0 %v3950
        %3983 = vmatprep.subr.bf16.mxu0 0
        %3984 = vmatpush1.bf16.msra.mxu0 %v3951
        %3985 = vmatprep.subr.bf16.mxu0 0
        %3986 = vmatpush1.bf16.msra.mxu0 0
        %3987 = vmatprep.subr.bf16.mxu0 0
        %3988 = vmatpush1.bf16.msra.mxu0 0
        %3989 = vmatprep.subr.bf16.mxu0 0
        %3990 = vmatpush1.bf16.msra.mxu0 0
        %3991 = vmatprep.subr.bf16.mxu0 0
        %3992 = vmatpush1.bf16.msra.mxu0 0
        %3993 = vmatprep.subr.bf16.mxu0 0
        %3994 = vmatpush1.bf16.msra.mxu0 0
        %3995 = vmatprep.subr.bf16.mxu0 0
        %3996 = vmatpush1.bf16.msra.mxu0 0
        %3997 = vmatprep.mubr.bf16.mxu0 %v3963
        %3998 = vmatmul.mubr.bf16.gmra.mrb[0].mxu0 %v3879
        %v3999 = vpop.f32.mrb[0].mxu0
        %v4000 = vadd.f32 0.0, %v3999
        %v4001 = vpop.f32.mrb[0].mxu0
        %v4002 = vpop.f32.mrb[0].mxu0
        %v4003 = vpop.f32.mrb[0].mxu0
        %4004 = vdwg.mxu0
        %v4005 = vadd.f32 %v3832, %v4000
        %s4006 = scalar_lea.vmem %s5, 4
        %v4007 = vld [vmem:[%s4006] sm:$0x1]
        %v4009 = vsel %vm3307, %v4007, 0
        %4011 = vmatprep.subr.bf16.mxu0 %v3303
        %4012 = vmatpush1.bf16.msra.mxu0 %v3302
        %4013 = vmatprep.subr.bf16.mxu0 %v3319
        %4014 = vmatpush1.bf16.msra.mxu0 %v3316
        %4015 = vmatprep.subr.bf16.mxu0 0
        %4016 = vmatpush1.bf16.msra.mxu0 0
        %4017 = vmatprep.subr.bf16.mxu0 0
        %4018 = vmatpush1.bf16.msra.mxu0 0
        %4019 = vmatprep.subr.bf16.mxu0 0
        %4020 = vmatpush1.bf16.msra.mxu0 0
        %4021 = vmatprep.subr.bf16.mxu0 0
        %4022 = vmatpush1.bf16.msra.mxu0 0
        %4023 = vmatprep.subr.bf16.mxu0 0
        %4024 = vmatpush1.bf16.msra.mxu0 0
        %4025 = vmatprep.subr.bf16.mxu0 0
        %4026 = vmatpush1.bf16.msra.mxu0 0
        %4027 = vmatprep.subr.bf16.mxu0 0
        %4028 = vmatpush1.bf16.msra.mxu0 0
        %4029 = vmatprep.subr.bf16.mxu0 0
        %4030 = vmatpush1.bf16.msra.mxu0 0
        %4031 = vmatprep.subr.bf16.mxu0 0
        %4032 = vmatpush1.bf16.msra.mxu0 0
        %4033 = vmatprep.subr.bf16.mxu0 0
        %4034 = vmatpush1.bf16.msra.mxu0 0
        %4035 = vmatprep.subr.bf16.mxu0 0
        %4036 = vmatpush1.bf16.msra.mxu0 0
        %4037 = vmatprep.subr.bf16.mxu0 0
        %4038 = vmatpush1.bf16.msra.mxu0 0
        %4039 = vmatprep.subr.bf16.mxu0 0
        %4040 = vmatpush1.bf16.msra.mxu0 0
        %4041 = vmatprep.subr.bf16.mxu0 0
        %4042 = vmatpush1.bf16.msra.mxu0 0
        %4043 = vmatprep.mubr.bf16.mxu0 0
        %4044 = vmatmul.mubr.bf16.gmra.mrb[0].mxu0 %v4009
        %v4045 = vpop.f32.mrb[0].mxu0
        %v4046 = vadd.f32 0.0, %v4045
        %v4047 = vpop.f32.mrb[0].mxu0
        %v4048 = vadd.f32 0.0, %v4047
        %v4049 = vpop.f32.mrb[0].mxu0
        %v4050 = vpop.f32.mrb[0].mxu0
        %4051 = vdwg.mxu0
        %v4052 = vpack.c.bf16 %v4046, %v4046
        %v4053 = vpack.c.bf16 %v4048, %v4048
        %s4054 = scalar_lea.vmem %s6, 320
        %v4055 = vld [vmem:[%s4054] sm:$0xf]
        %v4056 = vld [vmem:[%s4054 + $0x4] sm:$0xf]
        %v4057 = vld [vmem:[%s4054 + $0x8] sm:$0xf]
        %v4058 = vld [vmem:[%s4054 + $0xc] sm:$0xf]
        %v4059 = vld [vmem:[%s4054 + $0x10] sm:$0xf]
        %v4060 = vld [vmem:[%s4054 + $0x14] sm:$0xf]
        %v4061 = vld [vmem:[%s4054 + $0x18] sm:$0xf]
        %v4062 = vld [vmem:[%s4054 + $0x1c] sm:$0xf]
        %v4063 = vld [vmem:[%s4054 + $0x20] sm:$0xf]
        %v4064 = vld [vmem:[%s4054 + $0x24] sm:$0xf]
        %v4065 = vld [vmem:[%s4054 + $0x28] sm:$0xf]
        %v4066 = vld [vmem:[%s4054 + $0x2c] sm:$0xf]
        %v4067 = vld [vmem:[%s4054 + $0x30] sm:$0xf]
        %v4068 = vld [vmem:[%s4054 + $0x34] sm:$0xf]
        %v4069 = vld [vmem:[%s4054 + $0x38] sm:$0xf]
        %v4070 = vld [vmem:[%s4054 + $0x3c] sm:$0xf]
        %v4071 = vld [vmem:[%s4054 + $0x40] sm:$0xf]
        %v4072 = vld [vmem:[%s4054 + $0x44] sm:$0xf]
        %v4073 = vld [vmem:[%s4054 + $0x48] sm:$0xf]
        %v4074 = vld [vmem:[%s4054 + $0x4c] sm:$0xf]
        %v4095 = vunpack.c.l.b16 %v4055
        %v4096 = vunpack.c.l.b16 %v4056
        %v4097 = vunpack.c.l.b16 %v4057
        %v4098 = vunpack.c.l.b16 %v4058
        %v4099 = vunpack.c.l.b16 %v4059
        %v4100 = vunpack.c.l.b16 %v4060
        %v4101 = vunpack.c.l.b16 %v4061
        %v4102 = vunpack.c.l.b16 %v4062
        %v4103 = vunpack.c.l.b16 %v4063
        %v4104 = vunpack.c.l.b16 %v4064
        %v4105 = vunpack.c.l.b16 %v4065
        %v4106 = vunpack.c.l.b16 %v4066
        %v4107 = vunpack.c.l.b16 %v4067
        %v4108 = vunpack.c.l.b16 %v4068
        %v4109 = vunpack.c.l.b16 %v4069
        %v4110 = vunpack.c.l.b16 %v4070
        %v4111 = vunpack.c.l.b16 %v4071
        %v4112 = vunpack.c.l.b16 %v4072
        %v4113 = vunpack.c.l.b16 %v4073
        %v4114 = vunpack.c.l.b16 %v4074
        %v4115 = vpack.c.b16 %v4096, %v4095
        %v4116 = vpack.c.b16 %v4098, %v4097
        %v4117 = vpack.c.b16 %v4100, %v4099
        %v4118 = vpack.c.b16 %v4102, %v4101
        %v4119 = vpack.c.b16 %v4104, %v4103
        %v4120 = vpack.c.b16 %v4106, %v4105
        %v4121 = vpack.c.b16 %v4108, %v4107
        %v4122 = vpack.c.b16 %v4110, %v4109
        %v4123 = vpack.c.b16 %v4112, %v4111
        %v4124 = vpack.c.b16 %v4114, %v4113
        %v4136 = vsel %vm3513, %v4053, 0
        %4138 = vmatprep.subr.bf16.mxu0 0
        %4139 = vmatpush1.bf16.msra.mxu0 %v4115
        %4140 = vmatprep.subr.bf16.mxu0 0
        %4141 = vmatpush1.bf16.msra.mxu0 %v4116
        %4142 = vmatprep.subr.bf16.mxu0 0
        %4143 = vmatpush1.bf16.msra.mxu0 %v4117
        %4144 = vmatprep.subr.bf16.mxu0 0
        %4145 = vmatpush1.bf16.msra.mxu0 %v4118
        %4146 = vmatprep.subr.bf16.mxu0 0
        %4147 = vmatpush1.bf16.msra.mxu0 %v4119
        %4148 = vmatprep.subr.bf16.mxu0 0
        %4149 = vmatpush1.bf16.msra.mxu0 %v4120
        %4150 = vmatprep.subr.bf16.mxu0 0
        %4151 = vmatpush1.bf16.msra.mxu0 %v4121
        %4152 = vmatprep.subr.bf16.mxu0 0
        %4153 = vmatpush1.bf16.msra.mxu0 %v4122
        %4154 = vmatprep.subr.bf16.mxu0 0
        %4155 = vmatpush1.bf16.msra.mxu0 %v4123
        %4156 = vmatprep.subr.bf16.mxu0 0
        %4157 = vmatpush1.bf16.msra.mxu0 %v4124
        %4158 = vmatprep.subr.bf16.mxu0 0
        %4159 = vmatpush1.bf16.msra.mxu0 0
        %4160 = vmatprep.subr.bf16.mxu0 0
        %4161 = vmatpush1.bf16.msra.mxu0 0
        %4162 = vmatprep.subr.bf16.mxu0 0
        %4163 = vmatpush1.bf16.msra.mxu0 0
        %4164 = vmatprep.subr.bf16.mxu0 0
        %4165 = vmatpush1.bf16.msra.mxu0 0
        %4166 = vmatprep.subr.bf16.mxu0 0
        %4167 = vmatpush1.bf16.msra.mxu0 0
        %4168 = vmatprep.subr.bf16.mxu0 0
        %4169 = vmatpush1.bf16.msra.mxu0 0
        %4170 = vmatprep.mubr.bf16.mxu0 %v4136
        %4171 = vmatmul.mubr.bf16.gmra.mrb[0].mxu0 %v4052
        %v4172 = vpop.f32.mrb[0].mxu0
        %v4173 = vadd.f32 0.0, %v4172
        %v4174 = vpop.f32.mrb[0].mxu0
        %v4175 = vpop.f32.mrb[0].mxu0
        %v4176 = vpop.f32.mrb[0].mxu0
        %4177 = vdwg.mxu0
        %v4178 = vadd.f32 %v4005, %v4173
        %s4179 = scalar_lea.vmem %s5, 5
        %v4180 = vld [vmem:[%s4179] sm:$0x1]
        %v4182 = vsel %vm3307, %v4180, 0
        %4184 = vmatprep.subr.bf16.mxu0 %v3303
        %4185 = vmatpush1.bf16.msra.mxu0 %v3302
        %4186 = vmatprep.subr.bf16.mxu0 %v3319
        %4187 = vmatpush1.bf16.msra.mxu0 %v3316
        %4188 = vmatprep.subr.bf16.mxu0 0
        %4189 = vmatpush1.bf16.msra.mxu0 0
        %4190 = vmatprep.subr.bf16.mxu0 0
        %4191 = vmatpush1.bf16.msra.mxu0 0
        %4192 = vmatprep.subr.bf16.mxu0 0
        %4193 = vmatpush1.bf16.msra.mxu0 0
        %4194 = vmatprep.subr.bf16.mxu0 0
        %4195 = vmatpush1.bf16.msra.mxu0 0
        %4196 = vmatprep.subr.bf16.mxu0 0
        %4197 = vmatpush1.bf16.msra.mxu0 0
        %4198 = vmatprep.subr.bf16.mxu0 0
        %4199 = vmatpush1.bf16.msra.mxu0 0
        %4200 = vmatprep.subr.bf16.mxu0 0
        %4201 = vmatpush1.bf16.msra.mxu0 0
        %4202 = vmatprep.subr.bf16.mxu0 0
        %4203 = vmatpush1.bf16.msra.mxu0 0
        %4204 = vmatprep.subr.bf16.mxu0 0
        %4205 = vmatpush1.bf16.msra.mxu0 0
        %4206 = vmatprep.subr.bf16.mxu0 0
        %4207 = vmatpush1.bf16.msra.mxu0 0
        %4208 = vmatprep.subr.bf16.mxu0 0
        %4209 = vmatpush1.bf16.msra.mxu0 0
        %4210 = vmatprep.subr.bf16.mxu0 0
        %4211 = vmatpush1.bf16.msra.mxu0 0
        %4212 = vmatprep.subr.bf16.mxu0 0
        %4213 = vmatpush1.bf16.msra.mxu0 0
        %4214 = vmatprep.subr.bf16.mxu0 0
        %4215 = vmatpush1.bf16.msra.mxu0 0
        %4216 = vmatprep.mubr.bf16.mxu0 0
        %4217 = vmatmul.mubr.bf16.gmra.mrb[0].mxu0 %v4182
        %v4218 = vpop.f32.mrb[0].mxu0
        %v4219 = vadd.f32 0.0, %v4218
        %v4220 = vpop.f32.mrb[0].mxu0
        %v4221 = vadd.f32 0.0, %v4220
        %v4222 = vpop.f32.mrb[0].mxu0
        %v4223 = vpop.f32.mrb[0].mxu0
        %4224 = vdwg.mxu0
        %v4225 = vpack.c.bf16 %v4219, %v4219
        %v4226 = vpack.c.bf16 %v4221, %v4221
        %s4227 = scalar_lea.vmem %s6, 400
        %v4228 = vld [vmem:[%s4227] sm:$0xf]
        %v4229 = vld [vmem:[%s4227 + $0x4] sm:$0xf]
        %v4230 = vld [vmem:[%s4227 + $0x8] sm:$0xf]
        %v4231 = vld [vmem:[%s4227 + $0xc] sm:$0xf]
        %v4232 = vld [vmem:[%s4227 + $0x10] sm:$0xf]
        %v4233 = vld [vmem:[%s4227 + $0x14] sm:$0xf]
        %v4234 = vld [vmem:[%s4227 + $0x18] sm:$0xf]
        %v4235 = vld [vmem:[%s4227 + $0x1c] sm:$0xf]
        %v4236 = vld [vmem:[%s4227 + $0x20] sm:$0xf]
        %v4237 = vld [vmem:[%s4227 + $0x24] sm:$0xf]
        %v4238 = vld [vmem:[%s4227 + $0x28] sm:$0xf]
        %v4239 = vld [vmem:[%s4227 + $0x2c] sm:$0xf]
        %v4240 = vld [vmem:[%s4227 + $0x30] sm:$0xf]
        %v4241 = vld [vmem:[%s4227 + $0x34] sm:$0xf]
        %v4242 = vld [vmem:[%s4227 + $0x38] sm:$0xf]
        %v4243 = vld [vmem:[%s4227 + $0x3c] sm:$0xf]
        %v4244 = vld [vmem:[%s4227 + $0x40] sm:$0xf]
        %v4245 = vld [vmem:[%s4227 + $0x44] sm:$0xf]
        %v4246 = vld [vmem:[%s4227 + $0x48] sm:$0xf]
        %v4247 = vld [vmem:[%s4227 + $0x4c] sm:$0xf]
        %v4268 = vunpack.c.l.b16 %v4228
        %v4269 = vunpack.c.l.b16 %v4229
        %v4270 = vunpack.c.l.b16 %v4230
        %v4271 = vunpack.c.l.b16 %v4231
        %v4272 = vunpack.c.l.b16 %v4232
        %v4273 = vunpack.c.l.b16 %v4233
        %v4274 = vunpack.c.l.b16 %v4234
        %v4275 = vunpack.c.l.b16 %v4235
        %v4276 = vunpack.c.l.b16 %v4236
        %v4277 = vunpack.c.l.b16 %v4237
        %v4278 = vunpack.c.l.b16 %v4238
        %v4279 = vunpack.c.l.b16 %v4239
        %v4280 = vunpack.c.l.b16 %v4240
        %v4281 = vunpack.c.l.b16 %v4241
        %v4282 = vunpack.c.l.b16 %v4242
        %v4283 = vunpack.c.l.b16 %v4243
        %v4284 = vunpack.c.l.b16 %v4244
        %v4285 = vunpack.c.l.b16 %v4245
        %v4286 = vunpack.c.l.b16 %v4246
        %v4287 = vunpack.c.l.b16 %v4247
        %v4288 = vpack.c.b16 %v4269, %v4268
        %v4289 = vpack.c.b16 %v4271, %v4270
        %v4290 = vpack.c.b16 %v4273, %v4272
        %v4291 = vpack.c.b16 %v4275, %v4274
        %v4292 = vpack.c.b16 %v4277, %v4276
        %v4293 = vpack.c.b16 %v4279, %v4278
        %v4294 = vpack.c.b16 %v4281, %v4280
        %v4295 = vpack.c.b16 %v4283, %v4282
        %v4296 = vpack.c.b16 %v4285, %v4284
        %v4297 = vpack.c.b16 %v4287, %v4286
        %v4309 = vsel %vm3513, %v4226, 0
        %4311 = vmatprep.subr.bf16.mxu0 0
        %4312 = vmatpush1.bf16.msra.mxu0 %v4288
        %4313 = vmatprep.subr.bf16.mxu0 0
        %4314 = vmatpush1.bf16.msra.mxu0 %v4289
        %4315 = vmatprep.subr.bf16.mxu0 0
        %4316 = vmatpush1.bf16.msra.mxu0 %v4290
        %4317 = vmatprep.subr.bf16.mxu0 0
        %4318 = vmatpush1.bf16.msra.mxu0 %v4291
        %4319 = vmatprep.subr.bf16.mxu0 0
        %4320 = vmatpush1.bf16.msra.mxu0 %v4292
        %4321 = vmatprep.subr.bf16.mxu0 0
        %4322 = vmatpush1.bf16.msra.mxu0 %v4293
        %4323 = vmatprep.subr.bf16.mxu0 0
        %4324 = vmatpush1.bf16.msra.mxu0 %v4294
        %4325 = vmatprep.subr.bf16.mxu0 0
        %4326 = vmatpush1.bf16.msra.mxu0 %v4295
        %4327 = vmatprep.subr.bf16.mxu0 0
        %4328 = vmatpush1.bf16.msra.mxu0 %v4296
        %4329 = vmatprep.subr.bf16.mxu0 0
        %4330 = vmatpush1.bf16.msra.mxu0 %v4297
        %4331 = vmatprep.subr.bf16.mxu0 0
        %4332 = vmatpush1.bf16.msra.mxu0 0
        %4333 = vmatprep.subr.bf16.mxu0 0
        %4334 = vmatpush1.bf16.msra.mxu0 0
        %4335 = vmatprep.subr.bf16.mxu0 0
        %4336 = vmatpush1.bf16.msra.mxu0 0
        %4337 = vmatprep.subr.bf16.mxu0 0
        %4338 = vmatpush1.bf16.msra.mxu0 0
        %4339 = vmatprep.subr.bf16.mxu0 0
        %4340 = vmatpush1.bf16.msra.mxu0 0
        %4341 = vmatprep.subr.bf16.mxu0 0
        %4342 = vmatpush1.bf16.msra.mxu0 0
        %4343 = vmatprep.mubr.bf16.mxu0 %v4309
        %4344 = vmatmul.mubr.bf16.gmra.mrb[0].mxu0 %v4225
        %v4345 = vpop.f32.mrb[0].mxu0
        %v4346 = vadd.f32 0.0, %v4345
        %v4347 = vpop.f32.mrb[0].mxu0
        %v4348 = vpop.f32.mrb[0].mxu0
        %v4349 = vpop.f32.mrb[0].mxu0
        %4350 = vdwg.mxu0
        %v4351 = vadd.f32 %v4178, %v4346
        %s4352 = scalar_lea.vmem %s5, 6
        %v4353 = vld [vmem:[%s4352] sm:$0x1]
        %v4355 = vsel %vm3307, %v4353, 0
        %4357 = vmatprep.subr.bf16.mxu0 %v3303
        %4358 = vmatpush1.bf16.msra.mxu0 %v3302
        %4359 = vmatprep.subr.bf16.mxu0 %v3319
        %4360 = vmatpush1.bf16.msra.mxu0 %v3316
        %4361 = vmatprep.subr.bf16.mxu0 0
        %4362 = vmatpush1.bf16.msra.mxu0 0
        %4363 = vmatprep.subr.bf16.mxu0 0
        %4364 = vmatpush1.bf16.msra.mxu0 0
        %4365 = vmatprep.subr.bf16.mxu0 0
        %4366 = vmatpush1.bf16.msra.mxu0 0
        %4367 = vmatprep.subr.bf16.mxu0 0
        %4368 = vmatpush1.bf16.msra.mxu0 0
        %4369 = vmatprep.subr.bf16.mxu0 0
        %4370 = vmatpush1.bf16.msra.mxu0 0
        %4371 = vmatprep.subr.bf16.mxu0 0
        %4372 = vmatpush1.bf16.msra.mxu0 0
        %4373 = vmatprep.subr.bf16.mxu0 0
        %4374 = vmatpush1.bf16.msra.mxu0 0
        %4375 = vmatprep.subr.bf16.mxu0 0
        %4376 = vmatpush1.bf16.msra.mxu0 0
        %4377 = vmatprep.subr.bf16.mxu0 0
        %4378 = vmatpush1.bf16.msra.mxu0 0
        %4379 = vmatprep.subr.bf16.mxu0 0
        %4380 = vmatpush1.bf16.msra.mxu0 0
        %4381 = vmatprep.subr.bf16.mxu0 0
        %4382 = vmatpush1.bf16.msra.mxu0 0
        %4383 = vmatprep.subr.bf16.mxu0 0
        %4384 = vmatpush1.bf16.msra.mxu0 0
        %4385 = vmatprep.subr.bf16.mxu0 0
        %4386 = vmatpush1.bf16.msra.mxu0 0
        %4387 = vmatprep.subr.bf16.mxu0 0
        %4388 = vmatpush1.bf16.msra.mxu0 0
        %4389 = vmatprep.mubr.bf16.mxu0 0
        %4390 = vmatmul.mubr.bf16.gmra.mrb[0].mxu0 %v4355
        %v4391 = vpop.f32.mrb[0].mxu0
        %v4392 = vadd.f32 0.0, %v4391
        %v4393 = vpop.f32.mrb[0].mxu0
        %v4394 = vadd.f32 0.0, %v4393
        %v4395 = vpop.f32.mrb[0].mxu0
        %v4396 = vpop.f32.mrb[0].mxu0
        %4397 = vdwg.mxu0
        %v4398 = vpack.c.bf16 %v4392, %v4392
        %v4399 = vpack.c.bf16 %v4394, %v4394
        %s4400 = scalar_lea.vmem %s6, 480
        %v4401 = vld [vmem:[%s4400] sm:$0xf]
        %v4402 = vld [vmem:[%s4400 + $0x4] sm:$0xf]
        %v4403 = vld [vmem:[%s4400 + $0x8] sm:$0xf]
        %v4404 = vld [vmem:[%s4400 + $0xc] sm:$0xf]
        %v4405 = vld [vmem:[%s4400 + $0x10] sm:$0xf]
        %v4406 = vld [vmem:[%s4400 + $0x14] sm:$0xf]
        %v4407 = vld [vmem:[%s4400 + $0x18] sm:$0xf]
        %v4408 = vld [vmem:[%s4400 + $0x1c] sm:$0xf]
        %v4409 = vld [vmem:[%s4400 + $0x20] sm:$0xf]
        %v4410 = vld [vmem:[%s4400 + $0x24] sm:$0xf]
        %v4411 = vld [vmem:[%s4400 + $0x28] sm:$0xf]
        %v4412 = vld [vmem:[%s4400 + $0x2c] sm:$0xf]
        %v4413 = vld [vmem:[%s4400 + $0x30] sm:$0xf]
        %v4414 = vld [vmem:[%s4400 + $0x34] sm:$0xf]
        %v4415 = vld [vmem:[%s4400 + $0x38] sm:$0xf]
        %v4416 = vld [vmem:[%s4400 + $0x3c] sm:$0xf]
        %v4417 = vld [vmem:[%s4400 + $0x40] sm:$0xf]
        %v4418 = vld [vmem:[%s4400 + $0x44] sm:$0xf]
        %v4419 = vld [vmem:[%s4400 + $0x48] sm:$0xf]
        %v4420 = vld [vmem:[%s4400 + $0x4c] sm:$0xf]
        %v4441 = vunpack.c.l.b16 %v4401
        %v4442 = vunpack.c.l.b16 %v4402
        %v4443 = vunpack.c.l.b16 %v4403
        %v4444 = vunpack.c.l.b16 %v4404
        %v4445 = vunpack.c.l.b16 %v4405
        %v4446 = vunpack.c.l.b16 %v4406
        %v4447 = vunpack.c.l.b16 %v4407
        %v4448 = vunpack.c.l.b16 %v4408
        %v4449 = vunpack.c.l.b16 %v4409
        %v4450 = vunpack.c.l.b16 %v4410
        %v4451 = vunpack.c.l.b16 %v4411
        %v4452 = vunpack.c.l.b16 %v4412
        %v4453 = vunpack.c.l.b16 %v4413
        %v4454 = vunpack.c.l.b16 %v4414
        %v4455 = vunpack.c.l.b16 %v4415
        %v4456 = vunpack.c.l.b16 %v4416
        %v4457 = vunpack.c.l.b16 %v4417
        %v4458 = vunpack.c.l.b16 %v4418
        %v4459 = vunpack.c.l.b16 %v4419
        %v4460 = vunpack.c.l.b16 %v4420
        %v4461 = vpack.c.b16 %v4442, %v4441
        %v4462 = vpack.c.b16 %v4444, %v4443
        %v4463 = vpack.c.b16 %v4446, %v4445
        %v4464 = vpack.c.b16 %v4448, %v4447
        %v4465 = vpack.c.b16 %v4450, %v4449
        %v4466 = vpack.c.b16 %v4452, %v4451
        %v4467 = vpack.c.b16 %v4454, %v4453
        %v4468 = vpack.c.b16 %v4456, %v4455
        %v4469 = vpack.c.b16 %v4458, %v4457
        %v4470 = vpack.c.b16 %v4460, %v4459
        %v4482 = vsel %vm3513, %v4399, 0
        %4484 = vmatprep.subr.bf16.mxu0 0
        %4485 = vmatpush1.bf16.msra.mxu0 %v4461
        %4486 = vmatprep.subr.bf16.mxu0 0
        %4487 = vmatpush1.bf16.msra.mxu0 %v4462
        %4488 = vmatprep.subr.bf16.mxu0 0
        %4489 = vmatpush1.bf16.msra.mxu0 %v4463
        %4490 = vmatprep.subr.bf16.mxu0 0
        %4491 = vmatpush1.bf16.msra.mxu0 %v4464
        %4492 = vmatprep.subr.bf16.mxu0 0
        %4493 = vmatpush1.bf16.msra.mxu0 %v4465
        %4494 = vmatprep.subr.bf16.mxu0 0
        %4495 = vmatpush1.bf16.msra.mxu0 %v4466
        %4496 = vmatprep.subr.bf16.mxu0 0
        %4497 = vmatpush1.bf16.msra.mxu0 %v4467
        %4498 = vmatprep.subr.bf16.mxu0 0
        %4499 = vmatpush1.bf16.msra.mxu0 %v4468
        %4500 = vmatprep.subr.bf16.mxu0 0
        %4501 = vmatpush1.bf16.msra.mxu0 %v4469
        %4502 = vmatprep.subr.bf16.mxu0 0
        %4503 = vmatpush1.bf16.msra.mxu0 %v4470
        %4504 = vmatprep.subr.bf16.mxu0 0
        %4505 = vmatpush1.bf16.msra.mxu0 0
        %4506 = vmatprep.subr.bf16.mxu0 0
        %4507 = vmatpush1.bf16.msra.mxu0 0
        %4508 = vmatprep.subr.bf16.mxu0 0
        %4509 = vmatpush1.bf16.msra.mxu0 0
        %4510 = vmatprep.subr.bf16.mxu0 0
        %4511 = vmatpush1.bf16.msra.mxu0 0
        %4512 = vmatprep.subr.bf16.mxu0 0
        %4513 = vmatpush1.bf16.msra.mxu0 0
        %4514 = vmatprep.subr.bf16.mxu0 0
        %4515 = vmatpush1.bf16.msra.mxu0 0
        %4516 = vmatprep.mubr.bf16.mxu0 %v4482
        %4517 = vmatmul.mubr.bf16.gmra.mrb[0].mxu0 %v4398
        %v4518 = vpop.f32.mrb[0].mxu0
        %v4519 = vadd.f32 0.0, %v4518
        %v4520 = vpop.f32.mrb[0].mxu0
        %v4521 = vpop.f32.mrb[0].mxu0
        %v4522 = vpop.f32.mrb[0].mxu0
        %4523 = vdwg.mxu0
        %v4524 = vadd.f32 %v4351, %v4519
        %s4525 = scalar_lea.vmem %s5, 7
        %v4526 = vld [vmem:[%s4525] sm:$0x1]
        %v4528 = vsel %vm3307, %v4526, 0
        %4530 = vmatprep.subr.bf16.mxu0 %v3303
        %4531 = vmatpush1.bf16.msra.mxu0 %v3302
        %4532 = vmatprep.subr.bf16.mxu0 %v3319
        %4533 = vmatpush1.bf16.msra.mxu0 %v3316
        %4534 = vmatprep.subr.bf16.mxu0 0
        %4535 = vmatpush1.bf16.msra.mxu0 0
        %4536 = vmatprep.subr.bf16.mxu0 0
        %4537 = vmatpush1.bf16.msra.mxu0 0
        %4538 = vmatprep.subr.bf16.mxu0 0
        %4539 = vmatpush1.bf16.msra.mxu0 0
        %4540 = vmatprep.subr.bf16.mxu0 0
        %4541 = vmatpush1.bf16.msra.mxu0 0
        %4542 = vmatprep.subr.bf16.mxu0 0
        %4543 = vmatpush1.bf16.msra.mxu0 0
        %4544 = vmatprep.subr.bf16.mxu0 0
        %4545 = vmatpush1.bf16.msra.mxu0 0
        %4546 = vmatprep.subr.bf16.mxu0 0
        %4547 = vmatpush1.bf16.msra.mxu0 0
        %4548 = vmatprep.subr.bf16.mxu0 0
        %4549 = vmatpush1.bf16.msra.mxu0 0
        %4550 = vmatprep.subr.bf16.mxu0 0
        %4551 = vmatpush1.bf16.msra.mxu0 0
        %4552 = vmatprep.subr.bf16.mxu0 0
        %4553 = vmatpush1.bf16.msra.mxu0 0
        %4554 = vmatprep.subr.bf16.mxu0 0
        %4555 = vmatpush1.bf16.msra.mxu0 0
        %4556 = vmatprep.subr.bf16.mxu0 0
        %4557 = vmatpush1.bf16.msra.mxu0 0
        %4558 = vmatprep.subr.bf16.mxu0 0
        %4559 = vmatpush1.bf16.msra.mxu0 0
        %4560 = vmatprep.subr.bf16.mxu0 0
        %4561 = vmatpush1.bf16.msra.mxu0 0
        %4562 = vmatprep.mubr.bf16.mxu0 0
        %4563 = vmatmul.mubr.bf16.gmra.mrb[0].mxu0 %v4528
        %v4564 = vpop.f32.mrb[0].mxu0
        %v4565 = vadd.f32 0.0, %v4564
        %v4566 = vpop.f32.mrb[0].mxu0
        %v4567 = vadd.f32 0.0, %v4566
        %v4568 = vpop.f32.mrb[0].mxu0
        %v4569 = vpop.f32.mrb[0].mxu0
        %4570 = vdwg.mxu0
        %v4571 = vpack.c.bf16 %v4565, %v4565
        %v4572 = vpack.c.bf16 %v4567, %v4567
        %s4573 = scalar_lea.vmem %s6, 560
        %v4574 = vld [vmem:[%s4573] sm:$0xf]
        %v4575 = vld [vmem:[%s4573 + $0x4] sm:$0xf]
        %v4576 = vld [vmem:[%s4573 + $0x8] sm:$0xf]
        %v4577 = vld [vmem:[%s4573 + $0xc] sm:$0xf]
        %v4578 = vld [vmem:[%s4573 + $0x10] sm:$0xf]
        %v4579 = vld [vmem:[%s4573 + $0x14] sm:$0xf]
        %v4580 = vld [vmem:[%s4573 + $0x18] sm:$0xf]
        %v4581 = vld [vmem:[%s4573 + $0x1c] sm:$0xf]
        %v4582 = vld [vmem:[%s4573 + $0x20] sm:$0xf]
        %v4583 = vld [vmem:[%s4573 + $0x24] sm:$0xf]
        %v4584 = vld [vmem:[%s4573 + $0x28] sm:$0xf]
        %v4585 = vld [vmem:[%s4573 + $0x2c] sm:$0xf]
        %v4586 = vld [vmem:[%s4573 + $0x30] sm:$0xf]
        %v4587 = vld [vmem:[%s4573 + $0x34] sm:$0xf]
        %v4588 = vld [vmem:[%s4573 + $0x38] sm:$0xf]
        %v4589 = vld [vmem:[%s4573 + $0x3c] sm:$0xf]
        %v4590 = vld [vmem:[%s4573 + $0x40] sm:$0xf]
        %v4591 = vld [vmem:[%s4573 + $0x44] sm:$0xf]
        %v4592 = vld [vmem:[%s4573 + $0x48] sm:$0xf]
        %v4593 = vld [vmem:[%s4573 + $0x4c] sm:$0xf]
        %v4614 = vunpack.c.l.b16 %v4574
        %v4615 = vunpack.c.l.b16 %v4575
        %v4616 = vunpack.c.l.b16 %v4576
        %v4617 = vunpack.c.l.b16 %v4577
        %v4618 = vunpack.c.l.b16 %v4578
        %v4619 = vunpack.c.l.b16 %v4579
        %v4620 = vunpack.c.l.b16 %v4580
        %v4621 = vunpack.c.l.b16 %v4581
        %v4622 = vunpack.c.l.b16 %v4582
        %v4623 = vunpack.c.l.b16 %v4583
        %v4624 = vunpack.c.l.b16 %v4584
        %v4625 = vunpack.c.l.b16 %v4585
        %v4626 = vunpack.c.l.b16 %v4586
        %v4627 = vunpack.c.l.b16 %v4587
        %v4628 = vunpack.c.l.b16 %v4588
        %v4629 = vunpack.c.l.b16 %v4589
        %v4630 = vunpack.c.l.b16 %v4590
        %v4631 = vunpack.c.l.b16 %v4591
        %v4632 = vunpack.c.l.b16 %v4592
        %v4633 = vunpack.c.l.b16 %v4593
        %v4634 = vpack.c.b16 %v4615, %v4614
        %v4635 = vpack.c.b16 %v4617, %v4616
        %v4636 = vpack.c.b16 %v4619, %v4618
        %v4637 = vpack.c.b16 %v4621, %v4620
        %v4638 = vpack.c.b16 %v4623, %v4622
        %v4639 = vpack.c.b16 %v4625, %v4624
        %v4640 = vpack.c.b16 %v4627, %v4626
        %v4641 = vpack.c.b16 %v4629, %v4628
        %v4642 = vpack.c.b16 %v4631, %v4630
        %v4643 = vpack.c.b16 %v4633, %v4632
        %v4655 = vsel %vm3513, %v4572, 0
        %4657 = vmatprep.subr.bf16.mxu0 0
        %4658 = vmatpush1.bf16.msra.mxu0 %v4634
        %4659 = vmatprep.subr.bf16.mxu0 0
        %4660 = vmatpush1.bf16.msra.mxu0 %v4635
        %4661 = vmatprep.subr.bf16.mxu0 0
        %4662 = vmatpush1.bf16.msra.mxu0 %v4636
        %4663 = vmatprep.subr.bf16.mxu0 0
        %4664 = vmatpush1.bf16.msra.mxu0 %v4637
        %4665 = vmatprep.subr.bf16.mxu0 0
        %4666 = vmatpush1.bf16.msra.mxu0 %v4638
        %4667 = vmatprep.subr.bf16.mxu0 0
        %4668 = vmatpush1.bf16.msra.mxu0 %v4639
        %4669 = vmatprep.subr.bf16.mxu0 0
        %4670 = vmatpush1.bf16.msra.mxu0 %v4640
        %4671 = vmatprep.subr.bf16.mxu0 0
        %4672 = vmatpush1.bf16.msra.mxu0 %v4641
        %4673 = vmatprep.subr.bf16.mxu0 0
        %4674 = vmatpush1.bf16.msra.mxu0 %v4642
        %4675 = vmatprep.subr.bf16.mxu0 0
        %4676 = vmatpush1.bf16.msra.mxu0 %v4643
        %4677 = vmatprep.subr.bf16.mxu0 0
        %4678 = vmatpush1.bf16.msra.mxu0 0
        %4679 = vmatprep.subr.bf16.mxu0 0
        %4680 = vmatpush1.bf16.msra.mxu0 0
        %4681 = vmatprep.subr.bf16.mxu0 0
        %4682 = vmatpush1.bf16.msra.mxu0 0
        %4683 = vmatprep.subr.bf16.mxu0 0
        %4684 = vmatpush1.bf16.msra.mxu0 0
        %4685 = vmatprep.subr.bf16.mxu0 0
        %4686 = vmatpush1.bf16.msra.mxu0 0
        %4687 = vmatprep.subr.bf16.mxu0 0
        %4688 = vmatpush1.bf16.msra.mxu0 0
        %4689 = vmatprep.mubr.bf16.mxu0 %v4655
        %4690 = vmatmul.mubr.bf16.gmra.mrb[0].mxu0 %v4571
        %v4691 = vpop.f32.mrb[0].mxu0
        %v4692 = vadd.f32 0.0, %v4691
        %v4693 = vpop.f32.mrb[0].mxu0
        %v4694 = vpop.f32.mrb[0].mxu0
        %v4695 = vpop.f32.mrb[0].mxu0
        %4696 = vdwg.mxu0
        %v4697 = vadd.f32 %v4524, %v4692
        %s4698 = scalar_lea.vmem %s5, 8
        %v4699 = vld [vmem:[%s4698] sm:$0x1]
        %v4701 = vsel %vm3307, %v4699, 0
        %4703 = vmatprep.subr.bf16.mxu0 %v3303
        %4704 = vmatpush1.bf16.msra.mxu0 %v3302
        %4705 = vmatprep.subr.bf16.mxu0 %v3319
        %4706 = vmatpush1.bf16.msra.mxu0 %v3316
        %4707 = vmatprep.subr.bf16.mxu0 0
        %4708 = vmatpush1.bf16.msra.mxu0 0
        %4709 = vmatprep.subr.bf16.mxu0 0
        %4710 = vmatpush1.bf16.msra.mxu0 0
        %4711 = vmatprep.subr.bf16.mxu0 0
        %4712 = vmatpush1.bf16.msra.mxu0 0
        %4713 = vmatprep.subr.bf16.mxu0 0
        %4714 = vmatpush1.bf16.msra.mxu0 0
        %4715 = vmatprep.subr.bf16.mxu0 0
        %4716 = vmatpush1.bf16.msra.mxu0 0
        %4717 = vmatprep.subr.bf16.mxu0 0
        %4718 = vmatpush1.bf16.msra.mxu0 0
        %4719 = vmatprep.subr.bf16.mxu0 0
        %4720 = vmatpush1.bf16.msra.mxu0 0
        %4721 = vmatprep.subr.bf16.mxu0 0
        %4722 = vmatpush1.bf16.msra.mxu0 0
        %4723 = vmatprep.subr.bf16.mxu0 0
        %4724 = vmatpush1.bf16.msra.mxu0 0
        %4725 = vmatprep.subr.bf16.mxu0 0
        %4726 = vmatpush1.bf16.msra.mxu0 0
        %4727 = vmatprep.subr.bf16.mxu0 0
        %4728 = vmatpush1.bf16.msra.mxu0 0
        %4729 = vmatprep.subr.bf16.mxu0 0
        %4730 = vmatpush1.bf16.msra.mxu0 0
        %4731 = vmatprep.subr.bf16.mxu0 0
        %4732 = vmatpush1.bf16.msra.mxu0 0
        %4733 = vmatprep.subr.bf16.mxu0 0
        %4734 = vmatpush1.bf16.msra.mxu0 0
        %4735 = vmatprep.mubr.bf16.mxu0 0
        %4736 = vmatmul.mubr.bf16.gmra.mrb[0].mxu0 %v4701
        %v4737 = vpop.f32.mrb[0].mxu0
        %v4738 = vadd.f32 0.0, %v4737
        %v4739 = vpop.f32.mrb[0].mxu0
        %v4740 = vadd.f32 0.0, %v4739
        %v4741 = vpop.f32.mrb[0].mxu0
        %v4742 = vpop.f32.mrb[0].mxu0
        %4743 = vdwg.mxu0
        %v4744 = vpack.c.bf16 %v4738, %v4738
        %v4745 = vpack.c.bf16 %v4740, %v4740
        %s4746 = scalar_lea.vmem %s6, 640
        %v4747 = vld [vmem:[%s4746] sm:$0xf]
        %v4748 = vld [vmem:[%s4746 + $0x4] sm:$0xf]
        %v4749 = vld [vmem:[%s4746 + $0x8] sm:$0xf]
        %v4750 = vld [vmem:[%s4746 + $0xc] sm:$0xf]
        %v4751 = vld [vmem:[%s4746 + $0x10] sm:$0xf]
        %v4752 = vld [vmem:[%s4746 + $0x14] sm:$0xf]
        %v4753 = vld [vmem:[%s4746 + $0x18] sm:$0xf]
        %v4754 = vld [vmem:[%s4746 + $0x1c] sm:$0xf]
        %v4755 = vld [vmem:[%s4746 + $0x20] sm:$0xf]
        %v4756 = vld [vmem:[%s4746 + $0x24] sm:$0xf]
        %v4757 = vld [vmem:[%s4746 + $0x28] sm:$0xf]
        %v4758 = vld [vmem:[%s4746 + $0x2c] sm:$0xf]
        %v4759 = vld [vmem:[%s4746 + $0x30] sm:$0xf]
        %v4760 = vld [vmem:[%s4746 + $0x34] sm:$0xf]
        %v4761 = vld [vmem:[%s4746 + $0x38] sm:$0xf]
        %v4762 = vld [vmem:[%s4746 + $0x3c] sm:$0xf]
        %v4763 = vld [vmem:[%s4746 + $0x40] sm:$0xf]
        %v4764 = vld [vmem:[%s4746 + $0x44] sm:$0xf]
        %v4765 = vld [vmem:[%s4746 + $0x48] sm:$0xf]
        %v4766 = vld [vmem:[%s4746 + $0x4c] sm:$0xf]
        %v4787 = vunpack.c.l.b16 %v4747
        %v4788 = vunpack.c.l.b16 %v4748
        %v4789 = vunpack.c.l.b16 %v4749
        %v4790 = vunpack.c.l.b16 %v4750
        %v4791 = vunpack.c.l.b16 %v4751
        %v4792 = vunpack.c.l.b16 %v4752
        %v4793 = vunpack.c.l.b16 %v4753
        %v4794 = vunpack.c.l.b16 %v4754
        %v4795 = vunpack.c.l.b16 %v4755
        %v4796 = vunpack.c.l.b16 %v4756
        %v4797 = vunpack.c.l.b16 %v4757
        %v4798 = vunpack.c.l.b16 %v4758
        %v4799 = vunpack.c.l.b16 %v4759
        %v4800 = vunpack.c.l.b16 %v4760
        %v4801 = vunpack.c.l.b16 %v4761
        %v4802 = vunpack.c.l.b16 %v4762
        %v4803 = vunpack.c.l.b16 %v4763
        %v4804 = vunpack.c.l.b16 %v4764
        %v4805 = vunpack.c.l.b16 %v4765
        %v4806 = vunpack.c.l.b16 %v4766
        %v4807 = vpack.c.b16 %v4788, %v4787
        %v4808 = vpack.c.b16 %v4790, %v4789
        %v4809 = vpack.c.b16 %v4792, %v4791
        %v4810 = vpack.c.b16 %v4794, %v4793
        %v4811 = vpack.c.b16 %v4796, %v4795
        %v4812 = vpack.c.b16 %v4798, %v4797
        %v4813 = vpack.c.b16 %v4800, %v4799
        %v4814 = vpack.c.b16 %v4802, %v4801
        %v4815 = vpack.c.b16 %v4804, %v4803
        %v4816 = vpack.c.b16 %v4806, %v4805
        %v4828 = vsel %vm3513, %v4745, 0
        %4830 = vmatprep.subr.bf16.mxu0 0
        %4831 = vmatpush1.bf16.msra.mxu0 %v4807
        %4832 = vmatprep.subr.bf16.mxu0 0
        %4833 = vmatpush1.bf16.msra.mxu0 %v4808
        %4834 = vmatprep.subr.bf16.mxu0 0
        %4835 = vmatpush1.bf16.msra.mxu0 %v4809
        %4836 = vmatprep.subr.bf16.mxu0 0
        %4837 = vmatpush1.bf16.msra.mxu0 %v4810
        %4838 = vmatprep.subr.bf16.mxu0 0
        %4839 = vmatpush1.bf16.msra.mxu0 %v4811
        %4840 = vmatprep.subr.bf16.mxu0 0
        %4841 = vmatpush1.bf16.msra.mxu0 %v4812
        %4842 = vmatprep.subr.bf16.mxu0 0
        %4843 = vmatpush1.bf16.msra.mxu0 %v4813
        %4844 = vmatprep.subr.bf16.mxu0 0
        %4845 = vmatpush1.bf16.msra.mxu0 %v4814
        %4846 = vmatprep.subr.bf16.mxu0 0
        %4847 = vmatpush1.bf16.msra.mxu0 %v4815
        %4848 = vmatprep.subr.bf16.mxu0 0
        %4849 = vmatpush1.bf16.msra.mxu0 %v4816
        %4850 = vmatprep.subr.bf16.mxu0 0
        %4851 = vmatpush1.bf16.msra.mxu0 0
        %4852 = vmatprep.subr.bf16.mxu0 0
        %4853 = vmatpush1.bf16.msra.mxu0 0
        %4854 = vmatprep.subr.bf16.mxu0 0
        %4855 = vmatpush1.bf16.msra.mxu0 0
        %4856 = vmatprep.subr.bf16.mxu0 0
        %4857 = vmatpush1.bf16.msra.mxu0 0
        %4858 = vmatprep.subr.bf16.mxu0 0
        %4859 = vmatpush1.bf16.msra.mxu0 0
        %4860 = vmatprep.subr.bf16.mxu0 0
        %4861 = vmatpush1.bf16.msra.mxu0 0
        %4862 = vmatprep.mubr.bf16.mxu0 %v4828
        %4863 = vmatmul.mubr.bf16.gmra.mrb[0].mxu0 %v4744
        %v4864 = vpop.f32.mrb[0].mxu0
        %v4865 = vadd.f32 0.0, %v4864
        %v4866 = vpop.f32.mrb[0].mxu0
        %v4867 = vpop.f32.mrb[0].mxu0
        %v4868 = vpop.f32.mrb[0].mxu0
        %4869 = vdwg.mxu0
        %v4870 = vadd.f32 %v4697, %v4865
        %s4871 = scalar_lea.vmem %s5, 9
        %v4872 = vld [vmem:[%s4871] sm:$0x1]
        %v4874 = vsel %vm3307, %v4872, 0
        %4876 = vmatprep.subr.bf16.mxu0 %v3303
        %4877 = vmatpush1.bf16.msra.mxu0 %v3302
        %4878 = vmatprep.subr.bf16.mxu0 %v3319
        %4879 = vmatpush1.bf16.msra.mxu0 %v3316
        %4880 = vmatprep.subr.bf16.mxu0 0
        %4881 = vmatpush1.bf16.msra.mxu0 0
        %4882 = vmatprep.subr.bf16.mxu0 0
        %4883 = vmatpush1.bf16.msra.mxu0 0
        %4884 = vmatprep.subr.bf16.mxu0 0
        %4885 = vmatpush1.bf16.msra.mxu0 0
        %4886 = vmatprep.subr.bf16.mxu0 0
        %4887 = vmatpush1.bf16.msra.mxu0 0
        %4888 = vmatprep.subr.bf16.mxu0 0
        %4889 = vmatpush1.bf16.msra.mxu0 0
        %4890 = vmatprep.subr.bf16.mxu0 0
        %4891 = vmatpush1.bf16.msra.mxu0 0
        %4892 = vmatprep.subr.bf16.mxu0 0
        %4893 = vmatpush1.bf16.msra.mxu0 0
        %4894 = vmatprep.subr.bf16.mxu0 0
        %4895 = vmatpush1.bf16.msra.mxu0 0
        %4896 = vmatprep.subr.bf16.mxu0 0
        %4897 = vmatpush1.bf16.msra.mxu0 0
        %4898 = vmatprep.subr.bf16.mxu0 0
        %4899 = vmatpush1.bf16.msra.mxu0 0
        %4900 = vmatprep.subr.bf16.mxu0 0
        %4901 = vmatpush1.bf16.msra.mxu0 0
        %4902 = vmatprep.subr.bf16.mxu0 0
        %4903 = vmatpush1.bf16.msra.mxu0 0
        %4904 = vmatprep.subr.bf16.mxu0 0
        %4905 = vmatpush1.bf16.msra.mxu0 0
        %4906 = vmatprep.subr.bf16.mxu0 0
        %4907 = vmatpush1.bf16.msra.mxu0 0
        %4908 = vmatprep.mubr.bf16.mxu0 0
        %4909 = vmatmul.mubr.bf16.gmra.mrb[0].mxu0 %v4874
        %v4910 = vpop.f32.mrb[0].mxu0
        %v4911 = vadd.f32 0.0, %v4910
        %v4912 = vpop.f32.mrb[0].mxu0
        %v4913 = vadd.f32 0.0, %v4912
        %v4914 = vpop.f32.mrb[0].mxu0
        %v4915 = vpop.f32.mrb[0].mxu0
        %4916 = vdwg.mxu0
        %v4917 = vpack.c.bf16 %v4911, %v4911
        %v4918 = vpack.c.bf16 %v4913, %v4913
        %s4919 = scalar_lea.vmem %s6, 720
        %v4920 = vld [vmem:[%s4919] sm:$0xf]
        %v4921 = vld [vmem:[%s4919 + $0x4] sm:$0xf]
        %v4922 = vld [vmem:[%s4919 + $0x8] sm:$0xf]
        %v4923 = vld [vmem:[%s4919 + $0xc] sm:$0xf]
        %v4924 = vld [vmem:[%s4919 + $0x10] sm:$0xf]
        %v4925 = vld [vmem:[%s4919 + $0x14] sm:$0xf]
        %v4926 = vld [vmem:[%s4919 + $0x18] sm:$0xf]
        %v4927 = vld [vmem:[%s4919 + $0x1c] sm:$0xf]
        %v4928 = vld [vmem:[%s4919 + $0x20] sm:$0xf]
        %v4929 = vld [vmem:[%s4919 + $0x24] sm:$0xf]
        %v4930 = vld [vmem:[%s4919 + $0x28] sm:$0xf]
        %v4931 = vld [vmem:[%s4919 + $0x2c] sm:$0xf]
        %v4932 = vld [vmem:[%s4919 + $0x30] sm:$0xf]
        %v4933 = vld [vmem:[%s4919 + $0x34] sm:$0xf]
        %v4934 = vld [vmem:[%s4919 + $0x38] sm:$0xf]
        %v4935 = vld [vmem:[%s4919 + $0x3c] sm:$0xf]
        %v4936 = vld [vmem:[%s4919 + $0x40] sm:$0xf]
        %v4937 = vld [vmem:[%s4919 + $0x44] sm:$0xf]
        %v4938 = vld [vmem:[%s4919 + $0x48] sm:$0xf]
        %v4939 = vld [vmem:[%s4919 + $0x4c] sm:$0xf]
        %v4960 = vunpack.c.l.b16 %v4920
        %v4961 = vunpack.c.l.b16 %v4921
        %v4962 = vunpack.c.l.b16 %v4922
        %v4963 = vunpack.c.l.b16 %v4923
        %v4964 = vunpack.c.l.b16 %v4924
        %v4965 = vunpack.c.l.b16 %v4925
        %v4966 = vunpack.c.l.b16 %v4926
        %v4967 = vunpack.c.l.b16 %v4927
        %v4968 = vunpack.c.l.b16 %v4928
        %v4969 = vunpack.c.l.b16 %v4929
        %v4970 = vunpack.c.l.b16 %v4930
        %v4971 = vunpack.c.l.b16 %v4931
        %v4972 = vunpack.c.l.b16 %v4932
        %v4973 = vunpack.c.l.b16 %v4933
        %v4974 = vunpack.c.l.b16 %v4934
        %v4975 = vunpack.c.l.b16 %v4935
        %v4976 = vunpack.c.l.b16 %v4936
        %v4977 = vunpack.c.l.b16 %v4937
        %v4978 = vunpack.c.l.b16 %v4938
        %v4979 = vunpack.c.l.b16 %v4939
        %v4980 = vpack.c.b16 %v4961, %v4960
        %v4981 = vpack.c.b16 %v4963, %v4962
        %v4982 = vpack.c.b16 %v4965, %v4964
        %v4983 = vpack.c.b16 %v4967, %v4966
        %v4984 = vpack.c.b16 %v4969, %v4968
        %v4985 = vpack.c.b16 %v4971, %v4970
        %v4986 = vpack.c.b16 %v4973, %v4972
        %v4987 = vpack.c.b16 %v4975, %v4974
        %v4988 = vpack.c.b16 %v4977, %v4976
        %v4989 = vpack.c.b16 %v4979, %v4978
        %v5001 = vsel %vm3513, %v4918, 0
        %5003 = vmatprep.subr.bf16.mxu0 0
        %5004 = vmatpush1.bf16.msra.mxu0 %v4980
        %5005 = vmatprep.subr.bf16.mxu0 0
        %5006 = vmatpush1.bf16.msra.mxu0 %v4981
        %5007 = vmatprep.subr.bf16.mxu0 0
        %5008 = vmatpush1.bf16.msra.mxu0 %v4982
        %5009 = vmatprep.subr.bf16.mxu0 0
        %5010 = vmatpush1.bf16.msra.mxu0 %v4983
        %5011 = vmatprep.subr.bf16.mxu0 0
        %5012 = vmatpush1.bf16.msra.mxu0 %v4984
        %5013 = vmatprep.subr.bf16.mxu0 0
        %5014 = vmatpush1.bf16.msra.mxu0 %v4985
        %5015 = vmatprep.subr.bf16.mxu0 0
        %5016 = vmatpush1.bf16.msra.mxu0 %v4986
        %5017 = vmatprep.subr.bf16.mxu0 0
        %5018 = vmatpush1.bf16.msra.mxu0 %v4987
        %5019 = vmatprep.subr.bf16.mxu0 0
        %5020 = vmatpush1.bf16.msra.mxu0 %v4988
        %5021 = vmatprep.subr.bf16.mxu0 0
        %5022 = vmatpush1.bf16.msra.mxu0 %v4989
        %5023 = vmatprep.subr.bf16.mxu0 0
        %5024 = vmatpush1.bf16.msra.mxu0 0
        %5025 = vmatprep.subr.bf16.mxu0 0
        %5026 = vmatpush1.bf16.msra.mxu0 0
        %5027 = vmatprep.subr.bf16.mxu0 0
        %5028 = vmatpush1.bf16.msra.mxu0 0
        %5029 = vmatprep.subr.bf16.mxu0 0
        %5030 = vmatpush1.bf16.msra.mxu0 0
        %5031 = vmatprep.subr.bf16.mxu0 0
        %5032 = vmatpush1.bf16.msra.mxu0 0
        %5033 = vmatprep.subr.bf16.mxu0 0
        %5034 = vmatpush1.bf16.msra.mxu0 0
        %5035 = vmatprep.mubr.bf16.mxu0 %v5001
        %5036 = vmatmul.mubr.bf16.gmra.mrb[0].mxu0 %v4917
        %v5037 = vpop.f32.mrb[0].mxu0
        %v5038 = vadd.f32 0.0, %v5037
        %v5039 = vpop.f32.mrb[0].mxu0
        %v5040 = vpop.f32.mrb[0].mxu0
        %v5041 = vpop.f32.mrb[0].mxu0
        %5042 = vdwg.mxu0
        %v5043 = vadd.f32 %v4870, %v5038
        %v5044 = vld [vmem:[%s7] sm:$0x1]
        %v5045 = vadd.f32 %v5043, %v5044
        %v5046 = vmax.f32 %v5045, 0.0
        %v5047 = vpack.c.bf16 %v5046, %v5046
        %v5048 = vld [vmem:[%s8] sm:$0xf]
        %v5049 = vld [vmem:[%s8 + $0x4] sm:$0xf]
        %v5050 = vld [vmem:[%s8 + $0x8] sm:$0xf]
        %v5051 = vld [vmem:[%s8 + $0xc] sm:$0xf]
        %v5052 = vld [vmem:[%s8 + $0x10] sm:$0xf]
        %v5053 = vld [vmem:[%s8 + $0x14] sm:$0xf]
        %v5054 = vld [vmem:[%s8 + $0x18] sm:$0xf]
        %v5055 = vld [vmem:[%s8 + $0x1c] sm:$0xf]
        %v5056 = vld [vmem:[%s8 + $0x20] sm:$0xf]
        %v5057 = vld [vmem:[%s8 + $0x24] sm:$0xf]
        %v5058 = vld [vmem:[%s8 + $0x28] sm:$0xf]
        %v5059 = vld [vmem:[%s8 + $0x2c] sm:$0xf]
        %v5060 = vld [vmem:[%s8 + $0x30] sm:$0xf]
        %v5061 = vld [vmem:[%s8 + $0x34] sm:$0xf]
        %v5062 = vld [vmem:[%s8 + $0x38] sm:$0xf]
        %v5063 = vld [vmem:[%s9] sm:$0x1]
        %v5079 = vunpack.c.l.b16 %v5048
        %v5080 = vunpack.c.l.b16 %v5049
        %v5081 = vunpack.c.l.b16 %v5050
        %v5082 = vunpack.c.l.b16 %v5051
        %v5083 = vunpack.c.l.b16 %v5052
        %v5084 = vunpack.c.l.b16 %v5053
        %v5085 = vunpack.c.l.b16 %v5054
        %v5086 = vunpack.c.l.b16 %v5055
        %v5087 = vunpack.c.l.b16 %v5056
        %v5088 = vunpack.c.l.b16 %v5057
        %v5089 = vunpack.c.l.b16 %v5058
        %v5090 = vunpack.c.l.b16 %v5059
        %v5091 = vunpack.c.l.b16 %v5060
        %v5092 = vunpack.c.l.b16 %v5061
        %v5093 = vunpack.c.l.b16 %v5062
        %v5094 = vpack.c.b16 %v5080, %v5079
        %v5095 = vpack.c.b16 %v5082, %v5081
        %v5096 = vpack.c.b16 %v5084, %v5083
        %v5097 = vpack.c.b16 %v5086, %v5085
        %v5098 = vpack.c.b16 %v5088, %v5087
        %v5099 = vpack.c.b16 %v5090, %v5089
        %v5100 = vpack.c.b16 %v5092, %v5091
        %v5101 = vpack.c.b16 %v5093, %v5093
        %vm5109 = vcmask 982016
        %v5111 = vsel %vm5109, %v5047, 0
        %v5114 = vsel %vm1359, %v5101, 0
        %5116 = vmatprep.subr.bf16.mxu0 0
        %5117 = vmatpush1.bf16.msra.mxu0 %v5094
        %5118 = vmatprep.subr.bf16.mxu0 0
        %5119 = vmatpush1.bf16.msra.mxu0 %v5095
        %5120 = vmatprep.subr.bf16.mxu0 0
        %5121 = vmatpush1.bf16.msra.mxu0 %v5096
        %5122 = vmatprep.subr.bf16.mxu0 0
        %5123 = vmatpush1.bf16.msra.mxu0 %v5097
        %5124 = vmatprep.subr.bf16.mxu0 0
        %5125 = vmatpush1.bf16.msra.mxu0 %v5098
        %5126 = vmatprep.subr.bf16.mxu0 0
        %5127 = vmatpush1.bf16.msra.mxu0 %v5099
        %5128 = vmatprep.subr.bf16.mxu0 0
        %5129 = vmatpush1.bf16.msra.mxu0 %v5100
        %5130 = vmatprep.subr.bf16.mxu0 0
        %5131 = vmatpush1.bf16.msra.mxu0 %v5114
        %5132 = vmatprep.subr.bf16.mxu0 0
        %5133 = vmatpush1.bf16.msra.mxu0 0
        %5134 = vmatprep.subr.bf16.mxu0 0
        %5135 = vmatpush1.bf16.msra.mxu0 0
        %5136 = vmatprep.subr.bf16.mxu0 0
        %5137 = vmatpush1.bf16.msra.mxu0 0
        %5138 = vmatprep.subr.bf16.mxu0 0
        %5139 = vmatpush1.bf16.msra.mxu0 0
        %5140 = vmatprep.subr.bf16.mxu0 0
        %5141 = vmatpush1.bf16.msra.mxu0 0
        %5142 = vmatprep.subr.bf16.mxu0 0
        %5143 = vmatpush1.bf16.msra.mxu0 0
        %5144 = vmatprep.subr.bf16.mxu0 0
        %5145 = vmatpush1.bf16.msra.mxu0 0
        %5146 = vmatprep.subr.bf16.mxu0 0
        %5147 = vmatpush1.bf16.msra.mxu0 0
        %5148 = vmatprep.mubr.bf16.mxu0 0
        %5149 = vmatmul.mubr.bf16.gmra.mrb[0].mxu0 %v5111
        %v5150 = vpop.f32.mrb[0].mxu0
        %v5151 = vadd.f32 %v5063, %v5150
        %v5152 = vpop.f32.mrb[0].mxu0
        %v5153 = vpop.f32.mrb[0].mxu0
        %v5154 = vpop.f32.mrb[0].mxu0
        %5155 = vdwg.mxu0
        %v5156 = vmax.f32 %v5151, 0.0
        %v5157 = vpack.c.bf16 %v5156, %v5156
        %v5158 = vld [vmem:[%s10] sm:$0xf]
        %v5159 = vld [vmem:[%s10 + $0x4] sm:$0xf]
        %v5160 = vld [vmem:[%s10 + $0x8] sm:$0xf]
        %v5161 = vld [vmem:[%s10 + $0xc] sm:$0xf]
        %v5162 = vld [vmem:[%s10 + $0x10] sm:$0xf]
        %v5163 = vld [vmem:[%s10 + $0x14] sm:$0xf]
        %v5164 = vld [vmem:[%s10 + $0x18] sm:$0xf]
        %v5165 = vld [vmem:[%s10 + $0x1c] sm:$0xf]
        %v5166 = vld [vmem:[%s10 + $0x20] sm:$0xf]
        %v5167 = vld [vmem:[%s10 + $0x24] sm:$0xf]
        %v5168 = vld [vmem:[%s10 + $0x28] sm:$0x3]
        %v5169 = vld [vmem:[%s11] sm:$0x1]
        %v5181 = vunpack.c.l.b16 %v5158
        %v5182 = vunpack.c.l.b16 %v5159
        %v5183 = vunpack.c.l.b16 %v5160
        %v5184 = vunpack.c.l.b16 %v5161
        %v5185 = vunpack.c.l.b16 %v5162
        %v5186 = vunpack.c.l.b16 %v5163
        %v5187 = vunpack.c.l.b16 %v5164
        %v5188 = vunpack.c.l.b16 %v5165
        %v5189 = vunpack.c.l.b16 %v5166
        %v5190 = vunpack.c.l.b16 %v5167
        %v5191 = vunpack.c.l.b16 %v5168
        %v5192 = vpack.c.b16 %v5182, %v5181
        %v5193 = vpack.c.b16 %v5184, %v5183
        %v5194 = vpack.c.b16 %v5186, %v5185
        %v5195 = vpack.c.b16 %v5188, %v5187
        %v5196 = vpack.c.b16 %v5190, %v5189
        %v5197 = vpack.c.b16 %v5191, %v5191
        %vm5203 = vcmask 687104
        %v5205 = vsel %vm5203, %v5157, 0
        %v5208 = vsel %vm3312, %v5197, 0
        %5210 = vmatprep.subr.bf16.mxu0 0
        %5211 = vmatpush1.bf16.msra.mxu0 %v5192
        %5212 = vmatprep.subr.bf16.mxu0 0
        %5213 = vmatpush1.bf16.msra.mxu0 %v5193
        %5214 = vmatprep.subr.bf16.mxu0 0
        %5215 = vmatpush1.bf16.msra.mxu0 %v5194
        %5216 = vmatprep.subr.bf16.mxu0 0
        %5217 = vmatpush1.bf16.msra.mxu0 %v5195
        %5218 = vmatprep.subr.bf16.mxu0 0
        %5219 = vmatpush1.bf16.msra.mxu0 %v5196
        %5220 = vmatprep.subr.bf16.mxu0 0
        %5221 = vmatpush1.bf16.msra.mxu0 %v5208
        %5222 = vmatprep.subr.bf16.mxu0 0
        %5223 = vmatpush1.bf16.msra.mxu0 0
        %5224 = vmatprep.subr.bf16.mxu0 0
        %5225 = vmatpush1.bf16.msra.mxu0 0
        %5226 = vmatprep.subr.bf16.mxu0 0
        %5227 = vmatpush1.bf16.msra.mxu0 0
        %5228 = vmatprep.subr.bf16.mxu0 0
        %5229 = vmatpush1.bf16.msra.mxu0 0
        %5230 = vmatprep.subr.bf16.mxu0 0
        %5231 = vmatpush1.bf16.msra.mxu0 0
        %5232 = vmatprep.subr.bf16.mxu0 0
        %5233 = vmatpush1.bf16.msra.mxu0 0
        %5234 = vmatprep.subr.bf16.mxu0 0
        %5235 = vmatpush1.bf16.msra.mxu0 0
        %5236 = vmatprep.subr.bf16.mxu0 0
        %5237 = vmatpush1.bf16.msra.mxu0 0
        %5238 = vmatprep.subr.bf16.mxu0 0
        %5239 = vmatpush1.bf16.msra.mxu0 0
        %5240 = vmatprep.subr.bf16.mxu0 0
        %5241 = vmatpush1.bf16.msra.mxu0 0
        %5242 = vmatprep.mubr.bf16.mxu0 0
        %5243 = vmatmul.mubr.bf16.gmra.mrb[0].mxu0 %v5205
        %v5244 = vpop.f32.mrb[0].mxu0
        %v5245 = vadd.f32 %v5169, %v5244
        %v5246 = vpop.f32.mrb[0].mxu0
        %v5247 = vpop.f32.mrb[0].mxu0
        %v5248 = vpop.f32.mrb[0].mxu0
        %5249 = vdwg.mxu0
        %5250 = vst [vmem:[%s406] sm:$0x1] %v5245
        %s5251 = sand.u32 %s291, 1
        %s5252 = scalar_lea.sflag [#allocation3], %s5251
        %s5253 = sand.u32 %s291, 1
        %s5254 = scalar_lea.vmem [#allocation2], %s5253
        // Predicated region
        $region69: #{lenet5_rsc_forward.1} parent=67 // pred_check
          %p5255 = pneg %p301
        $region70: #{lenet5_rsc_forward.1} parent=67 // pred_check_branch
          %5257 = sbr.rel (%p5255) target = $region72
        $region71: #{lenet5_rsc_forward.1} parent=67 // pred_region
          %s5259 = ssub.s32 16, 16
          %5260 = vsyncadd %s5252, %s5259
          %s5261 = smul.addr %s26, 16
          %s5262 = scalar_lea.hbm %s12, %s5261
          %s5264 = sshll.u32 %s5254, 4
          %s5265 = int_to_ptr.vmem [resolvable:$true] %s5264
          %5267 = dma.vmem_to_hbm [thread:$0]  %s5265, 16, %s5262, %s5252
        $region72: #{lenet5_rsc_forward.1} parent=67 // pred_fallthru
          _
      $region68: #{lenet5_rsc_forward.1} parent=5 // pred_fallthru
        _
      %p5268 = scmp.le.s32.totalorder 2, %s21
      // Predicated region
      $region73: #{lenet5_rsc_forward.1} parent=5 // pred_check
        %p5269 = pneg %p5268
      $region74: #{lenet5_rsc_forward.1} parent=5 // pred_check_branch
        %5271 = sbr.rel (%p5269) target = $region76
      $region75: #{lenet5_rsc_forward.1} parent=5 // pred_region
        %s5272 = ssub.s32 %s21, 2
        // Predicated region
        $region77: #{lenet5_rsc_forward.1} parent=75 // pred_check
          %p5273 = pneg %p307
        $region78: #{lenet5_rsc_forward.1} parent=75 // pred_check_branch
          %5275 = sbr.rel (%p5273) target = $region80
        $region79: #{lenet5_rsc_forward.1} parent=75 // pred_region
          %s5276 = sand.u32 %s292, 1
          %s5277 = scalar_lea.sflag [#allocation3], %s5276
          %s5278 = sand.u32 %s292, 1
          %s5279 = scalar_lea.vmem [#allocation2], %s5278
          %5280 = dma.done %s5277, 16
        $region80: #{lenet5_rsc_forward.1} parent=75 // pred_fallthru
          _
      $region76: #{lenet5_rsc_forward.1} parent=5 // pred_fallthru
        _
    $region6: #{lenet5_rsc_forward.1} parent=1 // loop_footer
      %s25 = sadd.s32 1, %s21
    $region7: #{lenet5_rsc_forward.1} parent=1 // loop_footer_branch
      %20 = sbr.rel target = $region3
    $region8: #{lenet5_rsc_forward.1} parent=1 // loop_exit
      _
    %5281 = vsyncpa [#allocation3], 1
    %s5282 = scalar_lea.sflag [#allocation3], 1
    %5283 = vsyncpa %s5282, 1

</llo_original>
